<compile_context>
chip_gen: v7x
topology: tpu7x:2x2x1
jax: 0.10.0
libtpu: 0.0.40
codegen_flags: <defaults>
</compile_context>

<pallas_src>
import functools

import jax
import jax.numpy as jnp
from jax import lax
from jax.experimental import pallas as pl
from jax.experimental.pallas import tpu as pltpu

_LN_EPS = 1e-5
_SQRT_2_OVER_PI = 0.7978845608028654


def _gelu_tanh(x):
    # TODO(synk): PyTorch nn.GELU default is the exact erf form; the tanh
    # approximation used here (guaranteed to lower on Mosaic) differs by <~1e-3.
    return 0.5 * x * (1.0 + jnp.tanh(_SQRT_2_OVER_PI * (x + 0.044715 * x * x * x)))


def _layer_norm(x, gamma, beta):
    mu = jnp.mean(x, axis=-1, keepdims=True)
    var = jnp.mean(jnp.square(x - mu), axis=-1, keepdims=True)
    return (x - mu) * lax.rsqrt(var + _LN_EPS) * gamma + beta


def _encoder_block_kernel(
    x_ref, pos_ref,                                    # (1, N, C) each
    g1_ref, b1_ref,                                    # LN1 params       (1, 1, C)
    wqkv_ref,                                          # qkv weight       (1, C, 3C)  (qkv_bias=False)
    wproj_ref, bproj_ref,                              # attn proj        (1, C, C), (1, 1, C)
    g2_ref, b2_ref,                                    # LN2 params       (1, 1, C)
    w1_ref, bm1_ref,                                   # mlp fc1          (1, C, Hm), (1, 1, Hm)
    w2_ref, bm2_ref,                                   # mlp fc2          (1, Hm, C), (1, 1, C)
    o_ref,                                             # (1, 1, N, C)  per-block output
    x_sc,                                              # VMEM (N, C) f32 carried x
    *, num_heads, scale):
    d = pl.program_id(1)

    # Initialize the carried token state at the first block of this batch element.
    @pl.when(d == 0)
    def _():
        x_sc[...] = x_ref[0].astype(jnp.float32)

    # x = block(x + pos): pos is re-added before every block (matches PyTorch loop).
    x_in = x_sc[...] + pos_ref[0].astype(jnp.float32)                       # (N, C)
    n_tok, c = x_in.shape
    dh = c // num_heads

    # ---- attention branch: x_in + proj(softmax(q k^T * scale) v) ----------------
    xn = _layer_norm(x_in, g1_ref[0], b1_ref[0])
    qkv = jnp.dot(xn, wqkv_ref[0], preferred_element_type=jnp.float32)      # (N, 3C)

    head_outs = []
    for h in range(num_heads):                         # small static head count -> unrolled
        q = qkv[:, h * dh:(h + 1) * dh]                                     # (N, dh)
        k = qkv[:, c + h * dh: c + (h + 1) * dh]                            # (N, dh)
        v = qkv[:, 2 * c + h * dh: 2 * c + (h + 1) * dh]                    # (N, dh)
        # q @ k.T without materializing the transpose.
        s = lax.dot_general(q, k, (((1,), (1,)), ((), ())),
                            preferred_element_type=jnp.float32) * scale     # (N, N)
        m = jnp.max(s, axis=-1, keepdims=True)
        e = jnp.exp(s - m)
        p = e / jnp.sum(e, axis=-1, keepdims=True)
        head_outs.append(jnp.dot(p, v, preferred_element_type=jnp.float32))  # (N, dh)
    attn_out = jnp.concatenate(head_outs, axis=-1)                           # (N, C)
    attn_out = jnp.dot(attn_out, wproj_ref[0],
                       preferred_element_type=jnp.float32) + bproj_ref[0]
    x1 = x_in + attn_out                               # attn_drop/proj_drop/drop_path = 0 -> identity

    # ---- MLP branch: x1 + fc2(gelu(fc1(LN2(x1)))) --------------------------------
    xn2 = _layer_norm(x1, g2_ref[0], b2_ref[0])
    hmid = jnp.dot(xn2, w1_ref[0], preferred_element_type=jnp.float32) + bm1_ref[0]
    hmid = _gelu_tanh(hmid)
    mlp_out = jnp.dot(hmid, w2_ref[0], preferred_element_type=jnp.float32) + bm2_ref[0]
    x2 = x1 + mlp_out

    x_sc[...] = x2                                                           # carry to next block
    o_ref[0, 0] = x2.astype(o_ref.dtype)                                     # lane-dense (N, C) store


def transformer_encoder_forward(x, pos, params, *, num_heads, fetch_idx=(3, 7, 11)):
    """x, pos: (B, N, C) -> list of (B, N, C) features at fetch_idx (< depth)."""
    B, N, C = x.shape
    (g1, b1, wqkv, wproj, bproj, g2, b2, w1, bm1, w2, bm2) = params
    depth = g1.shape[0]
    scale = (C // num_heads) ** (-0.5)

    weight_list = [g1, b1, wqkv, wproj, bproj, g2, b2, w1, bm1, w2, bm2]

    def wspec(arr):
        nd = arr.ndim
        return pl.BlockSpec((1,) + arr.shape[1:], lambda b, d, _nd=nd: (d,) + (0,) * (_nd - 1))

    in_specs = [
        pl.BlockSpec((1, N, C), lambda b, d: (b, 0, 0)),   # x   (read only at d == 0)
        pl.BlockSpec((1, N, C), lambda b, d: (b, 0, 0)),   # pos
    ] + [wspec(w) for w in weight_list]

    kernel = functools.partial(_encoder_block_kernel, num_heads=num_heads, scale=scale)
    out = pl.pallas_call(
        kernel,
        out_shape=jax.ShapeDtypeStruct((depth, B, N, C), jnp.float32),
        grid=(B, depth),
        in_specs=in_specs,
        out_specs=pl.BlockSpec((1, 1, N, C), lambda b, d: (d, b, 0, 0)),
        scratch_shapes=[pltpu.VMEM((N, C), jnp.float32)],
        compiler_params=pltpu.CompilerParams(
            dimension_semantics=("parallel", "arbitrary")),
    )(x, pos, *weight_list)

    return [out[i] for i in fetch_idx if i < depth]


def init_params(key, *, embed_dim, depth, num_heads, mlp_ratio=4.0):
    """Deterministic synthetic parameters (PyTorch Linear-style init, eval mode)."""
    c = embed_dim
    hm = int(c * mlp_ratio)

    def linear(k, fan_in, fan_out):
        kw, kb = jax.random.split(k)
        bound = 1.0 / jnp.sqrt(float(fan_in))
        w = jax.random.uniform(kw, (fan_in, fan_out), jnp.float32, -bound, bound)
        b = jax.random.uniform(kb, (1, fan_out), jnp.float32, -bound, bound)
        return w, b

    g1s, b1s, wqkvs, wprojs, bprojs = [], [], [], [], []
    g2s, b2s, w1s, bm1s, w2s, bm2s = [], [], [], [], [], []
    for kd in jax.random.split(key, depth):
        k_g1, k_b1, k_qkv, k_proj, k_g2, k_b2, k_fc1, k_fc2 = jax.random.split(kd, 8)
        g1s.append(1.0 + 0.02 * jax.random.normal(k_g1, (1, c), jnp.float32))
        b1s.append(0.02 * jax.random.normal(k_b1, (1, c), jnp.float32))
        wqkv, _ = linear(k_qkv, c, 3 * c)                  # qkv_bias=False
        wqkvs.append(wqkv)
        wp, bp = linear(k_proj, c, c)
        wprojs.append(wp); bprojs.append(bp)
        g2s.append(1.0 + 0.02 * jax.random.normal(k_g2, (1, c), jnp.float32))
        b2s.append(0.02 * jax.random.normal(k_b2, (1, c), jnp.float32))
        wf1, bf1 = linear(k_fc1, c, hm)
        w1s.append(wf1); bm1s.append(bf1)
        wf2, bf2 = linear(k_fc2, hm, c)
        w2s.append(wf2); bm2s.append(bf2)

    stack = lambda xs: jnp.stack(xs, axis=0)
    return (stack(g1s), stack(b1s), stack(wqkvs), stack(wprojs), stack(bprojs),
            stack(g2s), stack(b2s), stack(w1s), stack(bm1s), stack(w2s), stack(bm2s))


def _reference(x, pos, params, *, num_heads, fetch_idx=(3, 7, 11)):
    """Pure-JAX reference with identical math (for correctness check)."""
    (g1, b1, wqkv, wproj, bproj, g2, b2, w1, bm1, w2, bm2) = params
    depth = g1.shape[0]
    B, N, C = x.shape
    dh = C // num_heads
    scale = dh ** (-0.5)
    feats = []
    for d in range(depth):
        xin = x + pos
        xn = _layer_norm(xin, g1[d], b1[d])
        qkv = (xn @ wqkv[d]).reshape(B, N, 3, num_heads, dh).transpose(2, 0, 3, 1, 4)
        q, k, v = qkv[0], qkv[1], qkv[2]                             # (B, H, N, dh)
        attn = jax.nn.softmax((q * scale) @ jnp.swapaxes(k, -2, -1), axis=-1)
        ao = (attn @ v).transpose(0, 2, 1, 3).reshape(B, N, C)
        x1 = xin + (ao @ wproj[d] + bproj[d])
        xn2 = _layer_norm(x1, g2[d], b2[d])
        h = _gelu_tanh(xn2 @ w1[d] + bm1[d])
        x = x1 + (h @ w2[d] + bm2[d])
        if d in fetch_idx:
            feats.append(x)
    return feats


if __name__ == "__main__":
    B, N = 2, 16                      # batch, sequence length (tokens)
    EMBED_DIM = 128                   # small but lane-dense (module default 768)
    DEPTH = 4                         # module default depth
    NUM_HEADS = 8                     # head_dim = 16

    root = jax.random.PRNGKey(0)
    kx, kp, kw = jax.random.split(root, 3)
    x = jax.random.normal(kx, (B, N, EMBED_DIM), jnp.float32)
    pos = 0.1 * jax.random.normal(kp, (B, N, EMBED_DIM), jnp.float32)
    params = init_params(kw, embed_dim=EMBED_DIM, depth=DEPTH, num_heads=NUM_HEADS)

    feats = transformer_encoder_forward(x, pos, params, num_heads=NUM_HEADS)
    feats = jax.block_until_ready(feats)
    # depth=4 and fetch_idx=[3,7,11] -> exactly one fetched feature (after block 3).
    assert len(feats) == 1 and feats[0].shape == (B, N, EMBED_DIM), [f.shape for f in feats]

    ref_feats = jax.block_until_ready(_reference(x, pos, params, num_heads=NUM_HEADS))
    for a, r in zip(feats, ref_feats):
        err = float(jnp.max(jnp.abs(a - r)))
        assert jnp.allclose(a, r, atol=1e-3, rtol=1e-3), err

    print("KERNEL_OK")
</pallas_src>

<mosaic_0001>
module attributes {stable_mosaic.version = 11 : i64} {
  func.func @_encoder_block_kernel(%arg0: i32, %arg1: i32, %arg2: memref<1x16x128xf32, #tpu.memory_space<vmem>>, %arg3: memref<1x16x128xf32, #tpu.memory_space<vmem>>, %arg4: memref<1x1x128xf32, #tpu.memory_space<vmem>>, %arg5: memref<1x1x128xf32, #tpu.memory_space<vmem>>, %arg6: memref<1x128x384xf32, #tpu.memory_space<vmem>>, %arg7: memref<1x128x128xf32, #tpu.memory_space<vmem>>, %arg8: memref<1x1x128xf32, #tpu.memory_space<vmem>>, %arg9: memref<1x1x128xf32, #tpu.memory_space<vmem>>, %arg10: memref<1x1x128xf32, #tpu.memory_space<vmem>>, %arg11: memref<1x128x512xf32, #tpu.memory_space<vmem>>, %arg12: memref<1x1x512xf32, #tpu.memory_space<vmem>>, %arg13: memref<1x512x128xf32, #tpu.memory_space<vmem>>, %arg14: memref<1x1x128xf32, #tpu.memory_space<vmem>>, %arg15: memref<1x1x16x128xf32, #tpu.memory_space<vmem>>, %arg16: memref<16x128xf32, #tpu.memory_space<vmem>>) attributes {dimension_semantics = [#tpu.dimension_semantics<parallel>, #tpu.dimension_semantics<arbitrary>], iteration_bounds = array<i64: 2, 4>, scalar_prefetch = 0 : i64, scratch_operands = 1 : i64, tpu.core_type = #tpu.core_type<tc>, window_params = [{transform_indices = @transform_0, window_bounds = array<i64: 1, 16, 128>}, {transform_indices = @transform_1, window_bounds = array<i64: 1, 16, 128>}, {transform_indices = @transform_2, window_bounds = array<i64: 1, 1, 128>}, {transform_indices = @transform_3, window_bounds = array<i64: 1, 1, 128>}, {transform_indices = @transform_4, window_bounds = array<i64: 1, 128, 384>}, {transform_indices = @transform_5, window_bounds = array<i64: 1, 128, 128>}, {transform_indices = @transform_6, window_bounds = array<i64: 1, 1, 128>}, {transform_indices = @transform_7, window_bounds = array<i64: 1, 1, 128>}, {transform_indices = @transform_8, window_bounds = array<i64: 1, 1, 128>}, {transform_indices = @transform_9, window_bounds = array<i64: 1, 128, 512>}, {transform_indices = @transform_10, window_bounds = array<i64: 1, 1, 512>}, {transform_indices = @transform_11, window_bounds = array<i64: 1, 512, 128>}, {transform_indices = @transform_12, window_bounds = array<i64: 1, 1, 128>}, {transform_indices = @transform_13, window_bounds = array<i64: 1, 1, 16, 128>}]} {
    %c0_i32 = arith.constant 0 : i32
    %0 = arith.cmpi eq, %arg1, %c0_i32 : i32
    %1 = arith.extui %0 : i1 to i32
    %c0_i32_0 = arith.constant 0 : i32
    %2 = arith.cmpi ne, %1, %c0_i32_0 : i32
    scf.if %2 {
      %c0_101 = arith.constant 0 : index
      %c0_102 = arith.constant 0 : index
      %c0_103 = arith.constant 0 : index
      %231 = vector.load %arg2[%c0_101, %c0_102, %c0_103] : memref<1x16x128xf32, #tpu.memory_space<vmem>>, vector<1x16x128xf32>
      %232 = vector.shape_cast %231 : vector<1x16x128xf32> to vector<16x128xf32>
      %c0_104 = arith.constant 0 : index
      %c0_105 = arith.constant 0 : index
      %233 = vector.load %arg16[%c0_104, %c0_105] : memref<16x128xf32, #tpu.memory_space<vmem>>, vector<16x128xf32>
      tpu.vector_store %arg16[%c0_104, %c0_105], %232 {strides = array<i32>} : memref<16x128xf32, #tpu.memory_space<vmem>>, vector<16x128xf32>,
    } else {
    }
    %c0 = arith.constant 0 : index
    %c0_1 = arith.constant 0 : index
    %3 = vector.load %arg16[%c0, %c0_1] : memref<16x128xf32, #tpu.memory_space<vmem>>, vector<16x128xf32>
    %c0_2 = arith.constant 0 : index
    %c0_3 = arith.constant 0 : index
    %c0_4 = arith.constant 0 : index
    %4 = vector.load %arg3[%c0_2, %c0_3, %c0_4] : memref<1x16x128xf32, #tpu.memory_space<vmem>>, vector<1x16x128xf32>
    %5 = vector.shape_cast %4 : vector<1x16x128xf32> to vector<16x128xf32>
    %6 = arith.addf %3, %5 : vector<16x128xf32>
    %c0_5 = arith.constant 0 : index
    %c0_6 = arith.constant 0 : index
    %c0_7 = arith.constant 0 : index
    %7 = vector.load %arg4[%c0_5, %c0_6, %c0_7] : memref<1x1x128xf32, #tpu.memory_space<vmem>>, vector<1x1x128xf32>
    %8 = vector.shape_cast %7 : vector<1x1x128xf32> to vector<1x128xf32>
    %c0_8 = arith.constant 0 : index
    %c0_9 = arith.constant 0 : index
    %c0_10 = arith.constant 0 : index
    %9 = vector.load %arg5[%c0_8, %c0_9, %c0_10] : memref<1x1x128xf32, #tpu.memory_space<vmem>>, vector<1x1x128xf32>
    %10 = vector.shape_cast %9 : vector<1x1x128xf32> to vector<1x128xf32>
    %cst = arith.constant dense<0.000000e+00> : vector<16xf32>
    %11 = vector.multi_reduction <add>, %6, %cst [1] : vector<16x128xf32> to vector<16xf32>
    %12 = vector.shape_cast %11 : vector<16xf32> to vector<16x1xf32>
    %cst_11 = arith.constant 1.280000e+02 : f32
    %13 = vector.broadcast %cst_11 : f32 to vector<16x1xf32>
    %14 = arith.divf %12, %13 : vector<16x1xf32>
    %15 = vector.broadcast %14 : vector<16x1xf32> to vector<16x128xf32>
    %16 = arith.subf %6, %15 : vector<16x128xf32>
    %17 = arith.mulf %16, %16 : vector<16x128xf32>
    %cst_12 = arith.constant dense<0.000000e+00> : vector<16xf32>
    %18 = vector.multi_reduction <add>, %17, %cst_12 [1] : vector<16x128xf32> to vector<16xf32>
    %19 = vector.shape_cast %18 : vector<16xf32> to vector<16x1xf32>
    %cst_13 = arith.constant 1.280000e+02 : f32
    %20 = vector.broadcast %cst_13 : f32 to vector<16x1xf32>
    %21 = arith.divf %19, %20 : vector<16x1xf32>
    %22 = vector.broadcast %14 : vector<16x1xf32> to vector<16x128xf32>
    %23 = arith.subf %6, %22 : vector<16x128xf32>
    %cst_14 = arith.constant 9.99999974E-6 : f32
    %24 = vector.broadcast %cst_14 : f32 to vector<16x1xf32>
    %25 = arith.addf %21, %24 : vector<16x1xf32>
    %26 = math.rsqrt %25 : vector<16x1xf32>
    %27 = vector.broadcast %26 : vector<16x1xf32> to vector<16x128xf32>
    %28 = arith.mulf %23, %27 : vector<16x128xf32>
    %29 = vector.broadcast %8 : vector<1x128xf32> to vector<16x128xf32>
    %30 = arith.mulf %28, %29 : vector<16x128xf32>
    %31 = vector.broadcast %10 : vector<1x128xf32> to vector<16x128xf32>
    %32 = arith.addf %30, %31 : vector<16x128xf32>
    %c0_15 = arith.constant 0 : index
    %c0_16 = arith.constant 0 : index
    %c0_17 = arith.constant 0 : index
    %33 = vector.load %arg6[%c0_15, %c0_16, %c0_17] : memref<1x128x384xf32, #tpu.memory_space<vmem>>, vector<1x128x384xf32>
    %34 = vector.shape_cast %33 : vector<1x128x384xf32> to vector<128x384xf32>
    %cst_18 = arith.constant dense<0.000000e+00> : vector<16x384xf32>
    %35 = tpu.matmul %32, %34, %cst_18 {dimension_numbers = #tpu.dot_dimension_numbers<[1], [0], [0], [1], [0, 0, 1, 1], [], []>} : vector<16x128xf32>, vector<128x384xf32>, vector<16x384xf32> -> vector<16x384xf32>
    %36 = vector.extract_strided_slice %35 {offsets = [0, 0], sizes = [16, 16], strides = [1, 1]} : vector<16x384xf32> to vector<16x16xf32>
    %37 = vector.extract_strided_slice %35 {offsets = [0, 128], sizes = [16, 16], strides = [1, 1]} : vector<16x384xf32> to vector<16x16xf32>
    %38 = vector.extract_strided_slice %35 {offsets = [0, 256], sizes = [16, 16], strides = [1, 1]} : vector<16x384xf32> to vector<16x16xf32>
    %cst_19 = arith.constant dense<0.000000e+00> : vector<16x16xf32>
    %39 = tpu.matmul %36, %37, %cst_19 {dimension_numbers = #tpu.dot_dimension_numbers<[1], [1], [0], [0], [0, 0, 1, 0], [], []>} : vector<16x16xf32>, vector<16x16xf32>, vector<16x16xf32> -> vector<16x16xf32>
    %cst_20 = arith.constant 2.500000e-01 : f32
    %40 = vector.broadcast %cst_20 : f32 to vector<16x16xf32>
    %41 = arith.mulf %39, %40 : vector<16x16xf32>
    %cst_21 = arith.constant dense<0xFF800000> : vector<16xf32>
    %42 = vector.multi_reduction <maximumf>, %41, %cst_21 [1] : vector<16x16xf32> to vector<16xf32>
    %43 = vector.shape_cast %42 : vector<16xf32> to vector<16x1xf32>
    %44 = vector.broadcast %43 : vector<16x1xf32> to vector<16x16xf32>
    %45 = arith.subf %41, %44 : vector<16x16xf32>
    %46 = math.exp %45 : vector<16x16xf32>
    %cst_22 = arith.constant dense<0.000000e+00> : vector<16xf32>
    %47 = vector.multi_reduction <add>, %46, %cst_22 [1] : vector<16x16xf32> to vector<16xf32>
    %48 = vector.shape_cast %47 : vector<16xf32> to vector<16x1xf32>
    %49 = vector.broadcast %48 : vector<16x1xf32> to vector<16x16xf32>
    %50 = arith.divf %46, %49 : vector<16x16xf32>
    %cst_23 = arith.constant dense<0.000000e+00> : vector<16x16xf32>
    %51 = tpu.matmul %50, %38, %cst_23 {dimension_numbers = #tpu.dot_dimension_numbers<[1], [0], [0], [1], [0, 0, 1, 1], [], []>} : vector<16x16xf32>, vector<16x16xf32>, vector<16x16xf32> -> vector<16x16xf32>
    %52 = vector.extract_strided_slice %35 {offsets = [0, 16], sizes = [16, 16], strides = [1, 1]} : vector<16x384xf32> to vector<16x16xf32>
    %53 = vector.extract_strided_slice %35 {offsets = [0, 144], sizes = [16, 16], strides = [1, 1]} : vector<16x384xf32> to vector<16x16xf32>
    %54 = vector.extract_strided_slice %35 {offsets = [0, 272], sizes = [16, 16], strides = [1, 1]} : vector<16x384xf32> to vector<16x16xf32>
    %cst_24 = arith.constant dense<0.000000e+00> : vector<16x16xf32>
    %55 = tpu.matmul %52, %53, %cst_24 {dimension_numbers = #tpu.dot_dimension_numbers<[1], [1], [0], [0], [0, 0, 1, 0], [], []>} : vector<16x16xf32>, vector<16x16xf32>, vector<16x16xf32> -> vector<16x16xf32>
    %cst_25 = arith.constant 2.500000e-01 : f32
    %56 = vector.broadcast %cst_25 : f32 to vector<16x16xf32>
    %57 = arith.mulf %55, %56 : vector<16x16xf32>
    %cst_26 = arith.constant dense<0xFF800000> : vector<16xf32>
    %58 = vector.multi_reduction <maximumf>, %57, %cst_26 [1] : vector<16x16xf32> to vector<16xf32>
    %59 = vector.shape_cast %58 : vector<16xf32> to vector<16x1xf32>
    %60 = vector.broadcast %59 : vector<16x1xf32> to vector<16x16xf32>
    %61 = arith.subf %57, %60 : vector<16x16xf32>
    %62 = math.exp %61 : vector<16x16xf32>
    %cst_27 = arith.constant dense<0.000000e+00> : vector<16xf32>
    %63 = vector.multi_reduction <add>, %62, %cst_27 [1] : vector<16x16xf32> to vector<16xf32>
    %64 = vector.shape_cast %63 : vector<16xf32> to vector<16x1xf32>
    %65 = vector.broadcast %64 : vector<16x1xf32> to vector<16x16xf32>
    %66 = arith.divf %62, %65 : vector<16x16xf32>
    %cst_28 = arith.constant dense<0.000000e+00> : vector<16x16xf32>
    %67 = tpu.matmul %66, %54, %cst_28 {dimension_numbers = #tpu.dot_dimension_numbers<[1], [0], [0], [1], [0, 0, 1, 1], [], []>} : vector<16x16xf32>, vector<16x16xf32>, vector<16x16xf32> -> vector<16x16xf32>
    %68 = vector.extract_strided_slice %35 {offsets = [0, 32], sizes = [16, 16], strides = [1, 1]} : vector<16x384xf32> to vector<16x16xf32>
    %69 = vector.extract_strided_slice %35 {offsets = [0, 160], sizes = [16, 16], strides = [1, 1]} : vector<16x384xf32> to vector<16x16xf32>
    %70 = vector.extract_strided_slice %35 {offsets = [0, 288], sizes = [16, 16], strides = [1, 1]} : vector<16x384xf32> to vector<16x16xf32>
    %cst_29 = arith.constant dense<0.000000e+00> : vector<16x16xf32>
    %71 = tpu.matmul %68, %69, %cst_29 {dimension_numbers = #tpu.dot_dimension_numbers<[1], [1], [0], [0], [0, 0, 1, 0], [], []>} : vector<16x16xf32>, vector<16x16xf32>, vector<16x16xf32> -> vector<16x16xf32>
    %cst_30 = arith.constant 2.500000e-01 : f32
    %72 = vector.broadcast %cst_30 : f32 to vector<16x16xf32>
    %73 = arith.mulf %71, %72 : vector<16x16xf32>
    %cst_31 = arith.constant dense<0xFF800000> : vector<16xf32>
    %74 = vector.multi_reduction <maximumf>, %73, %cst_31 [1] : vector<16x16xf32> to vector<16xf32>
    %75 = vector.shape_cast %74 : vector<16xf32> to vector<16x1xf32>
    %76 = vector.broadcast %75 : vector<16x1xf32> to vector<16x16xf32>
    %77 = arith.subf %73, %76 : vector<16x16xf32>
    %78 = math.exp %77 : vector<16x16xf32>
    %cst_32 = arith.constant dense<0.000000e+00> : vector<16xf32>
    %79 = vector.multi_reduction <add>, %78, %cst_32 [1] : vector<16x16xf32> to vector<16xf32>
    %80 = vector.shape_cast %79 : vector<16xf32> to vector<16x1xf32>
    %81 = vector.broadcast %80 : vector<16x1xf32> to vector<16x16xf32>
    %82 = arith.divf %78, %81 : vector<16x16xf32>
    %cst_33 = arith.constant dense<0.000000e+00> : vector<16x16xf32>
    %83 = tpu.matmul %82, %70, %cst_33 {dimension_numbers = #tpu.dot_dimension_numbers<[1], [0], [0], [1], [0, 0, 1, 1], [], []>} : vector<16x16xf32>, vector<16x16xf32>, vector<16x16xf32> -> vector<16x16xf32>
    %84 = vector.extract_strided_slice %35 {offsets = [0, 48], sizes = [16, 16], strides = [1, 1]} : vector<16x384xf32> to vector<16x16xf32>
    %85 = vector.extract_strided_slice %35 {offsets = [0, 176], sizes = [16, 16], strides = [1, 1]} : vector<16x384xf32> to vector<16x16xf32>
    %86 = vector.extract_strided_slice %35 {offsets = [0, 304], sizes = [16, 16], strides = [1, 1]} : vector<16x384xf32> to vector<16x16xf32>
    %cst_34 = arith.constant dense<0.000000e+00> : vector<16x16xf32>
    %87 = tpu.matmul %84, %85, %cst_34 {dimension_numbers = #tpu.dot_dimension_numbers<[1], [1], [0], [0], [0, 0, 1, 0], [], []>} : vector<16x16xf32>, vector<16x16xf32>, vector<16x16xf32> -> vector<16x16xf32>
    %cst_35 = arith.constant 2.500000e-01 : f32
    %88 = vector.broadcast %cst_35 : f32 to vector<16x16xf32>
    %89 = arith.mulf %87, %88 : vector<16x16xf32>
    %cst_36 = arith.constant dense<0xFF800000> : vector<16xf32>
    %90 = vector.multi_reduction <maximumf>, %89, %cst_36 [1] : vector<16x16xf32> to vector<16xf32>
    %91 = vector.shape_cast %90 : vector<16xf32> to vector<16x1xf32>
    %92 = vector.broadcast %91 : vector<16x1xf32> to vector<16x16xf32>
    %93 = arith.subf %89, %92 : vector<16x16xf32>
    %94 = math.exp %93 : vector<16x16xf32>
    %cst_37 = arith.constant dense<0.000000e+00> : vector<16xf32>
    %95 = vector.multi_reduction <add>, %94, %cst_37 [1] : vector<16x16xf32> to vector<16xf32>
    %96 = vector.shape_cast %95 : vector<16xf32> to vector<16x1xf32>
    %97 = vector.broadcast %96 : vector<16x1xf32> to vector<16x16xf32>
    %98 = arith.divf %94, %97 : vector<16x16xf32>
    %cst_38 = arith.constant dense<0.000000e+00> : vector<16x16xf32>
    %99 = tpu.matmul %98, %86, %cst_38 {dimension_numbers = #tpu.dot_dimension_numbers<[1], [0], [0], [1], [0, 0, 1, 1], [], []>} : vector<16x16xf32>, vector<16x16xf32>, vector<16x16xf32> -> vector<16x16xf32>
    %100 = vector.extract_strided_slice %35 {offsets = [0, 64], sizes = [16, 16], strides = [1, 1]} : vector<16x384xf32> to vector<16x16xf32>
    %101 = vector.extract_strided_slice %35 {offsets = [0, 192], sizes = [16, 16], strides = [1, 1]} : vector<16x384xf32> to vector<16x16xf32>
    %102 = vector.extract_strided_slice %35 {offsets = [0, 320], sizes = [16, 16], strides = [1, 1]} : vector<16x384xf32> to vector<16x16xf32>
    %cst_39 = arith.constant dense<0.000000e+00> : vector<16x16xf32>
    %103 = tpu.matmul %100, %101, %cst_39 {dimension_numbers = #tpu.dot_dimension_numbers<[1], [1], [0], [0], [0, 0, 1, 0], [], []>} : vector<16x16xf32>, vector<16x16xf32>, vector<16x16xf32> -> vector<16x16xf32>
    %cst_40 = arith.constant 2.500000e-01 : f32
    %104 = vector.broadcast %cst_40 : f32 to vector<16x16xf32>
    %105 = arith.mulf %103, %104 : vector<16x16xf32>
    %cst_41 = arith.constant dense<0xFF800000> : vector<16xf32>
    %106 = vector.multi_reduction <maximumf>, %105, %cst_41 [1] : vector<16x16xf32> to vector<16xf32>
    %107 = vector.shape_cast %106 : vector<16xf32> to vector<16x1xf32>
    %108 = vector.broadcast %107 : vector<16x1xf32> to vector<16x16xf32>
    %109 = arith.subf %105, %108 : vector<16x16xf32>
    %110 = math.exp %109 : vector<16x16xf32>
    %cst_42 = arith.constant dense<0.000000e+00> : vector<16xf32>
    %111 = vector.multi_reduction <add>, %110, %cst_42 [1] : vector<16x16xf32> to vector<16xf32>
    %112 = vector.shape_cast %111 : vector<16xf32> to vector<16x1xf32>
    %113 = vector.broadcast %112 : vector<16x1xf32> to vector<16x16xf32>
    %114 = arith.divf %110, %113 : vector<16x16xf32>
    %cst_43 = arith.constant dense<0.000000e+00> : vector<16x16xf32>
    %115 = tpu.matmul %114, %102, %cst_43 {dimension_numbers = #tpu.dot_dimension_numbers<[1], [0], [0], [1], [0, 0, 1, 1], [], []>} : vector<16x16xf32>, vector<16x16xf32>, vector<16x16xf32> -> vector<16x16xf32>
    %116 = vector.extract_strided_slice %35 {offsets = [0, 80], sizes = [16, 16], strides = [1, 1]} : vector<16x384xf32> to vector<16x16xf32>
    %117 = vector.extract_strided_slice %35 {offsets = [0, 208], sizes = [16, 16], strides = [1, 1]} : vector<16x384xf32> to vector<16x16xf32>
    %118 = vector.extract_strided_slice %35 {offsets = [0, 336], sizes = [16, 16], strides = [1, 1]} : vector<16x384xf32> to vector<16x16xf32>
    %cst_44 = arith.constant dense<0.000000e+00> : vector<16x16xf32>
    %119 = tpu.matmul %116, %117, %cst_44 {dimension_numbers = #tpu.dot_dimension_numbers<[1], [1], [0], [0], [0, 0, 1, 0], [], []>} : vector<16x16xf32>, vector<16x16xf32>, vector<16x16xf32> -> vector<16x16xf32>
    %cst_45 = arith.constant 2.500000e-01 : f32
    %120 = vector.broadcast %cst_45 : f32 to vector<16x16xf32>
    %121 = arith.mulf %119, %120 : vector<16x16xf32>
    %cst_46 = arith.constant dense<0xFF800000> : vector<16xf32>
    %122 = vector.multi_reduction <maximumf>, %121, %cst_46 [1] : vector<16x16xf32> to vector<16xf32>
    %123 = vector.shape_cast %122 : vector<16xf32> to vector<16x1xf32>
    %124 = vector.broadcast %123 : vector<16x1xf32> to vector<16x16xf32>
    %125 = arith.subf %121, %124 : vector<16x16xf32>
    %126 = math.exp %125 : vector<16x16xf32>
    %cst_47 = arith.constant dense<0.000000e+00> : vector<16xf32>
    %127 = vector.multi_reduction <add>, %126, %cst_47 [1] : vector<16x16xf32> to vector<16xf32>
    %128 = vector.shape_cast %127 : vector<16xf32> to vector<16x1xf32>
    %129 = vector.broadcast %128 : vector<16x1xf32> to vector<16x16xf32>
    %130 = arith.divf %126, %129 : vector<16x16xf32>
    %cst_48 = arith.constant dense<0.000000e+00> : vector<16x16xf32>
    %131 = tpu.matmul %130, %118, %cst_48 {dimension_numbers = #tpu.dot_dimension_numbers<[1], [0], [0], [1], [0, 0, 1, 1], [], []>} : vector<16x16xf32>, vector<16x16xf32>, vector<16x16xf32> -> vector<16x16xf32>
    %132 = vector.extract_strided_slice %35 {offsets = [0, 96], sizes = [16, 16], strides = [1, 1]} : vector<16x384xf32> to vector<16x16xf32>
    %133 = vector.extract_strided_slice %35 {offsets = [0, 224], sizes = [16, 16], strides = [1, 1]} : vector<16x384xf32> to vector<16x16xf32>
    %134 = vector.extract_strided_slice %35 {offsets = [0, 352], sizes = [16, 16], strides = [1, 1]} : vector<16x384xf32> to vector<16x16xf32>
    %cst_49 = arith.constant dense<0.000000e+00> : vector<16x16xf32>
    %135 = tpu.matmul %132, %133, %cst_49 {dimension_numbers = #tpu.dot_dimension_numbers<[1], [1], [0], [0], [0, 0, 1, 0], [], []>} : vector<16x16xf32>, vector<16x16xf32>, vector<16x16xf32> -> vector<16x16xf32>
    %cst_50 = arith.constant 2.500000e-01 : f32
    %136 = vector.broadcast %cst_50 : f32 to vector<16x16xf32>
    %137 = arith.mulf %135, %136 : vector<16x16xf32>
    %cst_51 = arith.constant dense<0xFF800000> : vector<16xf32>
    %138 = vector.multi_reduction <maximumf>, %137, %cst_51 [1] : vector<16x16xf32> to vector<16xf32>
    %139 = vector.shape_cast %138 : vector<16xf32> to vector<16x1xf32>
    %140 = vector.broadcast %139 : vector<16x1xf32> to vector<16x16xf32>
    %141 = arith.subf %137, %140 : vector<16x16xf32>
    %142 = math.exp %141 : vector<16x16xf32>
    %cst_52 = arith.constant dense<0.000000e+00> : vector<16xf32>
    %143 = vector.multi_reduction <add>, %142, %cst_52 [1] : vector<16x16xf32> to vector<16xf32>
    %144 = vector.shape_cast %143 : vector<16xf32> to vector<16x1xf32>
    %145 = vector.broadcast %144 : vector<16x1xf32> to vector<16x16xf32>
    %146 = arith.divf %142, %145 : vector<16x16xf32>
    %cst_53 = arith.constant dense<0.000000e+00> : vector<16x16xf32>
    %147 = tpu.matmul %146, %134, %cst_53 {dimension_numbers = #tpu.dot_dimension_numbers<[1], [0], [0], [1], [0, 0, 1, 1], [], []>} : vector<16x16xf32>, vector<16x16xf32>, vector<16x16xf32> -> vector<16x16xf32>
    %148 = vector.extract_strided_slice %35 {offsets = [0, 112], sizes = [16, 16], strides = [1, 1]} : vector<16x384xf32> to vector<16x16xf32>
    %149 = vector.extract_strided_slice %35 {offsets = [0, 240], sizes = [16, 16], strides = [1, 1]} : vector<16x384xf32> to vector<16x16xf32>
    %150 = vector.extract_strided_slice %35 {offsets = [0, 368], sizes = [16, 16], strides = [1, 1]} : vector<16x384xf32> to vector<16x16xf32>
    %cst_54 = arith.constant dense<0.000000e+00> : vector<16x16xf32>
    %151 = tpu.matmul %148, %149, %cst_54 {dimension_numbers = #tpu.dot_dimension_numbers<[1], [1], [0], [0], [0, 0, 1, 0], [], []>} : vector<16x16xf32>, vector<16x16xf32>, vector<16x16xf32> -> vector<16x16xf32>
    %cst_55 = arith.constant 2.500000e-01 : f32
    %152 = vector.broadcast %cst_55 : f32 to vector<16x16xf32>
    %153 = arith.mulf %151, %152 : vector<16x16xf32>
    %cst_56 = arith.constant dense<0xFF800000> : vector<16xf32>
    %154 = vector.multi_reduction <maximumf>, %153, %cst_56 [1] : vector<16x16xf32> to vector<16xf32>
    %155 = vector.shape_cast %154 : vector<16xf32> to vector<16x1xf32>
    %156 = vector.broadcast %155 : vector<16x1xf32> to vector<16x16xf32>
    %157 = arith.subf %153, %156 : vector<16x16xf32>
    %158 = math.exp %157 : vector<16x16xf32>
    %cst_57 = arith.constant dense<0.000000e+00> : vector<16xf32>
    %159 = vector.multi_reduction <add>, %158, %cst_57 [1] : vector<16x16xf32> to vector<16xf32>
    %160 = vector.shape_cast %159 : vector<16xf32> to vector<16x1xf32>
    %161 = vector.broadcast %160 : vector<16x1xf32> to vector<16x16xf32>
    %162 = arith.divf %158, %161 : vector<16x16xf32>
    %cst_58 = arith.constant dense<0.000000e+00> : vector<16x16xf32>
    %163 = tpu.matmul %162, %150, %cst_58 {dimension_numbers = #tpu.dot_dimension_numbers<[1], [0], [0], [1], [0, 0, 1, 1], [], []>} : vector<16x16xf32>, vector<16x16xf32>, vector<16x16xf32> -> vector<16x16xf32>
    %164 = tpu.concatenate %51, %67, %83, %99, %115, %131, %147, %163 in 1 : vector<16x16xf32>, vector<16x16xf32>, vector<16x16xf32>, vector<16x16xf32>, vector<16x16xf32>, vector<16x16xf32>, vector<16x16xf32>, vector<16x16xf32> -> vector<16x128xf32>
    %c0_59 = arith.constant 0 : index
    %c0_60 = arith.constant 0 : index
    %c0_61 = arith.constant 0 : index
    %165 = vector.load %arg7[%c0_59, %c0_60, %c0_61] : memref<1x128x128xf32, #tpu.memory_space<vmem>>, vector<1x128x128xf32>
    %166 = vector.shape_cast %165 : vector<1x128x128xf32> to vector<128x128xf32>
    %cst_62 = arith.constant dense<0.000000e+00> : vector<16x128xf32>
    %167 = tpu.matmul %164, %166, %cst_62 {dimension_numbers = #tpu.dot_dimension_numbers<[1], [0], [0], [1], [0, 0, 1, 1], [], []>} : vector<16x128xf32>, vector<128x128xf32>, vector<16x128xf32> -> vector<16x128xf32>
    %c0_63 = arith.constant 0 : index
    %c0_64 = arith.constant 0 : index
    %c0_65 = arith.constant 0 : index
    %168 = vector.load %arg8[%c0_63, %c0_64, %c0_65] : memref<1x1x128xf32, #tpu.memory_space<vmem>>, vector<1x1x128xf32>
    %169 = vector.shape_cast %168 : vector<1x1x128xf32> to vector<1x128xf32>
    %170 = vector.broadcast %169 : vector<1x128xf32> to vector<16x128xf32>
    %171 = arith.addf %167, %170 : vector<16x128xf32>
    %172 = arith.addf %6, %171 : vector<16x128xf32>
    %c0_66 = arith.constant 0 : index
    %c0_67 = arith.constant 0 : index
    %c0_68 = arith.constant 0 : index
    %173 = vector.load %arg9[%c0_66, %c0_67, %c0_68] : memref<1x1x128xf32, #tpu.memory_space<vmem>>, vector<1x1x128xf32>
    %174 = vector.shape_cast %173 : vector<1x1x128xf32> to vector<1x128xf32>
    %c0_69 = arith.constant 0 : index
    %c0_70 = arith.constant 0 : index
    %c0_71 = arith.constant 0 : index
    %175 = vector.load %arg10[%c0_69, %c0_70, %c0_71] : memref<1x1x128xf32, #tpu.memory_space<vmem>>, vector<1x1x128xf32>
    %176 = vector.shape_cast %175 : vector<1x1x128xf32> to vector<1x128xf32>
    %cst_72 = arith.constant dense<0.000000e+00> : vector<16xf32>
    %177 = vector.multi_reduction <add>, %172, %cst_72 [1] : vector<16x128xf32> to vector<16xf32>
    %178 = vector.shape_cast %177 : vector<16xf32> to vector<16x1xf32>
    %cst_73 = arith.constant 1.280000e+02 : f32
    %179 = vector.broadcast %cst_73 : f32 to vector<16x1xf32>
    %180 = arith.divf %178, %179 : vector<16x1xf32>
    %181 = vector.broadcast %180 : vector<16x1xf32> to vector<16x128xf32>
    %182 = arith.subf %172, %181 : vector<16x128xf32>
    %183 = arith.mulf %182, %182 : vector<16x128xf32>
    %cst_74 = arith.constant dense<0.000000e+00> : vector<16xf32>
    %184 = vector.multi_reduction <add>, %183, %cst_74 [1] : vector<16x128xf32> to vector<16xf32>
    %185 = vector.shape_cast %184 : vector<16xf32> to vector<16x1xf32>
    %cst_75 = arith.constant 1.280000e+02 : f32
    %186 = vector.broadcast %cst_75 : f32 to vector<16x1xf32>
    %187 = arith.divf %185, %186 : vector<16x1xf32>
    %188 = vector.broadcast %180 : vector<16x1xf32> to vector<16x128xf32>
    %189 = arith.subf %172, %188 : vector<16x128xf32>
    %cst_76 = arith.constant 9.99999974E-6 : f32
    %190 = vector.broadcast %cst_76 : f32 to vector<16x1xf32>
    %191 = arith.addf %187, %190 : vector<16x1xf32>
    %192 = math.rsqrt %191 : vector<16x1xf32>
    %193 = vector.broadcast %192 : vector<16x1xf32> to vector<16x128xf32>
    %194 = arith.mulf %189, %193 : vector<16x128xf32>
    %195 = vector.broadcast %174 : vector<1x128xf32> to vector<16x128xf32>
    %196 = arith.mulf %194, %195 : vector<16x128xf32>
    %197 = vector.broadcast %176 : vector<1x128xf32> to vector<16x128xf32>
    %198 = arith.addf %196, %197 : vector<16x128xf32>
    %c0_77 = arith.constant 0 : index
    %c0_78 = arith.constant 0 : index
    %c0_79 = arith.constant 0 : index
    %199 = vector.load %arg11[%c0_77, %c0_78, %c0_79] : memref<1x128x512xf32, #tpu.memory_space<vmem>>, vector<1x128x512xf32>
    %200 = vector.shape_cast %199 : vector<1x128x512xf32> to vector<128x512xf32>
    %cst_80 = arith.constant dense<0.000000e+00> : vector<16x512xf32>
    %201 = tpu.matmul %198, %200, %cst_80 {dimension_numbers = #tpu.dot_dimension_numbers<[1], [0], [0], [1], [0, 0, 1, 1], [], []>} : vector<16x128xf32>, vector<128x512xf32>, vector<16x512xf32> -> vector<16x512xf32>
    %c0_81 = arith.constant 0 : index
    %c0_82 = arith.constant 0 : index
    %c0_83 = arith.constant 0 : index
    %202 = vector.load %arg12[%c0_81, %c0_82, %c0_83] : memref<1x1x512xf32, #tpu.memory_space<vmem>>, vector<1x1x512xf32>
    %203 = vector.shape_cast %202 : vector<1x1x512xf32> to vector<1x512xf32>
    %204 = vector.broadcast %203 : vector<1x512xf32> to vector<16x512xf32>
    %205 = arith.addf %201, %204 : vector<16x512xf32>
    %cst_84 = arith.constant 5.000000e-01 : f32
    %206 = vector.broadcast %cst_84 : f32 to vector<16x512xf32>
    %207 = arith.mulf %206, %205 : vector<16x512xf32>
    %cst_85 = arith.constant 4.471500e-02 : f32
    %208 = vector.broadcast %cst_85 : f32 to vector<16x512xf32>
    %209 = arith.mulf %208, %205 : vector<16x512xf32>
    %210 = arith.mulf %209, %205 : vector<16x512xf32>
    %211 = arith.mulf %210, %205 : vector<16x512xf32>
    %212 = arith.addf %205, %211 : vector<16x512xf32>
    %cst_86 = arith.constant 0.797884583 : f32
    %213 = vector.broadcast %cst_86 : f32 to vector<16x512xf32>
    %214 = arith.mulf %213, %212 : vector<16x512xf32>
    %215 = math.tanh %214 : vector<16x512xf32>
    %cst_87 = arith.constant 1.000000e+00 : f32
    %216 = vector.broadcast %cst_87 : f32 to vector<16x512xf32>
    %217 = arith.addf %216, %215 : vector<16x512xf32>
    %218 = arith.mulf %207, %217 : vector<16x512xf32>
    %c0_88 = arith.constant 0 : index
    %c0_89 = arith.constant 0 : index
    %c0_90 = arith.constant 0 : index
    %219 = vector.load %arg13[%c0_88, %c0_89, %c0_90] : memref<1x512x128xf32, #tpu.memory_space<vmem>>, vector<1x512x128xf32>
    %220 = vector.shape_cast %219 : vector<1x512x128xf32> to vector<512x128xf32>
    %cst_91 = arith.constant dense<0.000000e+00> : vector<16x128xf32>
    %221 = tpu.matmul %218, %220, %cst_91 {dimension_numbers = #tpu.dot_dimension_numbers<[1], [0], [0], [1], [0, 0, 1, 1], [], []>} : vector<16x512xf32>, vector<512x128xf32>, vector<16x128xf32> -> vector<16x128xf32>
    %c0_92 = arith.constant 0 : index
    %c0_93 = arith.constant 0 : index
    %c0_94 = arith.constant 0 : index
    %222 = vector.load %arg14[%c0_92, %c0_93, %c0_94] : memref<1x1x128xf32, #tpu.memory_space<vmem>>, vector<1x1x128xf32>
    %223 = vector.shape_cast %222 : vector<1x1x128xf32> to vector<1x128xf32>
    %224 = vector.broadcast %223 : vector<1x128xf32> to vector<16x128xf32>
    %225 = arith.addf %221, %224 : vector<16x128xf32>
    %226 = arith.addf %172, %225 : vector<16x128xf32>
    %c0_95 = arith.constant 0 : index
    %c0_96 = arith.constant 0 : index
    %227 = vector.load %arg16[%c0_95, %c0_96] : memref<16x128xf32, #tpu.memory_space<vmem>>, vector<16x128xf32>
    tpu.vector_store %arg16[%c0_95, %c0_96], %226 {strides = array<i32>} : memref<16x128xf32, #tpu.memory_space<vmem>>, vector<16x128xf32>,
    %c0_97 = arith.constant 0 : index
    %c0_98 = arith.constant 0 : index
    %c0_99 = arith.constant 0 : index
    %c0_100 = arith.constant 0 : index
    %228 = vector.load %arg15[%c0_97, %c0_98, %c0_99, %c0_100] : memref<1x1x16x128xf32, #tpu.memory_space<vmem>>, vector<1x1x16x128xf32>
    %229 = vector.shape_cast %228 : vector<1x1x16x128xf32> to vector<16x128xf32>
    %230 = vector.shape_cast %226 : vector<16x128xf32> to vector<1x1x16x128xf32>
    tpu.vector_store %arg15[%c0_97, %c0_98, %c0_99, %c0_100], %230 {strides = array<i32>} : memref<1x1x16x128xf32, #tpu.memory_space<vmem>>, vector<1x1x16x128xf32>,
    return
  }
  func.func @transform_0(%arg0: i32, %arg1: i32) -> (i32, i32, i32) {
    %c0_i32 = arith.constant 0 : i32
    %c0_i32_0 = arith.constant 0 : i32
    %c0_i32_1 = arith.constant 0 : i32
    return %arg0, %c0_i32, %c0_i32_0 : i32, i32, i32
  }
  func.func @transform_1(%arg0: i32, %arg1: i32) -> (i32, i32, i32) {
    %c0_i32 = arith.constant 0 : i32
    %c0_i32_0 = arith.constant 0 : i32
    %c0_i32_1 = arith.constant 0 : i32
    return %arg0, %c0_i32, %c0_i32_0 : i32, i32, i32
  }
  func.func @transform_2(%arg0: i32, %arg1: i32) -> (i32, i32, i32) {
    %c0_i32 = arith.constant 0 : i32
    %c0_i32_0 = arith.constant 0 : i32
    %c0_i32_1 = arith.constant 0 : i32
    return %arg1, %c0_i32, %c0_i32_0 : i32, i32, i32
  }
  func.func @transform_3(%arg0: i32, %arg1: i32) -> (i32, i32, i32) {
    %c0_i32 = arith.constant 0 : i32
    %c0_i32_0 = arith.constant 0 : i32
    %c0_i32_1 = arith.constant 0 : i32
    return %arg1, %c0_i32, %c0_i32_0 : i32, i32, i32
  }
  func.func @transform_4(%arg0: i32, %arg1: i32) -> (i32, i32, i32) {
    %c0_i32 = arith.constant 0 : i32
    %c0_i32_0 = arith.constant 0 : i32
    %c0_i32_1 = arith.constant 0 : i32
    return %arg1, %c0_i32, %c0_i32_0 : i32, i32, i32
  }
  func.func @transform_5(%arg0: i32, %arg1: i32) -> (i32, i32, i32) {
    %c0_i32 = arith.constant 0 : i32
    %c0_i32_0 = arith.constant 0 : i32
    %c0_i32_1 = arith.constant 0 : i32
    return %arg1, %c0_i32, %c0_i32_0 : i32, i32, i32
  }
  func.func @transform_6(%arg0: i32, %arg1: i32) -> (i32, i32, i32) {
    %c0_i32 = arith.constant 0 : i32
    %c0_i32_0 = arith.constant 0 : i32
    %c0_i32_1 = arith.constant 0 : i32
    return %arg1, %c0_i32, %c0_i32_0 : i32, i32, i32
  }
  func.func @transform_7(%arg0: i32, %arg1: i32) -> (i32, i32, i32) {
    %c0_i32 = arith.constant 0 : i32
    %c0_i32_0 = arith.constant 0 : i32
    %c0_i32_1 = arith.constant 0 : i32
    return %arg1, %c0_i32, %c0_i32_0 : i32, i32, i32
  }
  func.func @transform_8(%arg0: i32, %arg1: i32) -> (i32, i32, i32) {
    %c0_i32 = arith.constant 0 : i32
    %c0_i32_0 = arith.constant 0 : i32
    %c0_i32_1 = arith.constant 0 : i32
    return %arg1, %c0_i32, %c0_i32_0 : i32, i32, i32
  }
  func.func @transform_9(%arg0: i32, %arg1: i32) -> (i32, i32, i32) {
    %c0_i32 = arith.constant 0 : i32
    %c0_i32_0 = arith.constant 0 : i32
    %c0_i32_1 = arith.constant 0 : i32
    return %arg1, %c0_i32, %c0_i32_0 : i32, i32, i32
  }
  func.func @transform_10(%arg0: i32, %arg1: i32) -> (i32, i32, i32) {
    %c0_i32 = arith.constant 0 : i32
    %c0_i32_0 = arith.constant 0 : i32
    %c0_i32_1 = arith.constant 0 : i32
    return %arg1, %c0_i32, %c0_i32_0 : i32, i32, i32
  }
  func.func @transform_11(%arg0: i32, %arg1: i32) -> (i32, i32, i32) {
    %c0_i32 = arith.constant 0 : i32
    %c0_i32_0 = arith.constant 0 : i32
    %c0_i32_1 = arith.constant 0 : i32
    return %arg1, %c0_i32, %c0_i32_0 : i32, i32, i32
  }
  func.func @transform_12(%arg0: i32, %arg1: i32) -> (i32, i32, i32) {
    %c0_i32 = arith.constant 0 : i32
    %c0_i32_0 = arith.constant 0 : i32
    %c0_i32_1 = arith.constant 0 : i32
    return %arg1, %c0_i32, %c0_i32_0 : i32, i32, i32
  }
  func.func @transform_13(%arg0: i32, %arg1: i32) -> (i32, i32, i32, i32) {
    %c0_i32 = arith.constant 0 : i32
    %c0_i32_0 = arith.constant 0 : i32
    %c0_i32_1 = arith.constant 0 : i32
    return %arg1, %arg0, %c0_i32, %c0_i32_0 : i32, i32, i32, i32
  }
}

</mosaic_0001>

<llo_original>
// kernel: tpu_custom_call.1
$region0: #{tpu_custom_call.1}
  #allocation0 [shape = 'u32[]', space=smem, size = 0x4, offset = 0x4, fixed_abs, tag = 'smem constant byte address 0x4 - core index']
  #allocation1 [shape = 'u32[144,128]{1,0:T(1,128)}', space=vmem, size = 0x12000, scoped, tag = 'internal scratch']
  #allocation2 [shape = 'f32[16,128]{1,0:T(8,128)}', space=vmem, size = 0x2000, scoped, tag = 'scratch operand']
  %s0 = inlined_call_operand.hbm [shape: f32[2,16,128], index: 0, kind: input, shape index: {}]
  %s1 = inlined_call_operand.hbm [shape: f32[2,16,128], index: 1, kind: input, shape index: {}]
  %s2 = inlined_call_operand.vmem [shape: f32[4,1,128], index: 2, kind: input, shape index: {}]
  %s3 = inlined_call_operand.vmem [shape: f32[4,1,128], index: 3, kind: input, shape index: {}]
  %s4 = inlined_call_operand.hbm [shape: f32[4,128,384], index: 4, kind: input, shape index: {}]
  %s5 = inlined_call_operand.hbm [shape: f32[4,128,128], index: 5, kind: input, shape index: {}]
  %s6 = inlined_call_operand.vmem [shape: f32[4,1,128], index: 6, kind: input, shape index: {}]
  %s7 = inlined_call_operand.hbm [shape: f32[4,1,128], index: 7, kind: input, shape index: {}]
  %s8 = inlined_call_operand.hbm [shape: f32[4,1,128], index: 8, kind: input, shape index: {}]
  %s9 = inlined_call_operand.hbm [shape: f32[4,128,512], index: 9, kind: input, shape index: {}]
  %s10 = inlined_call_operand.vmem [shape: f32[4,1,512], index: 10, kind: input, shape index: {}]
  %s11 = inlined_call_operand.hbm [shape: f32[4,512,128], index: 11, kind: input, shape index: {}]
  %s12 = inlined_call_operand.vmem [shape: f32[4,1,128], index: 12, kind: input, shape index: {}]
  %s13 = inlined_call_operand.hbm [shape: f32[4,2,16,128], index: 13, kind: output, shape index: {}]
  %s14 = sld [smem:[#allocation0]]
  $region121: #{tpu_custom_call.1} parent=0
    _
  %s16 = ssub.s32 1, %s14
  %s17 = scalar_select 0, %s16, %s14
  $region1: #{tpu_custom_call.1} parent=0
    #allocation3 [shape = 'u8[16384]{0}', space=vmem, size = 0x4000, scoped, tag = 'input window, operand 0']
    #allocation4 [shape = 's32[2]{0}', space=sflag, size = 0x8, scoped, tag = 'scoped memory for tpu_custom_call.1']
    #allocation5 [shape = 's32[2]{0}', space=sflag, size = 0x8, scoped, tag = 'scoped memory for tpu_custom_call.1']
    #allocation6 [shape = 'u8[16384]{0}', space=vmem, size = 0x4000, scoped, tag = 'input window, operand 1']
    #allocation7 [shape = 's32[2]{0}', space=sflag, size = 0x8, scoped, tag = 'scoped memory for tpu_custom_call.1']
    #allocation8 [shape = 'u8[393216]{0}', space=vmem, size = 0x60000, scoped, tag = 'input window, operand 4']
    #allocation9 [shape = 'u8[131072]{0}', space=vmem, size = 0x20000, scoped, tag = 'input window, operand 5']
    #allocation10 [shape = 's32[2]{0}', space=sflag, size = 0x8, scoped, tag = 'scoped memory for tpu_custom_call.1']
    #allocation11 [shape = 'u8[1024]{0}', space=vmem, size = 0x400, scoped, tag = 'input window, operand 7']
    #allocation12 [shape = 'u8[1024]{0}', space=vmem, size = 0x400, scoped, tag = 'input window, operand 8']
    #allocation13 [shape = 's32[2]{0}', space=sflag, size = 0x8, scoped, tag = 'scoped memory for tpu_custom_call.1']
    #allocation14 [shape = 'u8[524288]{0}', space=vmem, size = 0x80000, scoped, tag = 'input window, operand 9']
    #allocation15 [shape = 'u8[524288]{0}', space=vmem, size = 0x80000, scoped, tag = 'input window, operand 11']
    #allocation16 [shape = 's32[2]{0}', space=sflag, size = 0x8, scoped, tag = 'scoped memory for tpu_custom_call.1']
    #allocation17 [shape = 'u8[16384]{0}', space=vmem, size = 0x4000, scoped, tag = 'output window, operand 0']
    %18 = vsyncpa [#allocation4], 0
    %s19 = scalar_lea.sflag [#allocation4], 1
    %20 = vsyncpa %s19, 0
    %21 = vsyncpa [#allocation7], 0
    %s22 = scalar_lea.sflag [#allocation7], 1
    %23 = vsyncpa %s22, 0
    %24 = vsyncpa [#allocation10], 0
    %s25 = scalar_lea.sflag [#allocation10], 1
    %26 = vsyncpa %s25, 0
    %27 = vsyncpa [#allocation13], 0
    %s28 = scalar_lea.sflag [#allocation13], 1
    %29 = vsyncpa %s28, 0
    %30 = vsyncpa [#allocation16], 0
    %s31 = scalar_lea.sflag [#allocation16], 1
    %32 = vsyncpa %s31, 0
    %33 = vsyncpa [#allocation5], 0
    %s34 = scalar_lea.sflag [#allocation5], 1
    %35 = vsyncpa %s34, 0
    loop: start=0, step=1, limit=10
    $region2: #{tpu_custom_call.1} parent=1 // loop_pre_header
      _
    $region3: #{tpu_custom_call.1} parent=1 // loop_header
      %s37 = sphi 0, %s41
      %p38 = scmp.ge.s32.totalorder %s37, 10
      %s44 = sphi 0, %s56
      %s45 = sphi 0, %s52
      %s46 = sphi 0, %s44
      %s47 = sphi 0, %s45
      %s48 = sphi 0, %s46
      %s49 = sphi 0, %s47
      %s59 = sphi 0, %s61
      %s62 = sphi 0, %s59
      %s63 = sphi 0, %s62
      %s79 = sphi 0, %s63
      %s85 = sphi 0, %s87
      %s88 = sphi 0, %s85
      %s89 = sphi 0, %s88
      %s105 = sphi 0, %s89
      %s111 = sphi 0, %s113
      %s114 = sphi 0, %s111
      %s115 = sphi 0, %s114
      %s131 = sphi 0, %s115
      %s137 = sphi 0, %s139
      %s140 = sphi 0, %s137
      %s141 = sphi 0, %s140
      %s157 = sphi 0, %s141
      %s163 = sphi 0, %s165
      %s166 = sphi 0, %s163
      %s167 = sphi 0, %s166
      %s183 = sphi 0, %s167
      %s189 = sphi 0, %s191
      %s192 = sphi 0, %s189
      %s193 = sphi 0, %s192
      %s209 = sphi 0, %s193
      %s215 = sphi 0, %s217
      %s218 = sphi 0, %s215
      %s219 = sphi 0, %s218
      %s235 = sphi 0, %s219
      %s241 = sphi 0, %s243
      %s244 = sphi 0, %s241
      %s245 = sphi 0, %s244
      %s261 = sphi 0, %s245
      %s267 = sphi 0, %s269
      %s270 = sphi 0, %s267
      %s271 = sphi 0, %s270
      %s287 = sphi 0, %s271
      %s293 = sphi 0, %s295
      %s296 = sphi 0, %s293
      %s297 = sphi 0, %s296
      %s313 = sphi 0, %s297
      %s319 = sphi 0, %s321
      %s322 = sphi 0, %s319
      %s323 = sphi 0, %s322
      %s339 = sphi 0, %s323
      %s345 = sphi 0, %s347
      %s348 = sphi 0, %s345
      %s349 = sphi 0, %s348
      %s365 = sphi 0, %s349
      %s371 = sphi 0, %s373
      %s374 = sphi 0, %s371
      %s375 = sphi 0, %s374
      %s391 = sphi 0, %s375
      %s399 = sphi 0, %s401
      %s402 = sphi 0, %s399
      %s403 = sphi 0, %s402
      %s419 = sphi 0, %s403
    $region4: #{tpu_custom_call.1} parent=1 // loop_header_branch
      %40 = sbr.rel (%p38) target = $region8
    $region5: #{tpu_custom_call.1} parent=1 // loop_body
      %s42 = ssub.s32 %s37, 1
      %s43 = ssub.s32 %s37, 2
      %s50 = sadd.s32 1, %s45
      %p51 = scmp.ge.s32.totalorder %s50, 4
      %s52 = scalar_select %p51, 0, %s50
      %s53 = sadd.s32 1, %s44
      %s54 = scalar_select %p51, %s53, %s44
      %p55 = scmp.ge.s32.totalorder %s54, 2
      %s56 = scalar_select %p55, 0, %s54
      %s57 = ssub.s32 %s44, %s56
      %p58 = scmp.eq.s32.totalorder %s57, 0
      %s60 = sadd.s32 %s59, 1
      %s61 = scalar_select %p58, %s59, %s60
      %p64 = pneg %p58
      %p65 = scmp.eq.s32.totalorder %s37, 7
      %p66 = por %p64, %p65
      %p67 = scmp.ne.s32.totalorder %s59, %s62
      %p68 = scmp.eq.s32.totalorder %s37, 0
      %p69 = por %p67, %p68
      %p70 = scmp.ne.s32.totalorder %s59, %s62
      %p71 = scmp.eq.s32.totalorder %s42, 7
      %p72 = por %p70, %p71
      %p73 = scmp.ne.s32.totalorder %s62, %s63
      %p74 = scmp.eq.s32.totalorder %s42, 0
      %p75 = por %p73, %p74
      %p76 = scmp.ne.s32.totalorder %s62, %s63
      %p77 = scmp.eq.s32.totalorder %s43, 7
      %p78 = por %p76, %p77
      %p80 = scmp.ne.s32.totalorder %s63, %s79
      %p81 = scmp.eq.s32.totalorder %s43, 0
      %p82 = por %p80, %p81
      %s83 = ssub.s32 %s44, %s56
      %p84 = scmp.eq.s32.totalorder %s83, 0
      %s86 = sadd.s32 %s85, 1
      %s87 = scalar_select %p84, %s85, %s86
      %p90 = pneg %p84
      %p91 = scmp.eq.s32.totalorder %s37, 7
      %p92 = por %p90, %p91
      %p93 = scmp.ne.s32.totalorder %s85, %s88
      %p94 = scmp.eq.s32.totalorder %s37, 0
      %p95 = por %p93, %p94
      %p96 = scmp.ne.s32.totalorder %s85, %s88
      %p97 = scmp.eq.s32.totalorder %s42, 7
      %p98 = por %p96, %p97
      %p99 = scmp.ne.s32.totalorder %s88, %s89
      %p100 = scmp.eq.s32.totalorder %s42, 0
      %p101 = por %p99, %p100
      %p102 = scmp.ne.s32.totalorder %s88, %s89
      %p103 = scmp.eq.s32.totalorder %s43, 7
      %p104 = por %p102, %p103
      %p106 = scmp.ne.s32.totalorder %s89, %s105
      %p107 = scmp.eq.s32.totalorder %s43, 0
      %p108 = por %p106, %p107
      %s109 = ssub.s32 %s45, %s52
      %p110 = scmp.eq.s32.totalorder %s109, 0
      %s112 = sadd.s32 %s111, 1
      %s113 = scalar_select %p110, %s111, %s112
      %p116 = pneg %p110
      %p117 = scmp.eq.s32.totalorder %s37, 7
      %p118 = por %p116, %p117
      %p119 = scmp.ne.s32.totalorder %s111, %s114
      %p120 = scmp.eq.s32.totalorder %s37, 0
      %p121 = por %p119, %p120
      %p122 = scmp.ne.s32.totalorder %s111, %s114
      %p123 = scmp.eq.s32.totalorder %s42, 7
      %p124 = por %p122, %p123
      %p125 = scmp.ne.s32.totalorder %s114, %s115
      %p126 = scmp.eq.s32.totalorder %s42, 0
      %p127 = por %p125, %p126
      %p128 = scmp.ne.s32.totalorder %s114, %s115
      %p129 = scmp.eq.s32.totalorder %s43, 7
      %p130 = por %p128, %p129
      %p132 = scmp.ne.s32.totalorder %s115, %s131
      %p133 = scmp.eq.s32.totalorder %s43, 0
      %p134 = por %p132, %p133
      %s135 = ssub.s32 %s45, %s52
      %p136 = scmp.eq.s32.totalorder %s135, 0
      %s138 = sadd.s32 %s137, 1
      %s139 = scalar_select %p136, %s137, %s138
      %p142 = pneg %p136
      %p143 = scmp.eq.s32.totalorder %s37, 7
      %p144 = por %p142, %p143
      %p145 = scmp.ne.s32.totalorder %s137, %s140
      %p146 = scmp.eq.s32.totalorder %s37, 0
      %p147 = por %p145, %p146
      %p148 = scmp.ne.s32.totalorder %s137, %s140
      %p149 = scmp.eq.s32.totalorder %s42, 7
      %p150 = por %p148, %p149
      %p151 = scmp.ne.s32.totalorder %s140, %s141
      %p152 = scmp.eq.s32.totalorder %s42, 0
      %p153 = por %p151, %p152
      %p154 = scmp.ne.s32.totalorder %s140, %s141
      %p155 = scmp.eq.s32.totalorder %s43, 7
      %p156 = por %p154, %p155
      %p158 = scmp.ne.s32.totalorder %s141, %s157
      %p159 = scmp.eq.s32.totalorder %s43, 0
      %p160 = por %p158, %p159
      %s161 = ssub.s32 %s45, %s52
      %p162 = scmp.eq.s32.totalorder %s161, 0
      %s164 = sadd.s32 %s163, 1
      %s165 = scalar_select %p162, %s163, %s164
      %p168 = pneg %p162
      %p169 = scmp.eq.s32.totalorder %s37, 7
      %p170 = por %p168, %p169
      %p171 = scmp.ne.s32.totalorder %s163, %s166
      %p172 = scmp.eq.s32.totalorder %s37, 0
      %p173 = por %p171, %p172
      %p174 = scmp.ne.s32.totalorder %s163, %s166
      %p175 = scmp.eq.s32.totalorder %s42, 7
      %p176 = por %p174, %p175
      %p177 = scmp.ne.s32.totalorder %s166, %s167
      %p178 = scmp.eq.s32.totalorder %s42, 0
      %p179 = por %p177, %p178
      %p180 = scmp.ne.s32.totalorder %s166, %s167
      %p181 = scmp.eq.s32.totalorder %s43, 7
      %p182 = por %p180, %p181
      %p184 = scmp.ne.s32.totalorder %s167, %s183
      %p185 = scmp.eq.s32.totalorder %s43, 0
      %p186 = por %p184, %p185
      %s187 = ssub.s32 %s45, %s52
      %p188 = scmp.eq.s32.totalorder %s187, 0
      %s190 = sadd.s32 %s189, 1
      %s191 = scalar_select %p188, %s189, %s190
      %p194 = pneg %p188
      %p195 = scmp.eq.s32.totalorder %s37, 7
      %p196 = por %p194, %p195
      %p197 = scmp.ne.s32.totalorder %s189, %s192
      %p198 = scmp.eq.s32.totalorder %s37, 0
      %p199 = por %p197, %p198
      %p200 = scmp.ne.s32.totalorder %s189, %s192
      %p201 = scmp.eq.s32.totalorder %s42, 7
      %p202 = por %p200, %p201
      %p203 = scmp.ne.s32.totalorder %s192, %s193
      %p204 = scmp.eq.s32.totalorder %s42, 0
      %p205 = por %p203, %p204
      %p206 = scmp.ne.s32.totalorder %s192, %s193
      %p207 = scmp.eq.s32.totalorder %s43, 7
      %p208 = por %p206, %p207
      %p210 = scmp.ne.s32.totalorder %s193, %s209
      %p211 = scmp.eq.s32.totalorder %s43, 0
      %p212 = por %p210, %p211
      %s213 = ssub.s32 %s45, %s52
      %p214 = scmp.eq.s32.totalorder %s213, 0
      %s216 = sadd.s32 %s215, 1
      %s217 = scalar_select %p214, %s215, %s216
      %p220 = pneg %p214
      %p221 = scmp.eq.s32.totalorder %s37, 7
      %p222 = por %p220, %p221
      %p223 = scmp.ne.s32.totalorder %s215, %s218
      %p224 = scmp.eq.s32.totalorder %s37, 0
      %p225 = por %p223, %p224
      %p226 = scmp.ne.s32.totalorder %s215, %s218
      %p227 = scmp.eq.s32.totalorder %s42, 7
      %p228 = por %p226, %p227
      %p229 = scmp.ne.s32.totalorder %s218, %s219
      %p230 = scmp.eq.s32.totalorder %s42, 0
      %p231 = por %p229, %p230
      %p232 = scmp.ne.s32.totalorder %s218, %s219
      %p233 = scmp.eq.s32.totalorder %s43, 7
      %p234 = por %p232, %p233
      %p236 = scmp.ne.s32.totalorder %s219, %s235
      %p237 = scmp.eq.s32.totalorder %s43, 0
      %p238 = por %p236, %p237
      %s239 = ssub.s32 %s45, %s52
      %p240 = scmp.eq.s32.totalorder %s239, 0
      %s242 = sadd.s32 %s241, 1
      %s243 = scalar_select %p240, %s241, %s242
      %p246 = pneg %p240
      %p247 = scmp.eq.s32.totalorder %s37, 7
      %p248 = por %p246, %p247
      %p249 = scmp.ne.s32.totalorder %s241, %s244
      %p250 = scmp.eq.s32.totalorder %s37, 0
      %p251 = por %p249, %p250
      %p252 = scmp.ne.s32.totalorder %s241, %s244
      %p253 = scmp.eq.s32.totalorder %s42, 7
      %p254 = por %p252, %p253
      %p255 = scmp.ne.s32.totalorder %s244, %s245
      %p256 = scmp.eq.s32.totalorder %s42, 0
      %p257 = por %p255, %p256
      %p258 = scmp.ne.s32.totalorder %s244, %s245
      %p259 = scmp.eq.s32.totalorder %s43, 7
      %p260 = por %p258, %p259
      %p262 = scmp.ne.s32.totalorder %s245, %s261
      %p263 = scmp.eq.s32.totalorder %s43, 0
      %p264 = por %p262, %p263
      %s265 = ssub.s32 %s45, %s52
      %p266 = scmp.eq.s32.totalorder %s265, 0
      %s268 = sadd.s32 %s267, 1
      %s269 = scalar_select %p266, %s267, %s268
      %p272 = pneg %p266
      %p273 = scmp.eq.s32.totalorder %s37, 7
      %p274 = por %p272, %p273
      %p275 = scmp.ne.s32.totalorder %s267, %s270
      %p276 = scmp.eq.s32.totalorder %s37, 0
      %p277 = por %p275, %p276
      %p278 = scmp.ne.s32.totalorder %s267, %s270
      %p279 = scmp.eq.s32.totalorder %s42, 7
      %p280 = por %p278, %p279
      %p281 = scmp.ne.s32.totalorder %s270, %s271
      %p282 = scmp.eq.s32.totalorder %s42, 0
      %p283 = por %p281, %p282
      %p284 = scmp.ne.s32.totalorder %s270, %s271
      %p285 = scmp.eq.s32.totalorder %s43, 7
      %p286 = por %p284, %p285
      %p288 = scmp.ne.s32.totalorder %s271, %s287
      %p289 = scmp.eq.s32.totalorder %s43, 0
      %p290 = por %p288, %p289
      %s291 = ssub.s32 %s45, %s52
      %p292 = scmp.eq.s32.totalorder %s291, 0
      %s294 = sadd.s32 %s293, 1
      %s295 = scalar_select %p292, %s293, %s294
      %p298 = pneg %p292
      %p299 = scmp.eq.s32.totalorder %s37, 7
      %p300 = por %p298, %p299
      %p301 = scmp.ne.s32.totalorder %s293, %s296
      %p302 = scmp.eq.s32.totalorder %s37, 0
      %p303 = por %p301, %p302
      %p304 = scmp.ne.s32.totalorder %s293, %s296
      %p305 = scmp.eq.s32.totalorder %s42, 7
      %p306 = por %p304, %p305
      %p307 = scmp.ne.s32.totalorder %s296, %s297
      %p308 = scmp.eq.s32.totalorder %s42, 0
      %p309 = por %p307, %p308
      %p310 = scmp.ne.s32.totalorder %s296, %s297
      %p311 = scmp.eq.s32.totalorder %s43, 7
      %p312 = por %p310, %p311
      %p314 = scmp.ne.s32.totalorder %s297, %s313
      %p315 = scmp.eq.s32.totalorder %s43, 0
      %p316 = por %p314, %p315
      %s317 = ssub.s32 %s45, %s52
      %p318 = scmp.eq.s32.totalorder %s317, 0
      %s320 = sadd.s32 %s319, 1
      %s321 = scalar_select %p318, %s319, %s320
      %p324 = pneg %p318
      %p325 = scmp.eq.s32.totalorder %s37, 7
      %p326 = por %p324, %p325
      %p327 = scmp.ne.s32.totalorder %s319, %s322
      %p328 = scmp.eq.s32.totalorder %s37, 0
      %p329 = por %p327, %p328
      %p330 = scmp.ne.s32.totalorder %s319, %s322
      %p331 = scmp.eq.s32.totalorder %s42, 7
      %p332 = por %p330, %p331
      %p333 = scmp.ne.s32.totalorder %s322, %s323
      %p334 = scmp.eq.s32.totalorder %s42, 0
      %p335 = por %p333, %p334
      %p336 = scmp.ne.s32.totalorder %s322, %s323
      %p337 = scmp.eq.s32.totalorder %s43, 7
      %p338 = por %p336, %p337
      %p340 = scmp.ne.s32.totalorder %s323, %s339
      %p341 = scmp.eq.s32.totalorder %s43, 0
      %p342 = por %p340, %p341
      %s343 = ssub.s32 %s45, %s52
      %p344 = scmp.eq.s32.totalorder %s343, 0
      %s346 = sadd.s32 %s345, 1
      %s347 = scalar_select %p344, %s345, %s346
      %p350 = pneg %p344
      %p351 = scmp.eq.s32.totalorder %s37, 7
      %p352 = por %p350, %p351
      %p353 = scmp.ne.s32.totalorder %s345, %s348
      %p354 = scmp.eq.s32.totalorder %s37, 0
      %p355 = por %p353, %p354
      %p356 = scmp.ne.s32.totalorder %s345, %s348
      %p357 = scmp.eq.s32.totalorder %s42, 7
      %p358 = por %p356, %p357
      %p359 = scmp.ne.s32.totalorder %s348, %s349
      %p360 = scmp.eq.s32.totalorder %s42, 0
      %p361 = por %p359, %p360
      %p362 = scmp.ne.s32.totalorder %s348, %s349
      %p363 = scmp.eq.s32.totalorder %s43, 7
      %p364 = por %p362, %p363
      %p366 = scmp.ne.s32.totalorder %s349, %s365
      %p367 = scmp.eq.s32.totalorder %s43, 0
      %p368 = por %p366, %p367
      %s369 = ssub.s32 %s45, %s52
      %p370 = scmp.eq.s32.totalorder %s369, 0
      %s372 = sadd.s32 %s371, 1
      %s373 = scalar_select %p370, %s371, %s372
      %p376 = pneg %p370
      %p377 = scmp.eq.s32.totalorder %s37, 7
      %p378 = por %p376, %p377
      %p379 = scmp.ne.s32.totalorder %s371, %s374
      %p380 = scmp.eq.s32.totalorder %s37, 0
      %p381 = por %p379, %p380
      %p382 = scmp.ne.s32.totalorder %s371, %s374
      %p383 = scmp.eq.s32.totalorder %s42, 7
      %p384 = por %p382, %p383
      %p385 = scmp.ne.s32.totalorder %s374, %s375
      %p386 = scmp.eq.s32.totalorder %s42, 0
      %p387 = por %p385, %p386
      %p388 = scmp.ne.s32.totalorder %s374, %s375
      %p389 = scmp.eq.s32.totalorder %s43, 7
      %p390 = por %p388, %p389
      %p392 = scmp.ne.s32.totalorder %s375, %s391
      %p393 = scmp.eq.s32.totalorder %s43, 0
      %p394 = por %p392, %p393
      %s395 = ssub.s32 %s45, %s52
      %s396 = ssub.s32 %s44, %s56
      %s397 = sor.u32 %s395, %s396
      %p398 = scmp.eq.s32.totalorder %s397, 0
      %s400 = sadd.s32 %s399, 1
      %s401 = scalar_select %p398, %s399, %s400
      %p404 = pneg %p398
      %p405 = scmp.eq.s32.totalorder %s37, 7
      %p406 = por %p404, %p405
      %p407 = scmp.ne.s32.totalorder %s399, %s402
      %p408 = scmp.eq.s32.totalorder %s37, 0
      %p409 = por %p407, %p408
      %p410 = scmp.ne.s32.totalorder %s399, %s402
      %p411 = scmp.eq.s32.totalorder %s42, 7
      %p412 = por %p410, %p411
      %p413 = scmp.ne.s32.totalorder %s402, %s403
      %p414 = scmp.eq.s32.totalorder %s42, 0
      %p415 = por %p413, %p414
      %p416 = scmp.ne.s32.totalorder %s402, %s403
      %p417 = scmp.eq.s32.totalorder %s43, 7
      %p418 = por %p416, %p417
      %p420 = scmp.ne.s32.totalorder %s403, %s419
      %p421 = scmp.eq.s32.totalorder %s43, 0
      %p422 = por %p420, %p421
      %p423 = scmp.le.s32.totalorder 1, %s37
      %p424 = scmp.lt.s32.totalorder %s37, 9
      %p425 = pnand %p423, %p424
      %p426 = pneg %p425
      // Predicated region
      $region9: #{tpu_custom_call.1} parent=5 // pred_check
        _
      $region10: #{tpu_custom_call.1} parent=5 // pred_check_branch
        %428 = sbr.rel (%p425) target = $region12
      $region11: #{tpu_custom_call.1} parent=5 // pred_region
        %s429 = ssub.s32 %s37, 1
      $region12: #{tpu_custom_call.1} parent=5 // pred_fallthru
        _
      %p430 = scmp.lt.s32.totalorder %s37, 8
      // Predicated region
      $region13: #{tpu_custom_call.1} parent=5 // pred_check
        %p431 = pneg %p430
      $region14: #{tpu_custom_call.1} parent=5 // pred_check_branch
        %433 = sbr.rel (%p431) target = $region16
      $region15: #{tpu_custom_call.1} parent=5 // pred_region
        // Predicated region
        $region17: #{tpu_custom_call.1} parent=15 // pred_check
          %p434 = pneg %p69
        $region18: #{tpu_custom_call.1} parent=15 // pred_check_branch
          %436 = sbr.rel (%p434) target = $region20
        $region19: #{tpu_custom_call.1} parent=15 // pred_region
          %s437 = sand.u32 %s59, 1
          %s438 = scalar_lea.sflag [#allocation4], %s437
          %s439 = sand.u32 %s59, 1
          %s440 = smul.addr %s439, 16
          %s441 = scalar_lea.vmem [#allocation3], %s440
          %s443 = ssub.s32 256, 256
          %444 = vsyncadd %s438, %s443
          %s445 = smul.addr %s44, 2
          %s446 = smul.addr %s445, 128
          %s447 = scalar_lea.hbm %s0, %s446
          %s448 = sshll.u32 %s441, 4
          %s449 = int_to_ptr.vmem [resolvable:$true] %s448
          %454 = dma.hbm_to_vmem [thread:$0]  %s447, 256, %s449, %s438, 128, 128, 8
        $region20: #{tpu_custom_call.1} parent=15 // pred_fallthru
          _
        // Predicated region
        $region21: #{tpu_custom_call.1} parent=15 // pred_check
          %p455 = pneg %p95
        $region22: #{tpu_custom_call.1} parent=15 // pred_check_branch
          %457 = sbr.rel (%p455) target = $region24
        $region23: #{tpu_custom_call.1} parent=15 // pred_region
          %s458 = sand.u32 %s37, 1
          %s459 = scalar_lea.sflag [#allocation7], %s458
          %s460 = sand.u32 %s85, 1
          %s461 = smul.addr %s460, 16
          %s462 = scalar_lea.vmem [#allocation6], %s461
          %s464 = ssub.s32 256, 256
          %465 = vsyncadd %s459, %s464
          %s466 = smul.addr %s44, 2
          %s467 = smul.addr %s466, 128
          %s468 = scalar_lea.hbm %s1, %s467
          %s469 = sshll.u32 %s462, 4
          %s470 = int_to_ptr.vmem [resolvable:$true] %s469
          %475 = dma.hbm_to_vmem [thread:$0]  %s468, 256, %s470, %s459, 128, 128, 8
        $region24: #{tpu_custom_call.1} parent=15 // pred_fallthru
          _
        // Predicated region
        $region25: #{tpu_custom_call.1} parent=15 // pred_check
          %p476 = pneg %p121
        $region26: #{tpu_custom_call.1} parent=15 // pred_check_branch
          %478 = sbr.rel (%p476) target = $region28
        $region27: #{tpu_custom_call.1} parent=15 // pred_region
          %p479 = scmp.lt.s32.totalorder %s45, 3
          %s480 = scalar_select %p479, %s45, 3
          %s481 = scalar_lea.vmem %s2, %s480
        $region28: #{tpu_custom_call.1} parent=15 // pred_fallthru
          _
        // Predicated region
        $region29: #{tpu_custom_call.1} parent=15 // pred_check
          %p482 = pneg %p147
        $region30: #{tpu_custom_call.1} parent=15 // pred_check_branch
          %484 = sbr.rel (%p482) target = $region32
        $region31: #{tpu_custom_call.1} parent=15 // pred_region
          %p485 = scmp.lt.s32.totalorder %s45, 3
          %s486 = scalar_select %p485, %s45, 3
          %s487 = scalar_lea.vmem %s3, %s486
        $region32: #{tpu_custom_call.1} parent=15 // pred_fallthru
          _
        // Predicated region
        $region33: #{tpu_custom_call.1} parent=15 // pred_check
          %p488 = pneg %p173
        $region34: #{tpu_custom_call.1} parent=15 // pred_check_branch
          %490 = sbr.rel (%p488) target = $region36
        $region35: #{tpu_custom_call.1} parent=15 // pred_region
          %s491 = sand.u32 %s37, 1
          %s492 = scalar_lea.sflag [#allocation7], %s491
          %s493 = sand.u32 %s163, 1
          %s494 = smul.addr %s493, 384
          %s495 = scalar_lea.vmem [#allocation8], %s494
          %s497 = ssub.s32 6144, 6144
          %498 = vsyncadd %s492, %s497
          %s499 = smul.addr %s45, 48
          %s500 = smul.addr %s499, 128
          %s501 = scalar_lea.hbm %s4, %s500
          %s502 = sshll.u32 %s495, 4
          %s503 = int_to_ptr.vmem [resolvable:$true] %s502
          %508 = dma.hbm_to_vmem [thread:$0]  %s501, 6144, %s503, %s492, 384, 384, 24
        $region36: #{tpu_custom_call.1} parent=15 // pred_fallthru
          _
        // Predicated region
        $region37: #{tpu_custom_call.1} parent=15 // pred_check
          %p509 = pneg %p199
        $region38: #{tpu_custom_call.1} parent=15 // pred_check_branch
          %511 = sbr.rel (%p509) target = $region40
        $region39: #{tpu_custom_call.1} parent=15 // pred_region
          %s512 = sand.u32 %s37, 1
          %s513 = scalar_lea.sflag [#allocation10], %s512
          %s514 = sand.u32 %s189, 1
          %s515 = smul.addr %s514, 128
          %s516 = scalar_lea.vmem [#allocation9], %s515
          %s518 = ssub.s32 2048, 2048
          %519 = vsyncadd %s513, %s518
          %s520 = smul.addr %s45, 16
          %s521 = smul.addr %s520, 128
          %s522 = scalar_lea.hbm %s5, %s521
          %s523 = sshll.u32 %s516, 4
          %s524 = int_to_ptr.vmem [resolvable:$true] %s523
          %529 = dma.hbm_to_vmem [thread:$0]  %s522, 2048, %s524, %s513, 128, 128, 8
        $region40: #{tpu_custom_call.1} parent=15 // pred_fallthru
          _
        // Predicated region
        $region41: #{tpu_custom_call.1} parent=15 // pred_check
          %p530 = pneg %p225
        $region42: #{tpu_custom_call.1} parent=15 // pred_check_branch
          %532 = sbr.rel (%p530) target = $region44
        $region43: #{tpu_custom_call.1} parent=15 // pred_region
          %p533 = scmp.lt.s32.totalorder %s45, 3
          %s534 = scalar_select %p533, %s45, 3
          %s535 = scalar_lea.vmem %s6, %s534
        $region44: #{tpu_custom_call.1} parent=15 // pred_fallthru
          _
        // Predicated region
        $region45: #{tpu_custom_call.1} parent=15 // pred_check
          %p536 = pneg %p251
        $region46: #{tpu_custom_call.1} parent=15 // pred_check_branch
          %538 = sbr.rel (%p536) target = $region48
        $region47: #{tpu_custom_call.1} parent=15 // pred_region
          %s539 = sand.u32 %s37, 1
          %s540 = scalar_lea.sflag [#allocation10], %s539
          %s541 = sand.u32 %s241, 1
          %s542 = scalar_lea.vmem [#allocation11], %s541
          %s544 = ssub.s32 16, 16
          %545 = vsyncadd %s540, %s544
          %s546 = smul.addr %s45, 16
          %s547 = scalar_lea.hbm %s7, %s546
          %s549 = sshll.u32 %s542, 4
          %s550 = int_to_ptr.vmem [resolvable:$true] %s549
          %552 = dma.hbm_to_vmem [thread:$0]  %s547, 16, %s550, %s540
        $region48: #{tpu_custom_call.1} parent=15 // pred_fallthru
          _
        // Predicated region
        $region49: #{tpu_custom_call.1} parent=15 // pred_check
          %p553 = pneg %p277
        $region50: #{tpu_custom_call.1} parent=15 // pred_check_branch
          %555 = sbr.rel (%p553) target = $region52
        $region51: #{tpu_custom_call.1} parent=15 // pred_region
          %s556 = sand.u32 %s37, 1
          %s557 = scalar_lea.sflag [#allocation13], %s556
          %s558 = sand.u32 %s267, 1
          %s559 = scalar_lea.vmem [#allocation12], %s558
          %s561 = ssub.s32 16, 16
          %562 = vsyncadd %s557, %s561
          %s563 = smul.addr %s45, 16
          %s564 = scalar_lea.hbm %s8, %s563
          %s566 = sshll.u32 %s559, 4
          %s567 = int_to_ptr.vmem [resolvable:$true] %s566
          %569 = dma.hbm_to_vmem [thread:$0]  %s564, 16, %s567, %s557
        $region52: #{tpu_custom_call.1} parent=15 // pred_fallthru
          _
        // Predicated region
        $region53: #{tpu_custom_call.1} parent=15 // pred_check
          %p570 = pneg %p303
        $region54: #{tpu_custom_call.1} parent=15 // pred_check_branch
          %572 = sbr.rel (%p570) target = $region56
        $region55: #{tpu_custom_call.1} parent=15 // pred_region
          %s573 = sand.u32 %s37, 1
          %s574 = scalar_lea.sflag [#allocation13], %s573
          %s575 = sand.u32 %s293, 1
          %s576 = smul.addr %s575, 512
          %s577 = scalar_lea.vmem [#allocation14], %s576
          %s579 = ssub.s32 8192, 8192
          %580 = vsyncadd %s574, %s579
          %s581 = smul.addr %s45, 64
          %s582 = smul.addr %s581, 128
          %s583 = scalar_lea.hbm %s9, %s582
          %s584 = sshll.u32 %s577, 4
          %s585 = int_to_ptr.vmem [resolvable:$true] %s584
          %590 = dma.hbm_to_vmem [thread:$0]  %s583, 8192, %s585, %s574, 512, 512, 32
        $region56: #{tpu_custom_call.1} parent=15 // pred_fallthru
          _
        // Predicated region
        $region57: #{tpu_custom_call.1} parent=15 // pred_check
          %p591 = pneg %p329
        $region58: #{tpu_custom_call.1} parent=15 // pred_check_branch
          %593 = sbr.rel (%p591) target = $region60
        $region59: #{tpu_custom_call.1} parent=15 // pred_region
          %p594 = scmp.lt.s32.totalorder %s45, 3
          %s595 = scalar_select %p594, %s45, 3
          %s596 = smul.addr %s595, 4
          %s597 = scalar_lea.vmem %s10, %s596
        $region60: #{tpu_custom_call.1} parent=15 // pred_fallthru
          _
        // Predicated region
        $region61: #{tpu_custom_call.1} parent=15 // pred_check
          %p598 = pneg %p355
        $region62: #{tpu_custom_call.1} parent=15 // pred_check_branch
          %600 = sbr.rel (%p598) target = $region64
        $region63: #{tpu_custom_call.1} parent=15 // pred_region
          %s601 = sand.u32 %s345, 1
          %s602 = scalar_lea.sflag [#allocation16], %s601
          %s603 = sand.u32 %s345, 1
          %s604 = smul.addr %s603, 512
          %s605 = scalar_lea.vmem [#allocation15], %s604
          %s607 = ssub.s32 8192, 8192
          %608 = vsyncadd %s602, %s607
          %s609 = smul.addr %s45, 64
          %s610 = smul.addr %s609, 128
          %s611 = scalar_lea.hbm %s11, %s610
          %s612 = sshll.u32 %s605, 4
          %s613 = int_to_ptr.vmem [resolvable:$true] %s612
          %618 = dma.hbm_to_vmem [thread:$0]  %s611, 8192, %s613, %s602, 128, 128, 8
        $region64: #{tpu_custom_call.1} parent=15 // pred_fallthru
          _
        // Predicated region
        $region65: #{tpu_custom_call.1} parent=15 // pred_check
          %p619 = pneg %p381
        $region66: #{tpu_custom_call.1} parent=15 // pred_check_branch
          %621 = sbr.rel (%p619) target = $region68
        $region67: #{tpu_custom_call.1} parent=15 // pred_region
          %p622 = scmp.lt.s32.totalorder %s45, 3
          %s623 = scalar_select %p622, %s45, 3
          %s624 = scalar_lea.vmem %s12, %s623
        $region68: #{tpu_custom_call.1} parent=15 // pred_fallthru
          _
      $region16: #{tpu_custom_call.1} parent=5 // pred_fallthru
        _
      %p625 = scmp.le.s32.totalorder 1, %s37
      %p626 = scmp.lt.s32.totalorder %s37, 9
      %p627 = pnand %p625, %p626
      %p628 = pneg %p627
      // Predicated region
      $region69: #{tpu_custom_call.1} parent=5 // pred_check
        _
      $region70: #{tpu_custom_call.1} parent=5 // pred_check_branch
        %630 = sbr.rel (%p627) target = $region72
      $region71: #{tpu_custom_call.1} parent=5 // pred_region
        %s631 = ssub.s32 %s37, 1
        %s632 = sand.u32 %s62, 1
        %s633 = scalar_lea.sflag [#allocation4], %s632
        %s634 = sand.u32 %s62, 1
        %s635 = smul.addr %s634, 16
        %s636 = scalar_lea.vmem [#allocation3], %s635
        // Predicated region
        $region73: #{tpu_custom_call.1} parent=71 // pred_check
          %p637 = pneg %p75
        $region74: #{tpu_custom_call.1} parent=71 // pred_check_branch
          %639 = sbr.rel (%p637) target = $region76
        $region75: #{tpu_custom_call.1} parent=71 // pred_region
          %640 = dma.done %s633, 256
        $region76: #{tpu_custom_call.1} parent=71 // pred_fallthru
          _
        %s641 = sand.u32 %s42, 1
        %s642 = scalar_lea.sflag [#allocation7], %s641
        %s643 = sand.u32 %s88, 1
        %s644 = smul.addr %s643, 16
        %s645 = scalar_lea.vmem [#allocation6], %s644
        // Predicated region
        $region77: #{tpu_custom_call.1} parent=71 // pred_check
          %p646 = pneg %p101
        $region78: #{tpu_custom_call.1} parent=71 // pred_check_branch
          %648 = sbr.rel (%p646) target = $region80
        $region79: #{tpu_custom_call.1} parent=71 // pred_region
          %649 = dma.done %s642, 256
        $region80: #{tpu_custom_call.1} parent=71 // pred_fallthru
          _
        %s650 = sand.u32 %s42, 1
        %s651 = scalar_lea.sflag [#allocation7], %s650
        %s652 = sand.u32 %s166, 1
        %s653 = smul.addr %s652, 384
        %s654 = scalar_lea.vmem [#allocation8], %s653
        // Predicated region
        $region81: #{tpu_custom_call.1} parent=71 // pred_check
          %p655 = pneg %p179
        $region82: #{tpu_custom_call.1} parent=71 // pred_check_branch
          %657 = sbr.rel (%p655) target = $region84
        $region83: #{tpu_custom_call.1} parent=71 // pred_region
          %658 = dma.done %s651, 6144
        $region84: #{tpu_custom_call.1} parent=71 // pred_fallthru
          _
        %s659 = sand.u32 %s42, 1
        %s660 = scalar_lea.sflag [#allocation10], %s659
        %s661 = sand.u32 %s192, 1
        %s662 = smul.addr %s661, 128
        %s663 = scalar_lea.vmem [#allocation9], %s662
        // Predicated region
        $region85: #{tpu_custom_call.1} parent=71 // pred_check
          %p664 = pneg %p205
        $region86: #{tpu_custom_call.1} parent=71 // pred_check_branch
          %666 = sbr.rel (%p664) target = $region88
        $region87: #{tpu_custom_call.1} parent=71 // pred_region
          %667 = dma.done %s660, 2048
        $region88: #{tpu_custom_call.1} parent=71 // pred_fallthru
          _
        %s668 = sand.u32 %s42, 1
        %s669 = scalar_lea.sflag [#allocation10], %s668
        %s670 = sand.u32 %s244, 1
        %s671 = scalar_lea.vmem [#allocation11], %s670
        // Predicated region
        $region89: #{tpu_custom_call.1} parent=71 // pred_check
          %p672 = pneg %p257
        $region90: #{tpu_custom_call.1} parent=71 // pred_check_branch
          %674 = sbr.rel (%p672) target = $region92
        $region91: #{tpu_custom_call.1} parent=71 // pred_region
          %675 = dma.done %s669, 16
        $region92: #{tpu_custom_call.1} parent=71 // pred_fallthru
          _
        %s676 = sand.u32 %s42, 1
        %s677 = scalar_lea.sflag [#allocation13], %s676
        %s678 = sand.u32 %s270, 1
        %s679 = scalar_lea.vmem [#allocation12], %s678
        // Predicated region
        $region93: #{tpu_custom_call.1} parent=71 // pred_check
          %p680 = pneg %p283
        $region94: #{tpu_custom_call.1} parent=71 // pred_check_branch
          %682 = sbr.rel (%p680) target = $region96
        $region95: #{tpu_custom_call.1} parent=71 // pred_region
          %683 = dma.done %s677, 16
        $region96: #{tpu_custom_call.1} parent=71 // pred_fallthru
          _
        %s684 = sand.u32 %s42, 1
        %s685 = scalar_lea.sflag [#allocation13], %s684
        %s686 = sand.u32 %s296, 1
        %s687 = smul.addr %s686, 512
        %s688 = scalar_lea.vmem [#allocation14], %s687
        // Predicated region
        $region97: #{tpu_custom_call.1} parent=71 // pred_check
          %p689 = pneg %p309
        $region98: #{tpu_custom_call.1} parent=71 // pred_check_branch
          %691 = sbr.rel (%p689) target = $region100
        $region99: #{tpu_custom_call.1} parent=71 // pred_region
          %692 = dma.done %s685, 8192
        $region100: #{tpu_custom_call.1} parent=71 // pred_fallthru
          _
        %s693 = sand.u32 %s348, 1
        %s694 = scalar_lea.sflag [#allocation16], %s693
        %s695 = sand.u32 %s348, 1
        %s696 = smul.addr %s695, 512
        %s697 = scalar_lea.vmem [#allocation15], %s696
        // Predicated region
        $region101: #{tpu_custom_call.1} parent=71 // pred_check
          %p698 = pneg %p361
        $region102: #{tpu_custom_call.1} parent=71 // pred_check_branch
          %700 = sbr.rel (%p698) target = $region104
        $region103: #{tpu_custom_call.1} parent=71 // pred_region
          %701 = dma.done %s694, 8192
        $region104: #{tpu_custom_call.1} parent=71 // pred_fallthru
          _
        %s702 = sand.u32 %s62, 1
        %s703 = scalar_lea.sflag [#allocation4], %s702
        %s704 = sand.u32 %s62, 1
        %s705 = smul.addr %s704, 16
        %s706 = scalar_lea.vmem [#allocation3], %s705
        %p707 = pneg %p75
        %p708 = pneg %p72
        %s709 = sand.u32 %s42, 1
        %s710 = scalar_lea.sflag [#allocation7], %s709
        %s711 = sand.u32 %s88, 1
        %s712 = smul.addr %s711, 16
        %s713 = scalar_lea.vmem [#allocation6], %s712
        %p714 = pneg %p101
        %p715 = pneg %p98
        %p716 = scmp.lt.s32.totalorder %s47, 3
        %s717 = scalar_select %p716, %s47, 3
        %s718 = scalar_lea.vmem %s2, %s717
        %p719 = pneg %p127
        %p720 = pneg %p124
        %p721 = scmp.lt.s32.totalorder %s47, 3
        %s722 = scalar_select %p721, %s47, 3
        %s723 = scalar_lea.vmem %s3, %s722
        %p724 = pneg %p153
        %p725 = pneg %p150
        %s726 = sand.u32 %s42, 1
        %s727 = scalar_lea.sflag [#allocation7], %s726
        %s728 = sand.u32 %s166, 1
        %s729 = smul.addr %s728, 384
        %s730 = scalar_lea.vmem [#allocation8], %s729
        %p731 = pneg %p179
        %p732 = pneg %p176
        %s733 = sand.u32 %s42, 1
        %s734 = scalar_lea.sflag [#allocation10], %s733
        %s735 = sand.u32 %s192, 1
        %s736 = smul.addr %s735, 128
        %s737 = scalar_lea.vmem [#allocation9], %s736
        %p738 = pneg %p205
        %p739 = pneg %p202
        %p740 = scmp.lt.s32.totalorder %s47, 3
        %s741 = scalar_select %p740, %s47, 3
        %s742 = scalar_lea.vmem %s6, %s741
        %p743 = pneg %p231
        %p744 = pneg %p228
        %s745 = sand.u32 %s42, 1
        %s746 = scalar_lea.sflag [#allocation10], %s745
        %s747 = sand.u32 %s244, 1
        %s748 = scalar_lea.vmem [#allocation11], %s747
        %p749 = pneg %p257
        %p750 = pneg %p254
        %s751 = sand.u32 %s42, 1
        %s752 = scalar_lea.sflag [#allocation13], %s751
        %s753 = sand.u32 %s270, 1
        %s754 = scalar_lea.vmem [#allocation12], %s753
        %p755 = pneg %p283
        %p756 = pneg %p280
        %s757 = sand.u32 %s42, 1
        %s758 = scalar_lea.sflag [#allocation13], %s757
        %s759 = sand.u32 %s296, 1
        %s760 = smul.addr %s759, 512
        %s761 = scalar_lea.vmem [#allocation14], %s760
        %p762 = pneg %p309
        %p763 = pneg %p306
        %p764 = scmp.lt.s32.totalorder %s47, 3
        %s765 = scalar_select %p764, %s47, 3
        %s766 = smul.addr %s765, 4
        %s767 = scalar_lea.vmem %s10, %s766
        %p768 = pneg %p335
        %p769 = pneg %p332
        %s770 = sand.u32 %s348, 1
        %s771 = scalar_lea.sflag [#allocation16], %s770
        %s772 = sand.u32 %s348, 1
        %s773 = smul.addr %s772, 512
        %s774 = scalar_lea.vmem [#allocation15], %s773
        %p775 = pneg %p361
        %p776 = pneg %p358
        %p777 = scmp.lt.s32.totalorder %s47, 3
        %s778 = scalar_select %p777, %s47, 3
        %s779 = scalar_lea.vmem %s12, %s778
        %p780 = pneg %p387
        %p781 = pneg %p384
        %p782 = pneg %p415
        %p783 = pneg %p412
        %s784 = sand.u32 %s402, 1
        %s785 = scalar_lea.sflag [#allocation5], %s784
        %s786 = sand.u32 %s402, 1
        %s787 = smul.addr %s786, 16
        %s788 = scalar_lea.vmem [#allocation17], %s787
        %p789 = scmp.lt.s32.totalorder %s47, 3
        %s790 = scalar_select %p789, %s47, 3
        %s791 = scalar_lea.vmem %s2, %s790
        %p792 = scmp.lt.s32.totalorder %s47, 3
        %s793 = scalar_select %p792, %s47, 3
        %s794 = scalar_lea.vmem %s3, %s793
        %p795 = scmp.lt.s32.totalorder %s47, 3
        %s796 = scalar_select %p795, %s47, 3
        %s797 = scalar_lea.vmem %s6, %s796
        %p798 = scmp.lt.s32.totalorder %s47, 3
        %s799 = scalar_select %p798, %s47, 3
        %s800 = smul.addr %s799, 4
        %s801 = scalar_lea.vmem %s10, %s800
        %p802 = scmp.lt.s32.totalorder %s47, 3
        %s803 = scalar_select %p802, %s47, 3
        %s804 = scalar_lea.vmem %s12, %s803
        %p805 = scmp.eq.s32.totalorder %s47, 0
        // Predicated region
        $region105: #{tpu_custom_call.1} parent=71 // pred_check
          %p806 = pneg %p805
        $region106: #{tpu_custom_call.1} parent=71 // pred_check_branch
          %808 = sbr.rel (%p806) target = $region108
        $region107: #{tpu_custom_call.1} parent=71 // pred_region
          %v809 = vld [vmem:[%s636] sm:$0xff]
          %v810 = vld [vmem:[%s636 + $0x8] sm:$0xff]
          %811 = vst [vmem:[#allocation2] sm:$0xff] %v809
          %812 = vst [vmem:[#allocation2 + $0x8] sm:$0xff] %v810
        $region108: #{tpu_custom_call.1} parent=71 // pred_fallthru
          _
        %v813 = vld [vmem:[#allocation2] sm:$0xff]
        %v814 = vld [vmem:[#allocation2 + $0x8] sm:$0xff]
        %v815 = vld [vmem:[%s645] sm:$0xff]
        %v816 = vld [vmem:[%s645 + $0x8] sm:$0xff]
        %v817 = vadd.f32 %v813, %v815
        %v818 = vadd.f32 %v814, %v816
        %v819 = vld [vmem:[%s791] sm:$0x1]
        %v820 = vld [vmem:[%s794] sm:$0x1]
        %821 = vadd.xlane.f32.xlu0 %v817
        %v822 = vpop.xlane.xlu0 %821
        %823 = vadd.xlane.f32.xlu0 %v818
        %v824 = vpop.xlane.xlu0 %823
        %v825 = vrcp.pop 128.0
        %v826 = vmul.f32 %v822, %v825
        %v827 = vmul.f32 %v824, %v825
        %v828 = vsub.f32 %v817, %v826
        %v829 = vsub.f32 %v818, %v827
        %v830 = vmul.f32 %v828, %v828
        %v831 = vmul.f32 %v829, %v829
        %832 = vadd.xlane.f32.xlu0 %v830
        %v833 = vpop.xlane.xlu0 %832
        %834 = vadd.xlane.f32.xlu0 %v831
        %v835 = vpop.xlane.xlu0 %834
        %v836 = vmul.f32 %v833, %v825
        %v837 = vmul.f32 %v835, %v825
        %v838 = vadd.f32 %v836, 1e-05
        %v839 = vadd.f32 %v837, 1e-05
        %v840 = vrsqrt.pop %v838
        %v841 = vrsqrt.pop %v839
        %v842 = vmul.f32 %v828, %v840
        %v843 = vmul.f32 %v829, %v841
        %v845 = vlaneseq
        %v846 = vshrl.u32 %v845, 7
        %v847 = vsub.s32 0, %v846
        %v848 = vrot.slane %v819, %v847
        %v850 = vmul.f32 %v842, %v848
        %v851 = vmul.f32 %v843, %v848
        %v853 = vlaneseq
        %v854 = vshrl.u32 %v853, 7
        %v855 = vsub.s32 0, %v854
        %v856 = vrot.slane %v820, %v855
        %v858 = vadd.f32 %v850, %v856
        %v859 = vadd.f32 %v851, %v856
        %v860 = vld [vmem:[%s654] sm:$0xff]
        %v861 = vld [vmem:[%s654 + $0x8] sm:$0xff]
        %v862 = vld [vmem:[%s654 + $0x10] sm:$0xff]
        %v863 = vld [vmem:[%s654 + $0x18] sm:$0xff]
        %v864 = vld [vmem:[%s654 + $0x20] sm:$0xff]
        %v865 = vld [vmem:[%s654 + $0x28] sm:$0xff]
        %v866 = vld [vmem:[%s654 + $0x30] sm:$0xff]
        %v867 = vld [vmem:[%s654 + $0x38] sm:$0xff]
        %v868 = vld [vmem:[%s654 + $0x40] sm:$0xff]
        %v869 = vld [vmem:[%s654 + $0x48] sm:$0xff]
        %v870 = vld [vmem:[%s654 + $0x50] sm:$0xff]
        %v871 = vld [vmem:[%s654 + $0x58] sm:$0xff]
        %v872 = vld [vmem:[%s654 + $0x60] sm:$0xff]
        %v873 = vld [vmem:[%s654 + $0x68] sm:$0xff]
        %v874 = vld [vmem:[%s654 + $0x70] sm:$0xff]
        %v875 = vld [vmem:[%s654 + $0x78] sm:$0xff]
        %v876 = vld [vmem:[%s654 + $0x80] sm:$0xff]
        %v877 = vld [vmem:[%s654 + $0x88] sm:$0xff]
        %v878 = vld [vmem:[%s654 + $0x90] sm:$0xff]
        %v879 = vld [vmem:[%s654 + $0x98] sm:$0xff]
        %v880 = vld [vmem:[%s654 + $0xa0] sm:$0xff]
        %v881 = vld [vmem:[%s654 + $0xa8] sm:$0xff]
        %v882 = vld [vmem:[%s654 + $0xb0] sm:$0xff]
        %v883 = vld [vmem:[%s654 + $0xb8] sm:$0xff]
        %v884 = vld [vmem:[%s654 + $0xc0] sm:$0xff]
        %v885 = vld [vmem:[%s654 + $0xc8] sm:$0xff]
        %v886 = vld [vmem:[%s654 + $0xd0] sm:$0xff]
        %v887 = vld [vmem:[%s654 + $0xd8] sm:$0xff]
        %v888 = vld [vmem:[%s654 + $0xe0] sm:$0xff]
        %v889 = vld [vmem:[%s654 + $0xe8] sm:$0xff]
        %v890 = vld [vmem:[%s654 + $0xf0] sm:$0xff]
        %v891 = vld [vmem:[%s654 + $0xf8] sm:$0xff]
        %v892 = vld [vmem:[%s654 + $0x100] sm:$0xff]
        %v893 = vld [vmem:[%s654 + $0x108] sm:$0xff]
        %v894 = vld [vmem:[%s654 + $0x110] sm:$0xff]
        %v895 = vld [vmem:[%s654 + $0x118] sm:$0xff]
        %v896 = vld [vmem:[%s654 + $0x120] sm:$0xff]
        %v897 = vld [vmem:[%s654 + $0x128] sm:$0xff]
        %v898 = vld [vmem:[%s654 + $0x130] sm:$0xff]
        %v899 = vld [vmem:[%s654 + $0x138] sm:$0xff]
        %v900 = vld [vmem:[%s654 + $0x140] sm:$0xff]
        %v901 = vld [vmem:[%s654 + $0x148] sm:$0xff]
        %v902 = vld [vmem:[%s654 + $0x150] sm:$0xff]
        %v903 = vld [vmem:[%s654 + $0x158] sm:$0xff]
        %v904 = vld [vmem:[%s654 + $0x160] sm:$0xff]
        %v905 = vld [vmem:[%s654 + $0x168] sm:$0xff]
        %v906 = vld [vmem:[%s654 + $0x170] sm:$0xff]
        %v907 = vld [vmem:[%s654 + $0x178] sm:$0xff]
        %908 = vmatprep.subr.mxu0 %v861
        %909 = vmatpush1.msra.mxu0 %v860
        %910 = vmatprep.subr.mxu0 %v864
        %911 = vmatpush1.msra.mxu0 %v863
        %912 = vmatprep.subr.mxu0 %v867
        %913 = vmatpush1.msra.mxu0 %v866
        %914 = vmatprep.subr.mxu0 %v870
        %915 = vmatpush1.msra.mxu0 %v869
        %916 = vmatprep.subr.mxu0 %v873
        %917 = vmatpush1.msra.mxu0 %v872
        %918 = vmatprep.subr.mxu0 %v876
        %919 = vmatpush1.msra.mxu0 %v875
        %920 = vmatprep.subr.mxu0 %v879
        %921 = vmatpush1.msra.mxu0 %v878
        %922 = vmatprep.subr.mxu0 %v882
        %923 = vmatpush1.msra.mxu0 %v881
        %924 = vmatprep.subr.mxu0 %v885
        %925 = vmatpush1.msra.mxu0 %v884
        %926 = vmatprep.subr.mxu0 %v888
        %927 = vmatpush1.msra.mxu0 %v887
        %928 = vmatprep.subr.mxu0 %v891
        %929 = vmatpush1.msra.mxu0 %v890
        %930 = vmatprep.subr.mxu0 %v894
        %931 = vmatpush1.msra.mxu0 %v893
        %932 = vmatprep.subr.mxu0 %v897
        %933 = vmatpush1.msra.mxu0 %v896
        %934 = vmatprep.subr.mxu0 %v900
        %935 = vmatpush1.msra.mxu0 %v899
        %936 = vmatprep.subr.mxu0 %v903
        %937 = vmatpush1.msra.mxu0 %v902
        %938 = vmatprep.subr.mxu0 %v906
        %939 = vmatpush1.msra.mxu0 %v905
        %940 = vmatprep.subr.mxu0 0.0
        %941 = vmatpush1.msra.mxu0 0.0
        %942 = vmatprep.subr.mxu0 0.0
        %943 = vmatpush1.msra.mxu0 0.0
        %944 = vmatprep.subr.mxu0 0.0
        %945 = vmatpush1.msra.mxu0 0.0
        %946 = vmatprep.subr.mxu0 0.0
        %947 = vmatpush1.msra.mxu0 0.0
        %948 = vmatprep.subr.mxu0 0.0
        %949 = vmatpush1.msra.mxu0 0.0
        %950 = vmatprep.subr.mxu0 0.0
        %951 = vmatpush1.msra.mxu0 0.0
        %952 = vmatprep.subr.mxu0 0.0
        %953 = vmatpush1.msra.mxu0 0.0
        %954 = vmatprep.subr.mxu0 0.0
        %955 = vmatpush1.msra.mxu0 0.0
        %956 = vmatprep.subr.mxu0 0.0
        %957 = vmatpush1.msra.mxu0 0.0
        %958 = vmatprep.subr.mxu0 0.0
        %959 = vmatpush1.msra.mxu0 0.0
        %960 = vmatprep.subr.mxu0 0.0
        %961 = vmatpush1.msra.mxu0 0.0
        %962 = vmatprep.subr.mxu0 0.0
        %963 = vmatpush1.msra.mxu0 0.0
        %964 = vmatprep.subr.mxu0 0.0
        %965 = vmatpush1.msra.mxu0 0.0
        %966 = vmatprep.subr.mxu0 0.0
        %967 = vmatpush1.msra.mxu0 0.0
        %968 = vmatprep.subr.mxu0 0.0
        %969 = vmatpush1.msra.mxu0 0.0
        %970 = vmatprep.subr.mxu0 0.0
        %971 = vmatpush1.msra.mxu0 0.0
        %972 = vmatprep.mubr.f32.mxu0 0.0
        %973 = vmatmul.mubr.f32.gmra.mrb[0].mxu0 %v858
        %v974 = vpop.f32.mrb[0].mxu0
        %v975 = vadd.f32 0.0, %v974
        %v976 = vpop.f32.mrb[0].mxu0
        %v977 = vadd.f32 0.0, %v976
        %978 = vmatprep.mubr.f32.mxu0 0.0
        %979 = vmatmul.mubr.f32.gmra.mrb[0].mxu0 %v859
        %v980 = vpop.f32.mrb[0].mxu0
        %v981 = vadd.f32 0.0, %v980
        %v982 = vpop.f32.mrb[0].mxu0
        %v983 = vadd.f32 0.0, %v982
        %984 = vdwg.mxu0
        %985 = vmatprep.subr.mxu0 0.0
        %986 = vmatpush1.msra.mxu0 %v862
        %987 = vmatprep.subr.mxu0 0.0
        %988 = vmatpush1.msra.mxu0 %v865
        %989 = vmatprep.subr.mxu0 0.0
        %990 = vmatpush1.msra.mxu0 %v868
        %991 = vmatprep.subr.mxu0 0.0
        %992 = vmatpush1.msra.mxu0 %v871
        %993 = vmatprep.subr.mxu0 0.0
        %994 = vmatpush1.msra.mxu0 %v874
        %995 = vmatprep.subr.mxu0 0.0
        %996 = vmatpush1.msra.mxu0 %v877
        %997 = vmatprep.subr.mxu0 0.0
        %998 = vmatpush1.msra.mxu0 %v880
        %999 = vmatprep.subr.mxu0 0.0
        %1000 = vmatpush1.msra.mxu0 %v883
        %1001 = vmatprep.subr.mxu0 0.0
        %1002 = vmatpush1.msra.mxu0 %v886
        %1003 = vmatprep.subr.mxu0 0.0
        %1004 = vmatpush1.msra.mxu0 %v889
        %1005 = vmatprep.subr.mxu0 0.0
        %1006 = vmatpush1.msra.mxu0 %v892
        %1007 = vmatprep.subr.mxu0 0.0
        %1008 = vmatpush1.msra.mxu0 %v895
        %1009 = vmatprep.subr.mxu0 0.0
        %1010 = vmatpush1.msra.mxu0 %v898
        %1011 = vmatprep.subr.mxu0 0.0
        %1012 = vmatpush1.msra.mxu0 %v901
        %1013 = vmatprep.subr.mxu0 0.0
        %1014 = vmatpush1.msra.mxu0 %v904
        %1015 = vmatprep.subr.mxu0 0.0
        %1016 = vmatpush1.msra.mxu0 %v907
        %1017 = vmatprep.subr.mxu0 0.0
        %1018 = vmatpush1.msra.mxu0 0.0
        %1019 = vmatprep.subr.mxu0 0.0
        %1020 = vmatpush1.msra.mxu0 0.0
        %1021 = vmatprep.subr.mxu0 0.0
        %1022 = vmatpush1.msra.mxu0 0.0
        %1023 = vmatprep.subr.mxu0 0.0
        %1024 = vmatpush1.msra.mxu0 0.0
        %1025 = vmatprep.subr.mxu0 0.0
        %1026 = vmatpush1.msra.mxu0 0.0
        %1027 = vmatprep.subr.mxu0 0.0
        %1028 = vmatpush1.msra.mxu0 0.0
        %1029 = vmatprep.subr.mxu0 0.0
        %1030 = vmatpush1.msra.mxu0 0.0
        %1031 = vmatprep.subr.mxu0 0.0
        %1032 = vmatpush1.msra.mxu0 0.0
        %1033 = vmatprep.subr.mxu0 0.0
        %1034 = vmatpush1.msra.mxu0 0.0
        %1035 = vmatprep.subr.mxu0 0.0
        %1036 = vmatpush1.msra.mxu0 0.0
        %1037 = vmatprep.subr.mxu0 0.0
        %1038 = vmatpush1.msra.mxu0 0.0
        %1039 = vmatprep.subr.mxu0 0.0
        %1040 = vmatpush1.msra.mxu0 0.0
        %1041 = vmatprep.subr.mxu0 0.0
        %1042 = vmatpush1.msra.mxu0 0.0
        %1043 = vmatprep.subr.mxu0 0.0
        %1044 = vmatpush1.msra.mxu0 0.0
        %1045 = vmatprep.subr.mxu0 0.0
        %1046 = vmatpush1.msra.mxu0 0.0
        %1047 = vmatprep.subr.mxu0 0.0
        %1048 = vmatpush1.msra.mxu0 0.0
        %1049 = vmatprep.mubr.f32.mxu0 0.0
        %1050 = vmatmul.mubr.f32.gmra.mrb[0].mxu0 %v858
        %v1051 = vpop.f32.mrb[0].mxu0
        %v1052 = vadd.f32 0.0, %v1051
        %v1053 = vpop.f32.mrb[0].mxu0
        %1054 = vmatprep.mubr.f32.mxu0 0.0
        %1055 = vmatmul.mubr.f32.gmra.mrb[0].mxu0 %v859
        %v1056 = vpop.f32.mrb[0].mxu0
        %v1057 = vadd.f32 0.0, %v1056
        %v1058 = vpop.f32.mrb[0].mxu0
        %1059 = vdwg.mxu0
        %vm1060 = vcmask 130048
        %v1062 = vsel %vm1060, %v975, 0
        %v1065 = vsel %vm1060, %v981, 0
        %v1068 = vsel %vm1060, %v977, 0
        %v1071 = vsel %vm1060, %v983, 0
        %1073 = vmatprep.subr.mxu0 0.0
        %1074 = vmatpush1.xpose.msra.mxu0 %v1068
        %1075 = vmatprep.subr.mxu0 0.0
        %1076 = vmatpush1.xpose.msra.mxu0 %v1071
        %1077 = vmatprep.subr.mxu0 0.0
        %1078 = vmatpush1.xpose.msra.mxu0 0.0
        %1079 = vmatprep.subr.mxu0 0.0
        %1080 = vmatpush1.xpose.msra.mxu0 0.0
        %1081 = vmatprep.subr.mxu0 0.0
        %1082 = vmatpush1.xpose.msra.mxu0 0.0
        %1083 = vmatprep.subr.mxu0 0.0
        %1084 = vmatpush1.xpose.msra.mxu0 0.0
        %1085 = vmatprep.subr.mxu0 0.0
        %1086 = vmatpush1.xpose.msra.mxu0 0.0
        %1087 = vmatprep.subr.mxu0 0.0
        %1088 = vmatpush1.xpose.msra.mxu0 0.0
        %1089 = vmatprep.subr.mxu0 0.0
        %1090 = vmatpush1.xpose.msra.mxu0 0.0
        %1091 = vmatprep.subr.mxu0 0.0
        %1092 = vmatpush1.xpose.msra.mxu0 0.0
        %1093 = vmatprep.subr.mxu0 0.0
        %1094 = vmatpush1.xpose.msra.mxu0 0.0
        %1095 = vmatprep.subr.mxu0 0.0
        %1096 = vmatpush1.xpose.msra.mxu0 0.0
        %1097 = vmatprep.subr.mxu0 0.0
        %1098 = vmatpush1.xpose.msra.mxu0 0.0
        %1099 = vmatprep.subr.mxu0 0.0
        %1100 = vmatpush1.xpose.msra.mxu0 0.0
        %1101 = vmatprep.subr.mxu0 0.0
        %1102 = vmatpush1.xpose.msra.mxu0 0.0
        %1103 = vmatprep.subr.mxu0 0.0
        %1104 = vmatpush1.xpose.msra.mxu0 0.0
        %1105 = vmatprep.subr.mxu0 0.0
        %1106 = vmatpush1.xpose.msra.mxu0 0.0
        %1107 = vmatprep.subr.mxu0 0.0
        %1108 = vmatpush1.xpose.msra.mxu0 0.0
        %1109 = vmatprep.subr.mxu0 0.0
        %1110 = vmatpush1.xpose.msra.mxu0 0.0
        %1111 = vmatprep.subr.mxu0 0.0
        %1112 = vmatpush1.xpose.msra.mxu0 0.0
        %1113 = vmatprep.subr.mxu0 0.0
        %1114 = vmatpush1.xpose.msra.mxu0 0.0
        %1115 = vmatprep.subr.mxu0 0.0
        %1116 = vmatpush1.xpose.msra.mxu0 0.0
        %1117 = vmatprep.subr.mxu0 0.0
        %1118 = vmatpush1.xpose.msra.mxu0 0.0
        %1119 = vmatprep.subr.mxu0 0.0
        %1120 = vmatpush1.xpose.msra.mxu0 0.0
        %1121 = vmatprep.subr.mxu0 0.0
        %1122 = vmatpush1.xpose.msra.mxu0 0.0
        %1123 = vmatprep.subr.mxu0 0.0
        %1124 = vmatpush1.xpose.msra.mxu0 0.0
        %1125 = vmatprep.subr.mxu0 0.0
        %1126 = vmatpush1.xpose.msra.mxu0 0.0
        %1127 = vmatprep.subr.mxu0 0.0
        %1128 = vmatpush1.xpose.msra.mxu0 0.0
        %1129 = vmatprep.subr.mxu0 0.0
        %1130 = vmatpush1.xpose.msra.mxu0 0.0
        %1131 = vmatprep.subr.mxu0 0.0
        %1132 = vmatpush1.xpose.msra.mxu0 0.0
        %1133 = vmatprep.subr.mxu0 0.0
        %1134 = vmatpush1.xpose.msra.mxu0 0.0
        %1135 = vmatprep.subr.mxu0 0.0
        %1136 = vmatpush1.xpose.msra.mxu0 0.0
        %1137 = vmatprep.mubr.f32.mxu0 0.0
        %1138 = vmatmul.mubr.f32.gmra.mrb[0].mxu0 %v1062
        %v1139 = vpop.f32.mrb[0].mxu0
        %v1140 = vadd.f32 0.0, %v1139
        %v1141 = vpop.f32.mrb[0].mxu0
        %1142 = vmatprep.mubr.f32.mxu0 0.0
        %1143 = vmatmul.mubr.f32.gmra.mrb[0].mxu0 %v1065
        %v1144 = vpop.f32.mrb[0].mxu0
        %v1145 = vadd.f32 0.0, %v1144
        %v1146 = vpop.f32.mrb[0].mxu0
        %1147 = vdwg.mxu0
        %v1148 = vmul.f32 %v1140, 0.25
        %v1149 = vmul.f32 %v1145, 0.25
        %v1150 = vsel %vm1060, %v1148, -inf
        %1151 = vmax.xlane.f32.xlu0 %v1150
        %v1152 = vpop.xlane.xlu0 %1151
        %v1153 = vsel %vm1060, %v1149, -inf
        %1154 = vmax.xlane.f32.xlu0 %v1153
        %v1155 = vpop.xlane.xlu0 %1154
        %v1156 = vsub.f32 %v1148, %v1152
        %v1157 = vsub.f32 %v1149, %v1155
        %v1158 = vmul.f32 %v1156, 1.442695
        %v1159 = vpow.pop %v1158
        %v1160 = vmul.f32 %v1157, 1.442695
        %v1161 = vpow.pop %v1160
        %v1162 = vsel %vm1060, %v1159, 0.0
        %1163 = vadd.xlane.f32.xlu0 %v1162
        %v1164 = vpop.xlane.xlu0 %1163
        %v1165 = vsel %vm1060, %v1161, 0.0
        %1166 = vadd.xlane.f32.xlu0 %v1165
        %v1167 = vpop.xlane.xlu0 %1166
        %v1168 = vrcp.pop %v1164
        %v1169 = vmul.f32 %v1159, %v1168
        %v1170 = vrcp.pop %v1167
        %v1171 = vmul.f32 %v1161, %v1170
        %v1173 = vsel %vm1060, %v1169, 0
        %v1176 = vsel %vm1060, %v1171, 0
        %1178 = vmatprep.subr.mxu0 0.0
        %1179 = vmatpush1.msra.mxu0 %v1052
        %1180 = vmatprep.subr.mxu0 0.0
        %1181 = vmatpush1.msra.mxu0 %v1057
        %1182 = vmatprep.subr.mxu0 0.0
        %1183 = vmatpush1.msra.mxu0 0.0
        %1184 = vmatprep.subr.mxu0 0.0
        %1185 = vmatpush1.msra.mxu0 0.0
        %1186 = vmatprep.subr.mxu0 0.0
        %1187 = vmatpush1.msra.mxu0 0.0
        %1188 = vmatprep.subr.mxu0 0.0
        %1189 = vmatpush1.msra.mxu0 0.0
        %1190 = vmatprep.subr.mxu0 0.0
        %1191 = vmatpush1.msra.mxu0 0.0
        %1192 = vmatprep.subr.mxu0 0.0
        %1193 = vmatpush1.msra.mxu0 0.0
        %1194 = vmatprep.subr.mxu0 0.0
        %1195 = vmatpush1.msra.mxu0 0.0
        %1196 = vmatprep.subr.mxu0 0.0
        %1197 = vmatpush1.msra.mxu0 0.0
        %1198 = vmatprep.subr.mxu0 0.0
        %1199 = vmatpush1.msra.mxu0 0.0
        %1200 = vmatprep.subr.mxu0 0.0
        %1201 = vmatpush1.msra.mxu0 0.0
        %1202 = vmatprep.subr.mxu0 0.0
        %1203 = vmatpush1.msra.mxu0 0.0
        %1204 = vmatprep.subr.mxu0 0.0
        %1205 = vmatpush1.msra.mxu0 0.0
        %1206 = vmatprep.subr.mxu0 0.0
        %1207 = vmatpush1.msra.mxu0 0.0
        %1208 = vmatprep.subr.mxu0 0.0
        %1209 = vmatpush1.msra.mxu0 0.0
        %1210 = vmatprep.subr.mxu0 0.0
        %1211 = vmatpush1.msra.mxu0 0.0
        %1212 = vmatprep.subr.mxu0 0.0
        %1213 = vmatpush1.msra.mxu0 0.0
        %1214 = vmatprep.subr.mxu0 0.0
        %1215 = vmatpush1.msra.mxu0 0.0
        %1216 = vmatprep.subr.mxu0 0.0
        %1217 = vmatpush1.msra.mxu0 0.0
        %1218 = vmatprep.subr.mxu0 0.0
        %1219 = vmatpush1.msra.mxu0 0.0
        %1220 = vmatprep.subr.mxu0 0.0
        %1221 = vmatpush1.msra.mxu0 0.0
        %1222 = vmatprep.subr.mxu0 0.0
        %1223 = vmatpush1.msra.mxu0 0.0
        %1224 = vmatprep.subr.mxu0 0.0
        %1225 = vmatpush1.msra.mxu0 0.0
        %1226 = vmatprep.subr.mxu0 0.0
        %1227 = vmatpush1.msra.mxu0 0.0
        %1228 = vmatprep.subr.mxu0 0.0
        %1229 = vmatpush1.msra.mxu0 0.0
        %1230 = vmatprep.subr.mxu0 0.0
        %1231 = vmatpush1.msra.mxu0 0.0
        %1232 = vmatprep.subr.mxu0 0.0
        %1233 = vmatpush1.msra.mxu0 0.0
        %1234 = vmatprep.subr.mxu0 0.0
        %1235 = vmatpush1.msra.mxu0 0.0
        %1236 = vmatprep.subr.mxu0 0.0
        %1237 = vmatpush1.msra.mxu0 0.0
        %1238 = vmatprep.subr.mxu0 0.0
        %1239 = vmatpush1.msra.mxu0 0.0
        %1240 = vmatprep.subr.mxu0 0.0
        %1241 = vmatpush1.msra.mxu0 0.0
        %1242 = vmatprep.mubr.f32.mxu0 0.0
        %1243 = vmatmul.mubr.f32.gmra.mrb[0].mxu0 %v1173
        %v1244 = vpop.f32.mrb[0].mxu0
        %v1245 = vadd.f32 0.0, %v1244
        %v1246 = vpop.f32.mrb[0].mxu0
        %1247 = vmatprep.mubr.f32.mxu0 0.0
        %1248 = vmatmul.mubr.f32.gmra.mrb[0].mxu0 %v1176
        %v1249 = vpop.f32.mrb[0].mxu0
        %v1250 = vadd.f32 0.0, %v1249
        %v1251 = vpop.f32.mrb[0].mxu0
        %1252 = vdwg.mxu0
        %1253 = vrot.lane.b32.xlu0 %v975, 112
        %v1254 = vpop.permute.xlu0 %1253
        %1255 = vrot.lane.b32.xlu0 %v981, 112
        %v1256 = vpop.permute.xlu0 %1255
        %1257 = vrot.lane.b32.xlu0 %v977, 112
        %v1258 = vpop.permute.xlu0 %1257
        %1259 = vrot.lane.b32.xlu0 %v983, 112
        %v1260 = vpop.permute.xlu0 %1259
        %v1261 = vsel %vm1060, %v1254, 0
        %v1263 = vsel %vm1060, %v1256, 0
        %v1265 = vsel %vm1060, %v1258, 0
        %v1267 = vsel %vm1060, %v1260, 0
        %1269 = vmatprep.subr.mxu0 0.0
        %1270 = vmatpush1.xpose.msra.mxu0 %v1265
        %1271 = vmatprep.subr.mxu0 0.0
        %1272 = vmatpush1.xpose.msra.mxu0 %v1267
        %1273 = vmatprep.subr.mxu0 0.0
        %1274 = vmatpush1.xpose.msra.mxu0 0.0
        %1275 = vmatprep.subr.mxu0 0.0
        %1276 = vmatpush1.xpose.msra.mxu0 0.0
        %1277 = vmatprep.subr.mxu0 0.0
        %1278 = vmatpush1.xpose.msra.mxu0 0.0
        %1279 = vmatprep.subr.mxu0 0.0
        %1280 = vmatpush1.xpose.msra.mxu0 0.0
        %1281 = vmatprep.subr.mxu0 0.0
        %1282 = vmatpush1.xpose.msra.mxu0 0.0
        %1283 = vmatprep.subr.mxu0 0.0
        %1284 = vmatpush1.xpose.msra.mxu0 0.0
        %1285 = vmatprep.subr.mxu0 0.0
        %1286 = vmatpush1.xpose.msra.mxu0 0.0
        %1287 = vmatprep.subr.mxu0 0.0
        %1288 = vmatpush1.xpose.msra.mxu0 0.0
        %1289 = vmatprep.subr.mxu0 0.0
        %1290 = vmatpush1.xpose.msra.mxu0 0.0
        %1291 = vmatprep.subr.mxu0 0.0
        %1292 = vmatpush1.xpose.msra.mxu0 0.0
        %1293 = vmatprep.subr.mxu0 0.0
        %1294 = vmatpush1.xpose.msra.mxu0 0.0
        %1295 = vmatprep.subr.mxu0 0.0
        %1296 = vmatpush1.xpose.msra.mxu0 0.0
        %1297 = vmatprep.subr.mxu0 0.0
        %1298 = vmatpush1.xpose.msra.mxu0 0.0
        %1299 = vmatprep.subr.mxu0 0.0
        %1300 = vmatpush1.xpose.msra.mxu0 0.0
        %1301 = vmatprep.subr.mxu0 0.0
        %1302 = vmatpush1.xpose.msra.mxu0 0.0
        %1303 = vmatprep.subr.mxu0 0.0
        %1304 = vmatpush1.xpose.msra.mxu0 0.0
        %1305 = vmatprep.subr.mxu0 0.0
        %1306 = vmatpush1.xpose.msra.mxu0 0.0
        %1307 = vmatprep.subr.mxu0 0.0
        %1308 = vmatpush1.xpose.msra.mxu0 0.0
        %1309 = vmatprep.subr.mxu0 0.0
        %1310 = vmatpush1.xpose.msra.mxu0 0.0
        %1311 = vmatprep.subr.mxu0 0.0
        %1312 = vmatpush1.xpose.msra.mxu0 0.0
        %1313 = vmatprep.subr.mxu0 0.0
        %1314 = vmatpush1.xpose.msra.mxu0 0.0
        %1315 = vmatprep.subr.mxu0 0.0
        %1316 = vmatpush1.xpose.msra.mxu0 0.0
        %1317 = vmatprep.subr.mxu0 0.0
        %1318 = vmatpush1.xpose.msra.mxu0 0.0
        %1319 = vmatprep.subr.mxu0 0.0
        %1320 = vmatpush1.xpose.msra.mxu0 0.0
        %1321 = vmatprep.subr.mxu0 0.0
        %1322 = vmatpush1.xpose.msra.mxu0 0.0
        %1323 = vmatprep.subr.mxu0 0.0
        %1324 = vmatpush1.xpose.msra.mxu0 0.0
        %1325 = vmatprep.subr.mxu0 0.0
        %1326 = vmatpush1.xpose.msra.mxu0 0.0
        %1327 = vmatprep.subr.mxu0 0.0
        %1328 = vmatpush1.xpose.msra.mxu0 0.0
        %1329 = vmatprep.subr.mxu0 0.0
        %1330 = vmatpush1.xpose.msra.mxu0 0.0
        %1331 = vmatprep.subr.mxu0 0.0
        %1332 = vmatpush1.xpose.msra.mxu0 0.0
        %1333 = vmatprep.mubr.f32.mxu0 0.0
        %1334 = vmatmul.mubr.f32.gmra.mrb[0].mxu0 %v1261
        %v1335 = vpop.f32.mrb[0].mxu0
        %v1336 = vadd.f32 0.0, %v1335
        %v1337 = vpop.f32.mrb[0].mxu0
        %1338 = vmatprep.mubr.f32.mxu0 0.0
        %1339 = vmatmul.mubr.f32.gmra.mrb[0].mxu0 %v1263
        %v1340 = vpop.f32.mrb[0].mxu0
        %v1341 = vadd.f32 0.0, %v1340
        %v1342 = vpop.f32.mrb[0].mxu0
        %1343 = vdwg.mxu0
        %v1344 = vmul.f32 %v1336, 0.25
        %v1345 = vmul.f32 %v1341, 0.25
        %v1346 = vsel %vm1060, %v1344, -inf
        %1347 = vmax.xlane.f32.xlu0 %v1346
        %v1348 = vpop.xlane.xlu0 %1347
        %v1349 = vsel %vm1060, %v1345, -inf
        %1350 = vmax.xlane.f32.xlu0 %v1349
        %v1351 = vpop.xlane.xlu0 %1350
        %v1352 = vsub.f32 %v1344, %v1348
        %v1353 = vsub.f32 %v1345, %v1351
        %v1354 = vmul.f32 %v1352, 1.442695
        %v1355 = vpow.pop %v1354
        %v1356 = vmul.f32 %v1353, 1.442695
        %v1357 = vpow.pop %v1356
        %v1358 = vsel %vm1060, %v1355, 0.0
        %1359 = vadd.xlane.f32.xlu0 %v1358
        %v1360 = vpop.xlane.xlu0 %1359
        %v1361 = vsel %vm1060, %v1357, 0.0
        %1362 = vadd.xlane.f32.xlu0 %v1361
        %v1363 = vpop.xlane.xlu0 %1362
        %v1364 = vrcp.pop %v1360
        %v1365 = vmul.f32 %v1355, %v1364
        %v1366 = vrcp.pop %v1363
        %v1367 = vmul.f32 %v1357, %v1366
        %1370 = vrot.lane.b32.xlu0 %v1052, 112
        %v1371 = vpop.permute.xlu0 %1370
        %1372 = vrot.lane.b32.xlu0 %v1057, 112
        %v1373 = vpop.permute.xlu0 %1372
        %v1377 = vsel %vm1060, %v1365, 0
        %v1380 = vsel %vm1060, %v1367, 0
        %1382 = vmatprep.subr.mxu0 0.0
        %1383 = vmatpush1.msra.mxu0 %v1371
        %1384 = vmatprep.subr.mxu0 0.0
        %1385 = vmatpush1.msra.mxu0 %v1373
        %1386 = vmatprep.subr.mxu0 0.0
        %1387 = vmatpush1.msra.mxu0 0.0
        %1388 = vmatprep.subr.mxu0 0.0
        %1389 = vmatpush1.msra.mxu0 0.0
        %1390 = vmatprep.subr.mxu0 0.0
        %1391 = vmatpush1.msra.mxu0 0.0
        %1392 = vmatprep.subr.mxu0 0.0
        %1393 = vmatpush1.msra.mxu0 0.0
        %1394 = vmatprep.subr.mxu0 0.0
        %1395 = vmatpush1.msra.mxu0 0.0
        %1396 = vmatprep.subr.mxu0 0.0
        %1397 = vmatpush1.msra.mxu0 0.0
        %1398 = vmatprep.subr.mxu0 0.0
        %1399 = vmatpush1.msra.mxu0 0.0
        %1400 = vmatprep.subr.mxu0 0.0
        %1401 = vmatpush1.msra.mxu0 0.0
        %1402 = vmatprep.subr.mxu0 0.0
        %1403 = vmatpush1.msra.mxu0 0.0
        %1404 = vmatprep.subr.mxu0 0.0
        %1405 = vmatpush1.msra.mxu0 0.0
        %1406 = vmatprep.subr.mxu0 0.0
        %1407 = vmatpush1.msra.mxu0 0.0
        %1408 = vmatprep.subr.mxu0 0.0
        %1409 = vmatpush1.msra.mxu0 0.0
        %1410 = vmatprep.subr.mxu0 0.0
        %1411 = vmatpush1.msra.mxu0 0.0
        %1412 = vmatprep.subr.mxu0 0.0
        %1413 = vmatpush1.msra.mxu0 0.0
        %1414 = vmatprep.subr.mxu0 0.0
        %1415 = vmatpush1.msra.mxu0 0.0
        %1416 = vmatprep.subr.mxu0 0.0
        %1417 = vmatpush1.msra.mxu0 0.0
        %1418 = vmatprep.subr.mxu0 0.0
        %1419 = vmatpush1.msra.mxu0 0.0
        %1420 = vmatprep.subr.mxu0 0.0
        %1421 = vmatpush1.msra.mxu0 0.0
        %1422 = vmatprep.subr.mxu0 0.0
        %1423 = vmatpush1.msra.mxu0 0.0
        %1424 = vmatprep.subr.mxu0 0.0
        %1425 = vmatpush1.msra.mxu0 0.0
        %1426 = vmatprep.subr.mxu0 0.0
        %1427 = vmatpush1.msra.mxu0 0.0
        %1428 = vmatprep.subr.mxu0 0.0
        %1429 = vmatpush1.msra.mxu0 0.0
        %1430 = vmatprep.subr.mxu0 0.0
        %1431 = vmatpush1.msra.mxu0 0.0
        %1432 = vmatprep.subr.mxu0 0.0
        %1433 = vmatpush1.msra.mxu0 0.0
        %1434 = vmatprep.subr.mxu0 0.0
        %1435 = vmatpush1.msra.mxu0 0.0
        %1436 = vmatprep.subr.mxu0 0.0
        %1437 = vmatpush1.msra.mxu0 0.0
        %1438 = vmatprep.subr.mxu0 0.0
        %1439 = vmatpush1.msra.mxu0 0.0
        %1440 = vmatprep.subr.mxu0 0.0
        %1441 = vmatpush1.msra.mxu0 0.0
        %1442 = vmatprep.subr.mxu0 0.0
        %1443 = vmatpush1.msra.mxu0 0.0
        %1444 = vmatprep.subr.mxu0 0.0
        %1445 = vmatpush1.msra.mxu0 0.0
        %1446 = vmatprep.mubr.f32.mxu0 0.0
        %1447 = vmatmul.mubr.f32.gmra.mrb[0].mxu0 %v1377
        %v1448 = vpop.f32.mrb[0].mxu0
        %v1449 = vadd.f32 0.0, %v1448
        %v1450 = vpop.f32.mrb[0].mxu0
        %1451 = vmatprep.mubr.f32.mxu0 0.0
        %1452 = vmatmul.mubr.f32.gmra.mrb[0].mxu0 %v1380
        %v1453 = vpop.f32.mrb[0].mxu0
        %v1454 = vadd.f32 0.0, %v1453
        %v1455 = vpop.f32.mrb[0].mxu0
        %1456 = vdwg.mxu0
        %1457 = vrot.lane.b32.xlu0 %v975, 96
        %v1458 = vpop.permute.xlu0 %1457
        %1459 = vrot.lane.b32.xlu0 %v981, 96
        %v1460 = vpop.permute.xlu0 %1459
        %1461 = vrot.lane.b32.xlu0 %v977, 96
        %v1462 = vpop.permute.xlu0 %1461
        %1463 = vrot.lane.b32.xlu0 %v983, 96
        %v1464 = vpop.permute.xlu0 %1463
        %v1465 = vsel %vm1060, %v1458, 0
        %v1467 = vsel %vm1060, %v1460, 0
        %v1469 = vsel %vm1060, %v1462, 0
        %v1471 = vsel %vm1060, %v1464, 0
        %1473 = vmatprep.subr.mxu0 0.0
        %1474 = vmatpush1.xpose.msra.mxu0 %v1469
        %1475 = vmatprep.subr.mxu0 0.0
        %1476 = vmatpush1.xpose.msra.mxu0 %v1471
        %1477 = vmatprep.subr.mxu0 0.0
        %1478 = vmatpush1.xpose.msra.mxu0 0.0
        %1479 = vmatprep.subr.mxu0 0.0
        %1480 = vmatpush1.xpose.msra.mxu0 0.0
        %1481 = vmatprep.subr.mxu0 0.0
        %1482 = vmatpush1.xpose.msra.mxu0 0.0
        %1483 = vmatprep.subr.mxu0 0.0
        %1484 = vmatpush1.xpose.msra.mxu0 0.0
        %1485 = vmatprep.subr.mxu0 0.0
        %1486 = vmatpush1.xpose.msra.mxu0 0.0
        %1487 = vmatprep.subr.mxu0 0.0
        %1488 = vmatpush1.xpose.msra.mxu0 0.0
        %1489 = vmatprep.subr.mxu0 0.0
        %1490 = vmatpush1.xpose.msra.mxu0 0.0
        %1491 = vmatprep.subr.mxu0 0.0
        %1492 = vmatpush1.xpose.msra.mxu0 0.0
        %1493 = vmatprep.subr.mxu0 0.0
        %1494 = vmatpush1.xpose.msra.mxu0 0.0
        %1495 = vmatprep.subr.mxu0 0.0
        %1496 = vmatpush1.xpose.msra.mxu0 0.0
        %1497 = vmatprep.subr.mxu0 0.0
        %1498 = vmatpush1.xpose.msra.mxu0 0.0
        %1499 = vmatprep.subr.mxu0 0.0
        %1500 = vmatpush1.xpose.msra.mxu0 0.0
        %1501 = vmatprep.subr.mxu0 0.0
        %1502 = vmatpush1.xpose.msra.mxu0 0.0
        %1503 = vmatprep.subr.mxu0 0.0
        %1504 = vmatpush1.xpose.msra.mxu0 0.0
        %1505 = vmatprep.subr.mxu0 0.0
        %1506 = vmatpush1.xpose.msra.mxu0 0.0
        %1507 = vmatprep.subr.mxu0 0.0
        %1508 = vmatpush1.xpose.msra.mxu0 0.0
        %1509 = vmatprep.subr.mxu0 0.0
        %1510 = vmatpush1.xpose.msra.mxu0 0.0
        %1511 = vmatprep.subr.mxu0 0.0
        %1512 = vmatpush1.xpose.msra.mxu0 0.0
        %1513 = vmatprep.subr.mxu0 0.0
        %1514 = vmatpush1.xpose.msra.mxu0 0.0
        %1515 = vmatprep.subr.mxu0 0.0
        %1516 = vmatpush1.xpose.msra.mxu0 0.0
        %1517 = vmatprep.subr.mxu0 0.0
        %1518 = vmatpush1.xpose.msra.mxu0 0.0
        %1519 = vmatprep.subr.mxu0 0.0
        %1520 = vmatpush1.xpose.msra.mxu0 0.0
        %1521 = vmatprep.subr.mxu0 0.0
        %1522 = vmatpush1.xpose.msra.mxu0 0.0
        %1523 = vmatprep.subr.mxu0 0.0
        %1524 = vmatpush1.xpose.msra.mxu0 0.0
        %1525 = vmatprep.subr.mxu0 0.0
        %1526 = vmatpush1.xpose.msra.mxu0 0.0
        %1527 = vmatprep.subr.mxu0 0.0
        %1528 = vmatpush1.xpose.msra.mxu0 0.0
        %1529 = vmatprep.subr.mxu0 0.0
        %1530 = vmatpush1.xpose.msra.mxu0 0.0
        %1531 = vmatprep.subr.mxu0 0.0
        %1532 = vmatpush1.xpose.msra.mxu0 0.0
        %1533 = vmatprep.subr.mxu0 0.0
        %1534 = vmatpush1.xpose.msra.mxu0 0.0
        %1535 = vmatprep.subr.mxu0 0.0
        %1536 = vmatpush1.xpose.msra.mxu0 0.0
        %1537 = vmatprep.mubr.f32.mxu0 0.0
        %1538 = vmatmul.mubr.f32.gmra.mrb[0].mxu0 %v1465
        %v1539 = vpop.f32.mrb[0].mxu0
        %v1540 = vadd.f32 0.0, %v1539
        %v1541 = vpop.f32.mrb[0].mxu0
        %1542 = vmatprep.mubr.f32.mxu0 0.0
        %1543 = vmatmul.mubr.f32.gmra.mrb[0].mxu0 %v1467
        %v1544 = vpop.f32.mrb[0].mxu0
        %v1545 = vadd.f32 0.0, %v1544
        %v1546 = vpop.f32.mrb[0].mxu0
        %1547 = vdwg.mxu0
        %v1548 = vmul.f32 %v1540, 0.25
        %v1549 = vmul.f32 %v1545, 0.25
        %v1550 = vsel %vm1060, %v1548, -inf
        %1551 = vmax.xlane.f32.xlu0 %v1550
        %v1552 = vpop.xlane.xlu0 %1551
        %v1553 = vsel %vm1060, %v1549, -inf
        %1554 = vmax.xlane.f32.xlu0 %v1553
        %v1555 = vpop.xlane.xlu0 %1554
        %v1556 = vsub.f32 %v1548, %v1552
        %v1557 = vsub.f32 %v1549, %v1555
        %v1558 = vmul.f32 %v1556, 1.442695
        %v1559 = vpow.pop %v1558
        %v1560 = vmul.f32 %v1557, 1.442695
        %v1561 = vpow.pop %v1560
        %v1562 = vsel %vm1060, %v1559, 0.0
        %1563 = vadd.xlane.f32.xlu0 %v1562
        %v1564 = vpop.xlane.xlu0 %1563
        %v1565 = vsel %vm1060, %v1561, 0.0
        %1566 = vadd.xlane.f32.xlu0 %v1565
        %v1567 = vpop.xlane.xlu0 %1566
        %v1568 = vrcp.pop %v1564
        %v1569 = vmul.f32 %v1559, %v1568
        %v1570 = vrcp.pop %v1567
        %v1571 = vmul.f32 %v1561, %v1570
        %1572 = vrot.lane.b32.xlu0 %v1052, 96
        %v1573 = vpop.permute.xlu0 %1572
        %1574 = vrot.lane.b32.xlu0 %v1057, 96
        %v1575 = vpop.permute.xlu0 %1574
        %v1579 = vsel %vm1060, %v1569, 0
        %v1582 = vsel %vm1060, %v1571, 0
        %1584 = vmatprep.subr.mxu0 0.0
        %1585 = vmatpush1.msra.mxu0 %v1573
        %1586 = vmatprep.subr.mxu0 0.0
        %1587 = vmatpush1.msra.mxu0 %v1575
        %1588 = vmatprep.subr.mxu0 0.0
        %1589 = vmatpush1.msra.mxu0 0.0
        %1590 = vmatprep.subr.mxu0 0.0
        %1591 = vmatpush1.msra.mxu0 0.0
        %1592 = vmatprep.subr.mxu0 0.0
        %1593 = vmatpush1.msra.mxu0 0.0
        %1594 = vmatprep.subr.mxu0 0.0
        %1595 = vmatpush1.msra.mxu0 0.0
        %1596 = vmatprep.subr.mxu0 0.0
        %1597 = vmatpush1.msra.mxu0 0.0
        %1598 = vmatprep.subr.mxu0 0.0
        %1599 = vmatpush1.msra.mxu0 0.0
        %1600 = vmatprep.subr.mxu0 0.0
        %1601 = vmatpush1.msra.mxu0 0.0
        %1602 = vmatprep.subr.mxu0 0.0
        %1603 = vmatpush1.msra.mxu0 0.0
        %1604 = vmatprep.subr.mxu0 0.0
        %1605 = vmatpush1.msra.mxu0 0.0
        %1606 = vmatprep.subr.mxu0 0.0
        %1607 = vmatpush1.msra.mxu0 0.0
        %1608 = vmatprep.subr.mxu0 0.0
        %1609 = vmatpush1.msra.mxu0 0.0
        %1610 = vmatprep.subr.mxu0 0.0
        %1611 = vmatpush1.msra.mxu0 0.0
        %1612 = vmatprep.subr.mxu0 0.0
        %1613 = vmatpush1.msra.mxu0 0.0
        %1614 = vmatprep.subr.mxu0 0.0
        %1615 = vmatpush1.msra.mxu0 0.0
        %1616 = vmatprep.subr.mxu0 0.0
        %1617 = vmatpush1.msra.mxu0 0.0
        %1618 = vmatprep.subr.mxu0 0.0
        %1619 = vmatpush1.msra.mxu0 0.0
        %1620 = vmatprep.subr.mxu0 0.0
        %1621 = vmatpush1.msra.mxu0 0.0
        %1622 = vmatprep.subr.mxu0 0.0
        %1623 = vmatpush1.msra.mxu0 0.0
        %1624 = vmatprep.subr.mxu0 0.0
        %1625 = vmatpush1.msra.mxu0 0.0
        %1626 = vmatprep.subr.mxu0 0.0
        %1627 = vmatpush1.msra.mxu0 0.0
        %1628 = vmatprep.subr.mxu0 0.0
        %1629 = vmatpush1.msra.mxu0 0.0
        %1630 = vmatprep.subr.mxu0 0.0
        %1631 = vmatpush1.msra.mxu0 0.0
        %1632 = vmatprep.subr.mxu0 0.0
        %1633 = vmatpush1.msra.mxu0 0.0
        %1634 = vmatprep.subr.mxu0 0.0
        %1635 = vmatpush1.msra.mxu0 0.0
        %1636 = vmatprep.subr.mxu0 0.0
        %1637 = vmatpush1.msra.mxu0 0.0
        %1638 = vmatprep.subr.mxu0 0.0
        %1639 = vmatpush1.msra.mxu0 0.0
        %1640 = vmatprep.subr.mxu0 0.0
        %1641 = vmatpush1.msra.mxu0 0.0
        %1642 = vmatprep.subr.mxu0 0.0
        %1643 = vmatpush1.msra.mxu0 0.0
        %1644 = vmatprep.subr.mxu0 0.0
        %1645 = vmatpush1.msra.mxu0 0.0
        %1646 = vmatprep.subr.mxu0 0.0
        %1647 = vmatpush1.msra.mxu0 0.0
        %1648 = vmatprep.mubr.f32.mxu0 0.0
        %1649 = vmatmul.mubr.f32.gmra.mrb[0].mxu0 %v1579
        %v1650 = vpop.f32.mrb[0].mxu0
        %v1651 = vadd.f32 0.0, %v1650
        %v1652 = vpop.f32.mrb[0].mxu0
        %1653 = vmatprep.mubr.f32.mxu0 0.0
        %1654 = vmatmul.mubr.f32.gmra.mrb[0].mxu0 %v1582
        %v1655 = vpop.f32.mrb[0].mxu0
        %v1656 = vadd.f32 0.0, %v1655
        %v1657 = vpop.f32.mrb[0].mxu0
        %1658 = vdwg.mxu0
        %1659 = vrot.lane.b32.xlu0 %v975, 80
        %v1660 = vpop.permute.xlu0 %1659
        %1661 = vrot.lane.b32.xlu0 %v981, 80
        %v1662 = vpop.permute.xlu0 %1661
        %1663 = vrot.lane.b32.xlu0 %v977, 80
        %v1664 = vpop.permute.xlu0 %1663
        %1665 = vrot.lane.b32.xlu0 %v983, 80
        %v1666 = vpop.permute.xlu0 %1665
        %v1667 = vsel %vm1060, %v1660, 0
        %v1669 = vsel %vm1060, %v1662, 0
        %v1671 = vsel %vm1060, %v1664, 0
        %v1673 = vsel %vm1060, %v1666, 0
        %1675 = vmatprep.subr.mxu0 0.0
        %1676 = vmatpush1.xpose.msra.mxu0 %v1671
        %1677 = vmatprep.subr.mxu0 0.0
        %1678 = vmatpush1.xpose.msra.mxu0 %v1673
        %1679 = vmatprep.subr.mxu0 0.0
        %1680 = vmatpush1.xpose.msra.mxu0 0.0
        %1681 = vmatprep.subr.mxu0 0.0
        %1682 = vmatpush1.xpose.msra.mxu0 0.0
        %1683 = vmatprep.subr.mxu0 0.0
        %1684 = vmatpush1.xpose.msra.mxu0 0.0
        %1685 = vmatprep.subr.mxu0 0.0
        %1686 = vmatpush1.xpose.msra.mxu0 0.0
        %1687 = vmatprep.subr.mxu0 0.0
        %1688 = vmatpush1.xpose.msra.mxu0 0.0
        %1689 = vmatprep.subr.mxu0 0.0
        %1690 = vmatpush1.xpose.msra.mxu0 0.0
        %1691 = vmatprep.subr.mxu0 0.0
        %1692 = vmatpush1.xpose.msra.mxu0 0.0
        %1693 = vmatprep.subr.mxu0 0.0
        %1694 = vmatpush1.xpose.msra.mxu0 0.0
        %1695 = vmatprep.subr.mxu0 0.0
        %1696 = vmatpush1.xpose.msra.mxu0 0.0
        %1697 = vmatprep.subr.mxu0 0.0
        %1698 = vmatpush1.xpose.msra.mxu0 0.0
        %1699 = vmatprep.subr.mxu0 0.0
        %1700 = vmatpush1.xpose.msra.mxu0 0.0
        %1701 = vmatprep.subr.mxu0 0.0
        %1702 = vmatpush1.xpose.msra.mxu0 0.0
        %1703 = vmatprep.subr.mxu0 0.0
        %1704 = vmatpush1.xpose.msra.mxu0 0.0
        %1705 = vmatprep.subr.mxu0 0.0
        %1706 = vmatpush1.xpose.msra.mxu0 0.0
        %1707 = vmatprep.subr.mxu0 0.0
        %1708 = vmatpush1.xpose.msra.mxu0 0.0
        %1709 = vmatprep.subr.mxu0 0.0
        %1710 = vmatpush1.xpose.msra.mxu0 0.0
        %1711 = vmatprep.subr.mxu0 0.0
        %1712 = vmatpush1.xpose.msra.mxu0 0.0
        %1713 = vmatprep.subr.mxu0 0.0
        %1714 = vmatpush1.xpose.msra.mxu0 0.0
        %1715 = vmatprep.subr.mxu0 0.0
        %1716 = vmatpush1.xpose.msra.mxu0 0.0
        %1717 = vmatprep.subr.mxu0 0.0
        %1718 = vmatpush1.xpose.msra.mxu0 0.0
        %1719 = vmatprep.subr.mxu0 0.0
        %1720 = vmatpush1.xpose.msra.mxu0 0.0
        %1721 = vmatprep.subr.mxu0 0.0
        %1722 = vmatpush1.xpose.msra.mxu0 0.0
        %1723 = vmatprep.subr.mxu0 0.0
        %1724 = vmatpush1.xpose.msra.mxu0 0.0
        %1725 = vmatprep.subr.mxu0 0.0
        %1726 = vmatpush1.xpose.msra.mxu0 0.0
        %1727 = vmatprep.subr.mxu0 0.0
        %1728 = vmatpush1.xpose.msra.mxu0 0.0
        %1729 = vmatprep.subr.mxu0 0.0
        %1730 = vmatpush1.xpose.msra.mxu0 0.0
        %1731 = vmatprep.subr.mxu0 0.0
        %1732 = vmatpush1.xpose.msra.mxu0 0.0
        %1733 = vmatprep.subr.mxu0 0.0
        %1734 = vmatpush1.xpose.msra.mxu0 0.0
        %1735 = vmatprep.subr.mxu0 0.0
        %1736 = vmatpush1.xpose.msra.mxu0 0.0
        %1737 = vmatprep.subr.mxu0 0.0
        %1738 = vmatpush1.xpose.msra.mxu0 0.0
        %1739 = vmatprep.mubr.f32.mxu0 0.0
        %1740 = vmatmul.mubr.f32.gmra.mrb[0].mxu0 %v1667
        %v1741 = vpop.f32.mrb[0].mxu0
        %v1742 = vadd.f32 0.0, %v1741
        %v1743 = vpop.f32.mrb[0].mxu0
        %1744 = vmatprep.mubr.f32.mxu0 0.0
        %1745 = vmatmul.mubr.f32.gmra.mrb[0].mxu0 %v1669
        %v1746 = vpop.f32.mrb[0].mxu0
        %v1747 = vadd.f32 0.0, %v1746
        %v1748 = vpop.f32.mrb[0].mxu0
        %1749 = vdwg.mxu0
        %v1750 = vmul.f32 %v1742, 0.25
        %v1751 = vmul.f32 %v1747, 0.25
        %v1752 = vsel %vm1060, %v1750, -inf
        %1753 = vmax.xlane.f32.xlu0 %v1752
        %v1754 = vpop.xlane.xlu0 %1753
        %v1755 = vsel %vm1060, %v1751, -inf
        %1756 = vmax.xlane.f32.xlu0 %v1755
        %v1757 = vpop.xlane.xlu0 %1756
        %v1758 = vsub.f32 %v1750, %v1754
        %v1759 = vsub.f32 %v1751, %v1757
        %v1760 = vmul.f32 %v1758, 1.442695
        %v1761 = vpow.pop %v1760
        %v1762 = vmul.f32 %v1759, 1.442695
        %v1763 = vpow.pop %v1762
        %v1764 = vsel %vm1060, %v1761, 0.0
        %1765 = vadd.xlane.f32.xlu0 %v1764
        %v1766 = vpop.xlane.xlu0 %1765
        %v1767 = vsel %vm1060, %v1763, 0.0
        %1768 = vadd.xlane.f32.xlu0 %v1767
        %v1769 = vpop.xlane.xlu0 %1768
        %v1770 = vrcp.pop %v1766
        %v1771 = vmul.f32 %v1761, %v1770
        %v1772 = vrcp.pop %v1769
        %v1773 = vmul.f32 %v1763, %v1772
        %1774 = vrot.lane.b32.xlu0 %v1052, 80
        %v1775 = vpop.permute.xlu0 %1774
        %1776 = vrot.lane.b32.xlu0 %v1057, 80
        %v1777 = vpop.permute.xlu0 %1776
        %v1781 = vsel %vm1060, %v1771, 0
        %v1784 = vsel %vm1060, %v1773, 0
        %1786 = vmatprep.subr.mxu0 0.0
        %1787 = vmatpush1.msra.mxu0 %v1775
        %1788 = vmatprep.subr.mxu0 0.0
        %1789 = vmatpush1.msra.mxu0 %v1777
        %1790 = vmatprep.subr.mxu0 0.0
        %1791 = vmatpush1.msra.mxu0 0.0
        %1792 = vmatprep.subr.mxu0 0.0
        %1793 = vmatpush1.msra.mxu0 0.0
        %1794 = vmatprep.subr.mxu0 0.0
        %1795 = vmatpush1.msra.mxu0 0.0
        %1796 = vmatprep.subr.mxu0 0.0
        %1797 = vmatpush1.msra.mxu0 0.0
        %1798 = vmatprep.subr.mxu0 0.0
        %1799 = vmatpush1.msra.mxu0 0.0
        %1800 = vmatprep.subr.mxu0 0.0
        %1801 = vmatpush1.msra.mxu0 0.0
        %1802 = vmatprep.subr.mxu0 0.0
        %1803 = vmatpush1.msra.mxu0 0.0
        %1804 = vmatprep.subr.mxu0 0.0
        %1805 = vmatpush1.msra.mxu0 0.0
        %1806 = vmatprep.subr.mxu0 0.0
        %1807 = vmatpush1.msra.mxu0 0.0
        %1808 = vmatprep.subr.mxu0 0.0
        %1809 = vmatpush1.msra.mxu0 0.0
        %1810 = vmatprep.subr.mxu0 0.0
        %1811 = vmatpush1.msra.mxu0 0.0
        %1812 = vmatprep.subr.mxu0 0.0
        %1813 = vmatpush1.msra.mxu0 0.0
        %1814 = vmatprep.subr.mxu0 0.0
        %1815 = vmatpush1.msra.mxu0 0.0
        %1816 = vmatprep.subr.mxu0 0.0
        %1817 = vmatpush1.msra.mxu0 0.0
        %1818 = vmatprep.subr.mxu0 0.0
        %1819 = vmatpush1.msra.mxu0 0.0
        %1820 = vmatprep.subr.mxu0 0.0
        %1821 = vmatpush1.msra.mxu0 0.0
        %1822 = vmatprep.subr.mxu0 0.0
        %1823 = vmatpush1.msra.mxu0 0.0
        %1824 = vmatprep.subr.mxu0 0.0
        %1825 = vmatpush1.msra.mxu0 0.0
        %1826 = vmatprep.subr.mxu0 0.0
        %1827 = vmatpush1.msra.mxu0 0.0
        %1828 = vmatprep.subr.mxu0 0.0
        %1829 = vmatpush1.msra.mxu0 0.0
        %1830 = vmatprep.subr.mxu0 0.0
        %1831 = vmatpush1.msra.mxu0 0.0
        %1832 = vmatprep.subr.mxu0 0.0
        %1833 = vmatpush1.msra.mxu0 0.0
        %1834 = vmatprep.subr.mxu0 0.0
        %1835 = vmatpush1.msra.mxu0 0.0
        %1836 = vmatprep.subr.mxu0 0.0
        %1837 = vmatpush1.msra.mxu0 0.0
        %1838 = vmatprep.subr.mxu0 0.0
        %1839 = vmatpush1.msra.mxu0 0.0
        %1840 = vmatprep.subr.mxu0 0.0
        %1841 = vmatpush1.msra.mxu0 0.0
        %1842 = vmatprep.subr.mxu0 0.0
        %1843 = vmatpush1.msra.mxu0 0.0
        %1844 = vmatprep.subr.mxu0 0.0
        %1845 = vmatpush1.msra.mxu0 0.0
        %1846 = vmatprep.subr.mxu0 0.0
        %1847 = vmatpush1.msra.mxu0 0.0
        %1848 = vmatprep.subr.mxu0 0.0
        %1849 = vmatpush1.msra.mxu0 0.0
        %1850 = vmatprep.mubr.f32.mxu0 0.0
        %1851 = vmatmul.mubr.f32.gmra.mrb[0].mxu0 %v1781
        %v1852 = vpop.f32.mrb[0].mxu0
        %v1853 = vadd.f32 0.0, %v1852
        %v1854 = vpop.f32.mrb[0].mxu0
        %1855 = vmatprep.mubr.f32.mxu0 0.0
        %1856 = vmatmul.mubr.f32.gmra.mrb[0].mxu0 %v1784
        %v1857 = vpop.f32.mrb[0].mxu0
        %v1858 = vadd.f32 0.0, %v1857
        %v1859 = vpop.f32.mrb[0].mxu0
        %1860 = vdwg.mxu0
        %1861 = vrot.lane.b32.xlu0 %v975, 64
        %v1862 = vpop.permute.xlu0 %1861
        %1863 = vrot.lane.b32.xlu0 %v981, 64
        %v1864 = vpop.permute.xlu0 %1863
        %1865 = vrot.lane.b32.xlu0 %v977, 64
        %v1866 = vpop.permute.xlu0 %1865
        %1867 = vrot.lane.b32.xlu0 %v983, 64
        %v1868 = vpop.permute.xlu0 %1867
        %v1869 = vsel %vm1060, %v1862, 0
        %v1871 = vsel %vm1060, %v1864, 0
        %v1873 = vsel %vm1060, %v1866, 0
        %v1875 = vsel %vm1060, %v1868, 0
        %1877 = vmatprep.subr.mxu0 0.0
        %1878 = vmatpush1.xpose.msra.mxu0 %v1873
        %1879 = vmatprep.subr.mxu0 0.0
        %1880 = vmatpush1.xpose.msra.mxu0 %v1875
        %1881 = vmatprep.subr.mxu0 0.0
        %1882 = vmatpush1.xpose.msra.mxu0 0.0
        %1883 = vmatprep.subr.mxu0 0.0
        %1884 = vmatpush1.xpose.msra.mxu0 0.0
        %1885 = vmatprep.subr.mxu0 0.0
        %1886 = vmatpush1.xpose.msra.mxu0 0.0
        %1887 = vmatprep.subr.mxu0 0.0
        %1888 = vmatpush1.xpose.msra.mxu0 0.0
        %1889 = vmatprep.subr.mxu0 0.0
        %1890 = vmatpush1.xpose.msra.mxu0 0.0
        %1891 = vmatprep.subr.mxu0 0.0
        %1892 = vmatpush1.xpose.msra.mxu0 0.0
        %1893 = vmatprep.subr.mxu0 0.0
        %1894 = vmatpush1.xpose.msra.mxu0 0.0
        %1895 = vmatprep.subr.mxu0 0.0
        %1896 = vmatpush1.xpose.msra.mxu0 0.0
        %1897 = vmatprep.subr.mxu0 0.0
        %1898 = vmatpush1.xpose.msra.mxu0 0.0
        %1899 = vmatprep.subr.mxu0 0.0
        %1900 = vmatpush1.xpose.msra.mxu0 0.0
        %1901 = vmatprep.subr.mxu0 0.0
        %1902 = vmatpush1.xpose.msra.mxu0 0.0
        %1903 = vmatprep.subr.mxu0 0.0
        %1904 = vmatpush1.xpose.msra.mxu0 0.0
        %1905 = vmatprep.subr.mxu0 0.0
        %1906 = vmatpush1.xpose.msra.mxu0 0.0
        %1907 = vmatprep.subr.mxu0 0.0
        %1908 = vmatpush1.xpose.msra.mxu0 0.0
        %1909 = vmatprep.subr.mxu0 0.0
        %1910 = vmatpush1.xpose.msra.mxu0 0.0
        %1911 = vmatprep.subr.mxu0 0.0
        %1912 = vmatpush1.xpose.msra.mxu0 0.0
        %1913 = vmatprep.subr.mxu0 0.0
        %1914 = vmatpush1.xpose.msra.mxu0 0.0
        %1915 = vmatprep.subr.mxu0 0.0
        %1916 = vmatpush1.xpose.msra.mxu0 0.0
        %1917 = vmatprep.subr.mxu0 0.0
        %1918 = vmatpush1.xpose.msra.mxu0 0.0
        %1919 = vmatprep.subr.mxu0 0.0
        %1920 = vmatpush1.xpose.msra.mxu0 0.0
        %1921 = vmatprep.subr.mxu0 0.0
        %1922 = vmatpush1.xpose.msra.mxu0 0.0
        %1923 = vmatprep.subr.mxu0 0.0
        %1924 = vmatpush1.xpose.msra.mxu0 0.0
        %1925 = vmatprep.subr.mxu0 0.0
        %1926 = vmatpush1.xpose.msra.mxu0 0.0
        %1927 = vmatprep.subr.mxu0 0.0
        %1928 = vmatpush1.xpose.msra.mxu0 0.0
        %1929 = vmatprep.subr.mxu0 0.0
        %1930 = vmatpush1.xpose.msra.mxu0 0.0
        %1931 = vmatprep.subr.mxu0 0.0
        %1932 = vmatpush1.xpose.msra.mxu0 0.0
        %1933 = vmatprep.subr.mxu0 0.0
        %1934 = vmatpush1.xpose.msra.mxu0 0.0
        %1935 = vmatprep.subr.mxu0 0.0
        %1936 = vmatpush1.xpose.msra.mxu0 0.0
        %1937 = vmatprep.subr.mxu0 0.0
        %1938 = vmatpush1.xpose.msra.mxu0 0.0
        %1939 = vmatprep.subr.mxu0 0.0
        %1940 = vmatpush1.xpose.msra.mxu0 0.0
        %1941 = vmatprep.mubr.f32.mxu0 0.0
        %1942 = vmatmul.mubr.f32.gmra.mrb[0].mxu0 %v1869
        %v1943 = vpop.f32.mrb[0].mxu0
        %v1944 = vadd.f32 0.0, %v1943
        %v1945 = vpop.f32.mrb[0].mxu0
        %1946 = vmatprep.mubr.f32.mxu0 0.0
        %1947 = vmatmul.mubr.f32.gmra.mrb[0].mxu0 %v1871
        %v1948 = vpop.f32.mrb[0].mxu0
        %v1949 = vadd.f32 0.0, %v1948
        %v1950 = vpop.f32.mrb[0].mxu0
        %1951 = vdwg.mxu0
        %v1952 = vmul.f32 %v1944, 0.25
        %v1953 = vmul.f32 %v1949, 0.25
        %v1954 = vsel %vm1060, %v1952, -inf
        %1955 = vmax.xlane.f32.xlu0 %v1954
        %v1956 = vpop.xlane.xlu0 %1955
        %v1957 = vsel %vm1060, %v1953, -inf
        %1958 = vmax.xlane.f32.xlu0 %v1957
        %v1959 = vpop.xlane.xlu0 %1958
        %v1960 = vsub.f32 %v1952, %v1956
        %v1961 = vsub.f32 %v1953, %v1959
        %v1962 = vmul.f32 %v1960, 1.442695
        %v1963 = vpow.pop %v1962
        %v1964 = vmul.f32 %v1961, 1.442695
        %v1965 = vpow.pop %v1964
        %v1966 = vsel %vm1060, %v1963, 0.0
        %1967 = vadd.xlane.f32.xlu0 %v1966
        %v1968 = vpop.xlane.xlu0 %1967
        %v1969 = vsel %vm1060, %v1965, 0.0
        %1970 = vadd.xlane.f32.xlu0 %v1969
        %v1971 = vpop.xlane.xlu0 %1970
        %v1972 = vrcp.pop %v1968
        %v1973 = vmul.f32 %v1963, %v1972
        %v1974 = vrcp.pop %v1971
        %v1975 = vmul.f32 %v1965, %v1974
        %1976 = vrot.lane.b32.xlu0 %v1052, 64
        %v1977 = vpop.permute.xlu0 %1976
        %1978 = vrot.lane.b32.xlu0 %v1057, 64
        %v1979 = vpop.permute.xlu0 %1978
        %v1983 = vsel %vm1060, %v1973, 0
        %v1986 = vsel %vm1060, %v1975, 0
        %1988 = vmatprep.subr.mxu0 0.0
        %1989 = vmatpush1.msra.mxu0 %v1977
        %1990 = vmatprep.subr.mxu0 0.0
        %1991 = vmatpush1.msra.mxu0 %v1979
        %1992 = vmatprep.subr.mxu0 0.0
        %1993 = vmatpush1.msra.mxu0 0.0
        %1994 = vmatprep.subr.mxu0 0.0
        %1995 = vmatpush1.msra.mxu0 0.0
        %1996 = vmatprep.subr.mxu0 0.0
        %1997 = vmatpush1.msra.mxu0 0.0
        %1998 = vmatprep.subr.mxu0 0.0
        %1999 = vmatpush1.msra.mxu0 0.0
        %2000 = vmatprep.subr.mxu0 0.0
        %2001 = vmatpush1.msra.mxu0 0.0
        %2002 = vmatprep.subr.mxu0 0.0
        %2003 = vmatpush1.msra.mxu0 0.0
        %2004 = vmatprep.subr.mxu0 0.0
        %2005 = vmatpush1.msra.mxu0 0.0
        %2006 = vmatprep.subr.mxu0 0.0
        %2007 = vmatpush1.msra.mxu0 0.0
        %2008 = vmatprep.subr.mxu0 0.0
        %2009 = vmatpush1.msra.mxu0 0.0
        %2010 = vmatprep.subr.mxu0 0.0
        %2011 = vmatpush1.msra.mxu0 0.0
        %2012 = vmatprep.subr.mxu0 0.0
        %2013 = vmatpush1.msra.mxu0 0.0
        %2014 = vmatprep.subr.mxu0 0.0
        %2015 = vmatpush1.msra.mxu0 0.0
        %2016 = vmatprep.subr.mxu0 0.0
        %2017 = vmatpush1.msra.mxu0 0.0
        %2018 = vmatprep.subr.mxu0 0.0
        %2019 = vmatpush1.msra.mxu0 0.0
        %2020 = vmatprep.subr.mxu0 0.0
        %2021 = vmatpush1.msra.mxu0 0.0
        %2022 = vmatprep.subr.mxu0 0.0
        %2023 = vmatpush1.msra.mxu0 0.0
        %2024 = vmatprep.subr.mxu0 0.0
        %2025 = vmatpush1.msra.mxu0 0.0
        %2026 = vmatprep.subr.mxu0 0.0
        %2027 = vmatpush1.msra.mxu0 0.0
        %2028 = vmatprep.subr.mxu0 0.0
        %2029 = vmatpush1.msra.mxu0 0.0
        %2030 = vmatprep.subr.mxu0 0.0
        %2031 = vmatpush1.msra.mxu0 0.0
        %2032 = vmatprep.subr.mxu0 0.0
        %2033 = vmatpush1.msra.mxu0 0.0
        %2034 = vmatprep.subr.mxu0 0.0
        %2035 = vmatpush1.msra.mxu0 0.0
        %2036 = vmatprep.subr.mxu0 0.0
        %2037 = vmatpush1.msra.mxu0 0.0
        %2038 = vmatprep.subr.mxu0 0.0
        %2039 = vmatpush1.msra.mxu0 0.0
        %2040 = vmatprep.subr.mxu0 0.0
        %2041 = vmatpush1.msra.mxu0 0.0
        %2042 = vmatprep.subr.mxu0 0.0
        %2043 = vmatpush1.msra.mxu0 0.0
        %2044 = vmatprep.subr.mxu0 0.0
        %2045 = vmatpush1.msra.mxu0 0.0
        %2046 = vmatprep.subr.mxu0 0.0
        %2047 = vmatpush1.msra.mxu0 0.0
        %2048 = vmatprep.subr.mxu0 0.0
        %2049 = vmatpush1.msra.mxu0 0.0
        %2050 = vmatprep.subr.mxu0 0.0
        %2051 = vmatpush1.msra.mxu0 0.0
        %2052 = vmatprep.mubr.f32.mxu0 0.0
        %2053 = vmatmul.mubr.f32.gmra.mrb[0].mxu0 %v1983
        %v2054 = vpop.f32.mrb[0].mxu0
        %v2055 = vadd.f32 0.0, %v2054
        %v2056 = vpop.f32.mrb[0].mxu0
        %2057 = vmatprep.mubr.f32.mxu0 0.0
        %2058 = vmatmul.mubr.f32.gmra.mrb[0].mxu0 %v1986
        %v2059 = vpop.f32.mrb[0].mxu0
        %v2060 = vadd.f32 0.0, %v2059
        %v2061 = vpop.f32.mrb[0].mxu0
        %2062 = vdwg.mxu0
        %2063 = vrot.lane.b32.xlu0 %v975, 48
        %v2064 = vpop.permute.xlu0 %2063
        %2065 = vrot.lane.b32.xlu0 %v981, 48
        %v2066 = vpop.permute.xlu0 %2065
        %2067 = vrot.lane.b32.xlu0 %v977, 48
        %v2068 = vpop.permute.xlu0 %2067
        %2069 = vrot.lane.b32.xlu0 %v983, 48
        %v2070 = vpop.permute.xlu0 %2069
        %v2071 = vsel %vm1060, %v2064, 0
        %v2073 = vsel %vm1060, %v2066, 0
        %v2075 = vsel %vm1060, %v2068, 0
        %v2077 = vsel %vm1060, %v2070, 0
        %2079 = vmatprep.subr.mxu0 0.0
        %2080 = vmatpush1.xpose.msra.mxu0 %v2075
        %2081 = vmatprep.subr.mxu0 0.0
        %2082 = vmatpush1.xpose.msra.mxu0 %v2077
        %2083 = vmatprep.subr.mxu0 0.0
        %2084 = vmatpush1.xpose.msra.mxu0 0.0
        %2085 = vmatprep.subr.mxu0 0.0
        %2086 = vmatpush1.xpose.msra.mxu0 0.0
        %2087 = vmatprep.subr.mxu0 0.0
        %2088 = vmatpush1.xpose.msra.mxu0 0.0
        %2089 = vmatprep.subr.mxu0 0.0
        %2090 = vmatpush1.xpose.msra.mxu0 0.0
        %2091 = vmatprep.subr.mxu0 0.0
        %2092 = vmatpush1.xpose.msra.mxu0 0.0
        %2093 = vmatprep.subr.mxu0 0.0
        %2094 = vmatpush1.xpose.msra.mxu0 0.0
        %2095 = vmatprep.subr.mxu0 0.0
        %2096 = vmatpush1.xpose.msra.mxu0 0.0
        %2097 = vmatprep.subr.mxu0 0.0
        %2098 = vmatpush1.xpose.msra.mxu0 0.0
        %2099 = vmatprep.subr.mxu0 0.0
        %2100 = vmatpush1.xpose.msra.mxu0 0.0
        %2101 = vmatprep.subr.mxu0 0.0
        %2102 = vmatpush1.xpose.msra.mxu0 0.0
        %2103 = vmatprep.subr.mxu0 0.0
        %2104 = vmatpush1.xpose.msra.mxu0 0.0
        %2105 = vmatprep.subr.mxu0 0.0
        %2106 = vmatpush1.xpose.msra.mxu0 0.0
        %2107 = vmatprep.subr.mxu0 0.0
        %2108 = vmatpush1.xpose.msra.mxu0 0.0
        %2109 = vmatprep.subr.mxu0 0.0
        %2110 = vmatpush1.xpose.msra.mxu0 0.0
        %2111 = vmatprep.subr.mxu0 0.0
        %2112 = vmatpush1.xpose.msra.mxu0 0.0
        %2113 = vmatprep.subr.mxu0 0.0
        %2114 = vmatpush1.xpose.msra.mxu0 0.0
        %2115 = vmatprep.subr.mxu0 0.0
        %2116 = vmatpush1.xpose.msra.mxu0 0.0
        %2117 = vmatprep.subr.mxu0 0.0
        %2118 = vmatpush1.xpose.msra.mxu0 0.0
        %2119 = vmatprep.subr.mxu0 0.0
        %2120 = vmatpush1.xpose.msra.mxu0 0.0
        %2121 = vmatprep.subr.mxu0 0.0
        %2122 = vmatpush1.xpose.msra.mxu0 0.0
        %2123 = vmatprep.subr.mxu0 0.0
        %2124 = vmatpush1.xpose.msra.mxu0 0.0
        %2125 = vmatprep.subr.mxu0 0.0
        %2126 = vmatpush1.xpose.msra.mxu0 0.0
        %2127 = vmatprep.subr.mxu0 0.0
        %2128 = vmatpush1.xpose.msra.mxu0 0.0
        %2129 = vmatprep.subr.mxu0 0.0
        %2130 = vmatpush1.xpose.msra.mxu0 0.0
        %2131 = vmatprep.subr.mxu0 0.0
        %2132 = vmatpush1.xpose.msra.mxu0 0.0
        %2133 = vmatprep.subr.mxu0 0.0
        %2134 = vmatpush1.xpose.msra.mxu0 0.0
        %2135 = vmatprep.subr.mxu0 0.0
        %2136 = vmatpush1.xpose.msra.mxu0 0.0
        %2137 = vmatprep.subr.mxu0 0.0
        %2138 = vmatpush1.xpose.msra.mxu0 0.0
        %2139 = vmatprep.subr.mxu0 0.0
        %2140 = vmatpush1.xpose.msra.mxu0 0.0
        %2141 = vmatprep.subr.mxu0 0.0
        %2142 = vmatpush1.xpose.msra.mxu0 0.0
        %2143 = vmatprep.mubr.f32.mxu0 0.0
        %2144 = vmatmul.mubr.f32.gmra.mrb[0].mxu0 %v2071
        %v2145 = vpop.f32.mrb[0].mxu0
        %v2146 = vadd.f32 0.0, %v2145
        %v2147 = vpop.f32.mrb[0].mxu0
        %2148 = vmatprep.mubr.f32.mxu0 0.0
        %2149 = vmatmul.mubr.f32.gmra.mrb[0].mxu0 %v2073
        %v2150 = vpop.f32.mrb[0].mxu0
        %v2151 = vadd.f32 0.0, %v2150
        %v2152 = vpop.f32.mrb[0].mxu0
        %2153 = vdwg.mxu0
        %v2154 = vmul.f32 %v2146, 0.25
        %v2155 = vmul.f32 %v2151, 0.25
        %v2156 = vsel %vm1060, %v2154, -inf
        %2157 = vmax.xlane.f32.xlu0 %v2156
        %v2158 = vpop.xlane.xlu0 %2157
        %v2159 = vsel %vm1060, %v2155, -inf
        %2160 = vmax.xlane.f32.xlu0 %v2159
        %v2161 = vpop.xlane.xlu0 %2160
        %v2162 = vsub.f32 %v2154, %v2158
        %v2163 = vsub.f32 %v2155, %v2161
        %v2164 = vmul.f32 %v2162, 1.442695
        %v2165 = vpow.pop %v2164
        %v2166 = vmul.f32 %v2163, 1.442695
        %v2167 = vpow.pop %v2166
        %v2168 = vsel %vm1060, %v2165, 0.0
        %2169 = vadd.xlane.f32.xlu0 %v2168
        %v2170 = vpop.xlane.xlu0 %2169
        %v2171 = vsel %vm1060, %v2167, 0.0
        %2172 = vadd.xlane.f32.xlu0 %v2171
        %v2173 = vpop.xlane.xlu0 %2172
        %v2174 = vrcp.pop %v2170
        %v2175 = vmul.f32 %v2165, %v2174
        %v2176 = vrcp.pop %v2173
        %v2177 = vmul.f32 %v2167, %v2176
        %2178 = vrot.lane.b32.xlu0 %v1052, 48
        %v2179 = vpop.permute.xlu0 %2178
        %2180 = vrot.lane.b32.xlu0 %v1057, 48
        %v2181 = vpop.permute.xlu0 %2180
        %v2185 = vsel %vm1060, %v2175, 0
        %v2188 = vsel %vm1060, %v2177, 0
        %2190 = vmatprep.subr.mxu0 0.0
        %2191 = vmatpush1.msra.mxu0 %v2179
        %2192 = vmatprep.subr.mxu0 0.0
        %2193 = vmatpush1.msra.mxu0 %v2181
        %2194 = vmatprep.subr.mxu0 0.0
        %2195 = vmatpush1.msra.mxu0 0.0
        %2196 = vmatprep.subr.mxu0 0.0
        %2197 = vmatpush1.msra.mxu0 0.0
        %2198 = vmatprep.subr.mxu0 0.0
        %2199 = vmatpush1.msra.mxu0 0.0
        %2200 = vmatprep.subr.mxu0 0.0
        %2201 = vmatpush1.msra.mxu0 0.0
        %2202 = vmatprep.subr.mxu0 0.0
        %2203 = vmatpush1.msra.mxu0 0.0
        %2204 = vmatprep.subr.mxu0 0.0
        %2205 = vmatpush1.msra.mxu0 0.0
        %2206 = vmatprep.subr.mxu0 0.0
        %2207 = vmatpush1.msra.mxu0 0.0
        %2208 = vmatprep.subr.mxu0 0.0
        %2209 = vmatpush1.msra.mxu0 0.0
        %2210 = vmatprep.subr.mxu0 0.0
        %2211 = vmatpush1.msra.mxu0 0.0
        %2212 = vmatprep.subr.mxu0 0.0
        %2213 = vmatpush1.msra.mxu0 0.0
        %2214 = vmatprep.subr.mxu0 0.0
        %2215 = vmatpush1.msra.mxu0 0.0
        %2216 = vmatprep.subr.mxu0 0.0
        %2217 = vmatpush1.msra.mxu0 0.0
        %2218 = vmatprep.subr.mxu0 0.0
        %2219 = vmatpush1.msra.mxu0 0.0
        %2220 = vmatprep.subr.mxu0 0.0
        %2221 = vmatpush1.msra.mxu0 0.0
        %2222 = vmatprep.subr.mxu0 0.0
        %2223 = vmatpush1.msra.mxu0 0.0
        %2224 = vmatprep.subr.mxu0 0.0
        %2225 = vmatpush1.msra.mxu0 0.0
        %2226 = vmatprep.subr.mxu0 0.0
        %2227 = vmatpush1.msra.mxu0 0.0
        %2228 = vmatprep.subr.mxu0 0.0
        %2229 = vmatpush1.msra.mxu0 0.0
        %2230 = vmatprep.subr.mxu0 0.0
        %2231 = vmatpush1.msra.mxu0 0.0
        %2232 = vmatprep.subr.mxu0 0.0
        %2233 = vmatpush1.msra.mxu0 0.0
        %2234 = vmatprep.subr.mxu0 0.0
        %2235 = vmatpush1.msra.mxu0 0.0
        %2236 = vmatprep.subr.mxu0 0.0
        %2237 = vmatpush1.msra.mxu0 0.0
        %2238 = vmatprep.subr.mxu0 0.0
        %2239 = vmatpush1.msra.mxu0 0.0
        %2240 = vmatprep.subr.mxu0 0.0
        %2241 = vmatpush1.msra.mxu0 0.0
        %2242 = vmatprep.subr.mxu0 0.0
        %2243 = vmatpush1.msra.mxu0 0.0
        %2244 = vmatprep.subr.mxu0 0.0
        %2245 = vmatpush1.msra.mxu0 0.0
        %2246 = vmatprep.subr.mxu0 0.0
        %2247 = vmatpush1.msra.mxu0 0.0
        %2248 = vmatprep.subr.mxu0 0.0
        %2249 = vmatpush1.msra.mxu0 0.0
        %2250 = vmatprep.subr.mxu0 0.0
        %2251 = vmatpush1.msra.mxu0 0.0
        %2252 = vmatprep.subr.mxu0 0.0
        %2253 = vmatpush1.msra.mxu0 0.0
        %2254 = vmatprep.mubr.f32.mxu0 0.0
        %2255 = vmatmul.mubr.f32.gmra.mrb[0].mxu0 %v2185
        %v2256 = vpop.f32.mrb[0].mxu0
        %v2257 = vadd.f32 0.0, %v2256
        %v2258 = vpop.f32.mrb[0].mxu0
        %2259 = vmatprep.mubr.f32.mxu0 0.0
        %2260 = vmatmul.mubr.f32.gmra.mrb[0].mxu0 %v2188
        %v2261 = vpop.f32.mrb[0].mxu0
        %v2262 = vadd.f32 0.0, %v2261
        %v2263 = vpop.f32.mrb[0].mxu0
        %2264 = vdwg.mxu0
        %2265 = vrot.lane.b32.xlu0 %v975, 32
        %v2266 = vpop.permute.xlu0 %2265
        %2267 = vrot.lane.b32.xlu0 %v981, 32
        %v2268 = vpop.permute.xlu0 %2267
        %2269 = vrot.lane.b32.xlu0 %v977, 32
        %v2270 = vpop.permute.xlu0 %2269
        %2271 = vrot.lane.b32.xlu0 %v983, 32
        %v2272 = vpop.permute.xlu0 %2271
        %v2273 = vsel %vm1060, %v2266, 0
        %v2275 = vsel %vm1060, %v2268, 0
        %v2277 = vsel %vm1060, %v2270, 0
        %v2279 = vsel %vm1060, %v2272, 0
        %2281 = vmatprep.subr.mxu0 0.0
        %2282 = vmatpush1.xpose.msra.mxu0 %v2277
        %2283 = vmatprep.subr.mxu0 0.0
        %2284 = vmatpush1.xpose.msra.mxu0 %v2279
        %2285 = vmatprep.subr.mxu0 0.0
        %2286 = vmatpush1.xpose.msra.mxu0 0.0
        %2287 = vmatprep.subr.mxu0 0.0
        %2288 = vmatpush1.xpose.msra.mxu0 0.0
        %2289 = vmatprep.subr.mxu0 0.0
        %2290 = vmatpush1.xpose.msra.mxu0 0.0
        %2291 = vmatprep.subr.mxu0 0.0
        %2292 = vmatpush1.xpose.msra.mxu0 0.0
        %2293 = vmatprep.subr.mxu0 0.0
        %2294 = vmatpush1.xpose.msra.mxu0 0.0
        %2295 = vmatprep.subr.mxu0 0.0
        %2296 = vmatpush1.xpose.msra.mxu0 0.0
        %2297 = vmatprep.subr.mxu0 0.0
        %2298 = vmatpush1.xpose.msra.mxu0 0.0
        %2299 = vmatprep.subr.mxu0 0.0
        %2300 = vmatpush1.xpose.msra.mxu0 0.0
        %2301 = vmatprep.subr.mxu0 0.0
        %2302 = vmatpush1.xpose.msra.mxu0 0.0
        %2303 = vmatprep.subr.mxu0 0.0
        %2304 = vmatpush1.xpose.msra.mxu0 0.0
        %2305 = vmatprep.subr.mxu0 0.0
        %2306 = vmatpush1.xpose.msra.mxu0 0.0
        %2307 = vmatprep.subr.mxu0 0.0
        %2308 = vmatpush1.xpose.msra.mxu0 0.0
        %2309 = vmatprep.subr.mxu0 0.0
        %2310 = vmatpush1.xpose.msra.mxu0 0.0
        %2311 = vmatprep.subr.mxu0 0.0
        %2312 = vmatpush1.xpose.msra.mxu0 0.0
        %2313 = vmatprep.subr.mxu0 0.0
        %2314 = vmatpush1.xpose.msra.mxu0 0.0
        %2315 = vmatprep.subr.mxu0 0.0
        %2316 = vmatpush1.xpose.msra.mxu0 0.0
        %2317 = vmatprep.subr.mxu0 0.0
        %2318 = vmatpush1.xpose.msra.mxu0 0.0
        %2319 = vmatprep.subr.mxu0 0.0
        %2320 = vmatpush1.xpose.msra.mxu0 0.0
        %2321 = vmatprep.subr.mxu0 0.0
        %2322 = vmatpush1.xpose.msra.mxu0 0.0
        %2323 = vmatprep.subr.mxu0 0.0
        %2324 = vmatpush1.xpose.msra.mxu0 0.0
        %2325 = vmatprep.subr.mxu0 0.0
        %2326 = vmatpush1.xpose.msra.mxu0 0.0
        %2327 = vmatprep.subr.mxu0 0.0
        %2328 = vmatpush1.xpose.msra.mxu0 0.0
        %2329 = vmatprep.subr.mxu0 0.0
        %2330 = vmatpush1.xpose.msra.mxu0 0.0
        %2331 = vmatprep.subr.mxu0 0.0
        %2332 = vmatpush1.xpose.msra.mxu0 0.0
        %2333 = vmatprep.subr.mxu0 0.0
        %2334 = vmatpush1.xpose.msra.mxu0 0.0
        %2335 = vmatprep.subr.mxu0 0.0
        %2336 = vmatpush1.xpose.msra.mxu0 0.0
        %2337 = vmatprep.subr.mxu0 0.0
        %2338 = vmatpush1.xpose.msra.mxu0 0.0
        %2339 = vmatprep.subr.mxu0 0.0
        %2340 = vmatpush1.xpose.msra.mxu0 0.0
        %2341 = vmatprep.subr.mxu0 0.0
        %2342 = vmatpush1.xpose.msra.mxu0 0.0
        %2343 = vmatprep.subr.mxu0 0.0
        %2344 = vmatpush1.xpose.msra.mxu0 0.0
        %2345 = vmatprep.mubr.f32.mxu0 0.0
        %2346 = vmatmul.mubr.f32.gmra.mrb[0].mxu0 %v2273
        %v2347 = vpop.f32.mrb[0].mxu0
        %v2348 = vadd.f32 0.0, %v2347
        %v2349 = vpop.f32.mrb[0].mxu0
        %2350 = vmatprep.mubr.f32.mxu0 0.0
        %2351 = vmatmul.mubr.f32.gmra.mrb[0].mxu0 %v2275
        %v2352 = vpop.f32.mrb[0].mxu0
        %v2353 = vadd.f32 0.0, %v2352
        %v2354 = vpop.f32.mrb[0].mxu0
        %2355 = vdwg.mxu0
        %v2356 = vmul.f32 %v2348, 0.25
        %v2357 = vmul.f32 %v2353, 0.25
        %v2358 = vsel %vm1060, %v2356, -inf
        %2359 = vmax.xlane.f32.xlu0 %v2358
        %v2360 = vpop.xlane.xlu0 %2359
        %v2361 = vsel %vm1060, %v2357, -inf
        %2362 = vmax.xlane.f32.xlu0 %v2361
        %v2363 = vpop.xlane.xlu0 %2362
        %v2364 = vsub.f32 %v2356, %v2360
        %v2365 = vsub.f32 %v2357, %v2363
        %v2366 = vmul.f32 %v2364, 1.442695
        %v2367 = vpow.pop %v2366
        %v2368 = vmul.f32 %v2365, 1.442695
        %v2369 = vpow.pop %v2368
        %v2370 = vsel %vm1060, %v2367, 0.0
        %2371 = vadd.xlane.f32.xlu0 %v2370
        %v2372 = vpop.xlane.xlu0 %2371
        %v2373 = vsel %vm1060, %v2369, 0.0
        %2374 = vadd.xlane.f32.xlu0 %v2373
        %v2375 = vpop.xlane.xlu0 %2374
        %v2376 = vrcp.pop %v2372
        %v2377 = vmul.f32 %v2367, %v2376
        %v2378 = vrcp.pop %v2375
        %v2379 = vmul.f32 %v2369, %v2378
        %2380 = vrot.lane.b32.xlu0 %v1052, 32
        %v2381 = vpop.permute.xlu0 %2380
        %2382 = vrot.lane.b32.xlu0 %v1057, 32
        %v2383 = vpop.permute.xlu0 %2382
        %v2387 = vsel %vm1060, %v2377, 0
        %v2390 = vsel %vm1060, %v2379, 0
        %2392 = vmatprep.subr.mxu0 0.0
        %2393 = vmatpush1.msra.mxu0 %v2381
        %2394 = vmatprep.subr.mxu0 0.0
        %2395 = vmatpush1.msra.mxu0 %v2383
        %2396 = vmatprep.subr.mxu0 0.0
        %2397 = vmatpush1.msra.mxu0 0.0
        %2398 = vmatprep.subr.mxu0 0.0
        %2399 = vmatpush1.msra.mxu0 0.0
        %2400 = vmatprep.subr.mxu0 0.0
        %2401 = vmatpush1.msra.mxu0 0.0
        %2402 = vmatprep.subr.mxu0 0.0
        %2403 = vmatpush1.msra.mxu0 0.0
        %2404 = vmatprep.subr.mxu0 0.0
        %2405 = vmatpush1.msra.mxu0 0.0
        %2406 = vmatprep.subr.mxu0 0.0
        %2407 = vmatpush1.msra.mxu0 0.0
        %2408 = vmatprep.subr.mxu0 0.0
        %2409 = vmatpush1.msra.mxu0 0.0
        %2410 = vmatprep.subr.mxu0 0.0
        %2411 = vmatpush1.msra.mxu0 0.0
        %2412 = vmatprep.subr.mxu0 0.0
        %2413 = vmatpush1.msra.mxu0 0.0
        %2414 = vmatprep.subr.mxu0 0.0
        %2415 = vmatpush1.msra.mxu0 0.0
        %2416 = vmatprep.subr.mxu0 0.0
        %2417 = vmatpush1.msra.mxu0 0.0
        %2418 = vmatprep.subr.mxu0 0.0
        %2419 = vmatpush1.msra.mxu0 0.0
        %2420 = vmatprep.subr.mxu0 0.0
        %2421 = vmatpush1.msra.mxu0 0.0
        %2422 = vmatprep.subr.mxu0 0.0
        %2423 = vmatpush1.msra.mxu0 0.0
        %2424 = vmatprep.subr.mxu0 0.0
        %2425 = vmatpush1.msra.mxu0 0.0
        %2426 = vmatprep.subr.mxu0 0.0
        %2427 = vmatpush1.msra.mxu0 0.0
        %2428 = vmatprep.subr.mxu0 0.0
        %2429 = vmatpush1.msra.mxu0 0.0
        %2430 = vmatprep.subr.mxu0 0.0
        %2431 = vmatpush1.msra.mxu0 0.0
        %2432 = vmatprep.subr.mxu0 0.0
        %2433 = vmatpush1.msra.mxu0 0.0
        %2434 = vmatprep.subr.mxu0 0.0
        %2435 = vmatpush1.msra.mxu0 0.0
        %2436 = vmatprep.subr.mxu0 0.0
        %2437 = vmatpush1.msra.mxu0 0.0
        %2438 = vmatprep.subr.mxu0 0.0
        %2439 = vmatpush1.msra.mxu0 0.0
        %2440 = vmatprep.subr.mxu0 0.0
        %2441 = vmatpush1.msra.mxu0 0.0
        %2442 = vmatprep.subr.mxu0 0.0
        %2443 = vmatpush1.msra.mxu0 0.0
        %2444 = vmatprep.subr.mxu0 0.0
        %2445 = vmatpush1.msra.mxu0 0.0
        %2446 = vmatprep.subr.mxu0 0.0
        %2447 = vmatpush1.msra.mxu0 0.0
        %2448 = vmatprep.subr.mxu0 0.0
        %2449 = vmatpush1.msra.mxu0 0.0
        %2450 = vmatprep.subr.mxu0 0.0
        %2451 = vmatpush1.msra.mxu0 0.0
        %2452 = vmatprep.subr.mxu0 0.0
        %2453 = vmatpush1.msra.mxu0 0.0
        %2454 = vmatprep.subr.mxu0 0.0
        %2455 = vmatpush1.msra.mxu0 0.0
        %2456 = vmatprep.mubr.f32.mxu0 0.0
        %2457 = vmatmul.mubr.f32.gmra.mrb[0].mxu0 %v2387
        %v2458 = vpop.f32.mrb[0].mxu0
        %v2459 = vadd.f32 0.0, %v2458
        %v2460 = vpop.f32.mrb[0].mxu0
        %2461 = vmatprep.mubr.f32.mxu0 0.0
        %2462 = vmatmul.mubr.f32.gmra.mrb[0].mxu0 %v2390
        %v2463 = vpop.f32.mrb[0].mxu0
        %v2464 = vadd.f32 0.0, %v2463
        %v2465 = vpop.f32.mrb[0].mxu0
        %2466 = vdwg.mxu0
        %2467 = vrot.lane.b32.xlu0 %v975, 16
        %v2468 = vpop.permute.xlu0 %2467
        %2469 = vrot.lane.b32.xlu0 %v981, 16
        %v2470 = vpop.permute.xlu0 %2469
        %2471 = vrot.lane.b32.xlu0 %v977, 16
        %v2472 = vpop.permute.xlu0 %2471
        %2473 = vrot.lane.b32.xlu0 %v983, 16
        %v2474 = vpop.permute.xlu0 %2473
        %v2475 = vsel %vm1060, %v2468, 0
        %v2477 = vsel %vm1060, %v2470, 0
        %v2479 = vsel %vm1060, %v2472, 0
        %v2481 = vsel %vm1060, %v2474, 0
        %2483 = vmatprep.subr.mxu0 0.0
        %2484 = vmatpush1.xpose.msra.mxu0 %v2479
        %2485 = vmatprep.subr.mxu0 0.0
        %2486 = vmatpush1.xpose.msra.mxu0 %v2481
        %2487 = vmatprep.subr.mxu0 0.0
        %2488 = vmatpush1.xpose.msra.mxu0 0.0
        %2489 = vmatprep.subr.mxu0 0.0
        %2490 = vmatpush1.xpose.msra.mxu0 0.0
        %2491 = vmatprep.subr.mxu0 0.0
        %2492 = vmatpush1.xpose.msra.mxu0 0.0
        %2493 = vmatprep.subr.mxu0 0.0
        %2494 = vmatpush1.xpose.msra.mxu0 0.0
        %2495 = vmatprep.subr.mxu0 0.0
        %2496 = vmatpush1.xpose.msra.mxu0 0.0
        %2497 = vmatprep.subr.mxu0 0.0
        %2498 = vmatpush1.xpose.msra.mxu0 0.0
        %2499 = vmatprep.subr.mxu0 0.0
        %2500 = vmatpush1.xpose.msra.mxu0 0.0
        %2501 = vmatprep.subr.mxu0 0.0
        %2502 = vmatpush1.xpose.msra.mxu0 0.0
        %2503 = vmatprep.subr.mxu0 0.0
        %2504 = vmatpush1.xpose.msra.mxu0 0.0
        %2505 = vmatprep.subr.mxu0 0.0
        %2506 = vmatpush1.xpose.msra.mxu0 0.0
        %2507 = vmatprep.subr.mxu0 0.0
        %2508 = vmatpush1.xpose.msra.mxu0 0.0
        %2509 = vmatprep.subr.mxu0 0.0
        %2510 = vmatpush1.xpose.msra.mxu0 0.0
        %2511 = vmatprep.subr.mxu0 0.0
        %2512 = vmatpush1.xpose.msra.mxu0 0.0
        %2513 = vmatprep.subr.mxu0 0.0
        %2514 = vmatpush1.xpose.msra.mxu0 0.0
        %2515 = vmatprep.subr.mxu0 0.0
        %2516 = vmatpush1.xpose.msra.mxu0 0.0
        %2517 = vmatprep.subr.mxu0 0.0
        %2518 = vmatpush1.xpose.msra.mxu0 0.0
        %2519 = vmatprep.subr.mxu0 0.0
        %2520 = vmatpush1.xpose.msra.mxu0 0.0
        %2521 = vmatprep.subr.mxu0 0.0
        %2522 = vmatpush1.xpose.msra.mxu0 0.0
        %2523 = vmatprep.subr.mxu0 0.0
        %2524 = vmatpush1.xpose.msra.mxu0 0.0
        %2525 = vmatprep.subr.mxu0 0.0
        %2526 = vmatpush1.xpose.msra.mxu0 0.0
        %2527 = vmatprep.subr.mxu0 0.0
        %2528 = vmatpush1.xpose.msra.mxu0 0.0
        %2529 = vmatprep.subr.mxu0 0.0
        %2530 = vmatpush1.xpose.msra.mxu0 0.0
        %2531 = vmatprep.subr.mxu0 0.0
        %2532 = vmatpush1.xpose.msra.mxu0 0.0
        %2533 = vmatprep.subr.mxu0 0.0
        %2534 = vmatpush1.xpose.msra.mxu0 0.0
        %2535 = vmatprep.subr.mxu0 0.0
        %2536 = vmatpush1.xpose.msra.mxu0 0.0
        %2537 = vmatprep.subr.mxu0 0.0
        %2538 = vmatpush1.xpose.msra.mxu0 0.0
        %2539 = vmatprep.subr.mxu0 0.0
        %2540 = vmatpush1.xpose.msra.mxu0 0.0
        %2541 = vmatprep.subr.mxu0 0.0
        %2542 = vmatpush1.xpose.msra.mxu0 0.0
        %2543 = vmatprep.subr.mxu0 0.0
        %2544 = vmatpush1.xpose.msra.mxu0 0.0
        %2545 = vmatprep.subr.mxu0 0.0
        %2546 = vmatpush1.xpose.msra.mxu0 0.0
        %2547 = vmatprep.mubr.f32.mxu0 0.0
        %2548 = vmatmul.mubr.f32.gmra.mrb[0].mxu0 %v2475
        %v2549 = vpop.f32.mrb[0].mxu0
        %v2550 = vadd.f32 0.0, %v2549
        %v2551 = vpop.f32.mrb[0].mxu0
        %2552 = vmatprep.mubr.f32.mxu0 0.0
        %2553 = vmatmul.mubr.f32.gmra.mrb[0].mxu0 %v2477
        %v2554 = vpop.f32.mrb[0].mxu0
        %v2555 = vadd.f32 0.0, %v2554
        %v2556 = vpop.f32.mrb[0].mxu0
        %2557 = vdwg.mxu0
        %v2558 = vmul.f32 %v2550, 0.25
        %v2559 = vmul.f32 %v2555, 0.25
        %v2560 = vsel %vm1060, %v2558, -inf
        %2561 = vmax.xlane.f32.xlu0 %v2560
        %v2562 = vpop.xlane.xlu0 %2561
        %v2563 = vsel %vm1060, %v2559, -inf
        %2564 = vmax.xlane.f32.xlu0 %v2563
        %v2565 = vpop.xlane.xlu0 %2564
        %v2566 = vsub.f32 %v2558, %v2562
        %v2567 = vsub.f32 %v2559, %v2565
        %v2568 = vmul.f32 %v2566, 1.442695
        %v2569 = vpow.pop %v2568
        %v2570 = vmul.f32 %v2567, 1.442695
        %v2571 = vpow.pop %v2570
        %v2572 = vsel %vm1060, %v2569, 0.0
        %2573 = vadd.xlane.f32.xlu0 %v2572
        %v2574 = vpop.xlane.xlu0 %2573
        %v2575 = vsel %vm1060, %v2571, 0.0
        %2576 = vadd.xlane.f32.xlu0 %v2575
        %v2577 = vpop.xlane.xlu0 %2576
        %v2578 = vrcp.pop %v2574
        %v2579 = vmul.f32 %v2569, %v2578
        %v2580 = vrcp.pop %v2577
        %v2581 = vmul.f32 %v2571, %v2580
        %2582 = vrot.lane.b32.xlu0 %v1052, 16
        %v2583 = vpop.permute.xlu0 %2582
        %2584 = vrot.lane.b32.xlu0 %v1057, 16
        %v2585 = vpop.permute.xlu0 %2584
        %v2589 = vsel %vm1060, %v2579, 0
        %v2592 = vsel %vm1060, %v2581, 0
        %2594 = vmatprep.subr.mxu0 0.0
        %2595 = vmatpush1.msra.mxu0 %v2583
        %2596 = vmatprep.subr.mxu0 0.0
        %2597 = vmatpush1.msra.mxu0 %v2585
        %2598 = vmatprep.subr.mxu0 0.0
        %2599 = vmatpush1.msra.mxu0 0.0
        %2600 = vmatprep.subr.mxu0 0.0
        %2601 = vmatpush1.msra.mxu0 0.0
        %2602 = vmatprep.subr.mxu0 0.0
        %2603 = vmatpush1.msra.mxu0 0.0
        %2604 = vmatprep.subr.mxu0 0.0
        %2605 = vmatpush1.msra.mxu0 0.0
        %2606 = vmatprep.subr.mxu0 0.0
        %2607 = vmatpush1.msra.mxu0 0.0
        %2608 = vmatprep.subr.mxu0 0.0
        %2609 = vmatpush1.msra.mxu0 0.0
        %2610 = vmatprep.subr.mxu0 0.0
        %2611 = vmatpush1.msra.mxu0 0.0
        %2612 = vmatprep.subr.mxu0 0.0
        %2613 = vmatpush1.msra.mxu0 0.0
        %2614 = vmatprep.subr.mxu0 0.0
        %2615 = vmatpush1.msra.mxu0 0.0
        %2616 = vmatprep.subr.mxu0 0.0
        %2617 = vmatpush1.msra.mxu0 0.0
        %2618 = vmatprep.subr.mxu0 0.0
        %2619 = vmatpush1.msra.mxu0 0.0
        %2620 = vmatprep.subr.mxu0 0.0
        %2621 = vmatpush1.msra.mxu0 0.0
        %2622 = vmatprep.subr.mxu0 0.0
        %2623 = vmatpush1.msra.mxu0 0.0
        %2624 = vmatprep.subr.mxu0 0.0
        %2625 = vmatpush1.msra.mxu0 0.0
        %2626 = vmatprep.subr.mxu0 0.0
        %2627 = vmatpush1.msra.mxu0 0.0
        %2628 = vmatprep.subr.mxu0 0.0
        %2629 = vmatpush1.msra.mxu0 0.0
        %2630 = vmatprep.subr.mxu0 0.0
        %2631 = vmatpush1.msra.mxu0 0.0
        %2632 = vmatprep.subr.mxu0 0.0
        %2633 = vmatpush1.msra.mxu0 0.0
        %2634 = vmatprep.subr.mxu0 0.0
        %2635 = vmatpush1.msra.mxu0 0.0
        %2636 = vmatprep.subr.mxu0 0.0
        %2637 = vmatpush1.msra.mxu0 0.0
        %2638 = vmatprep.subr.mxu0 0.0
        %2639 = vmatpush1.msra.mxu0 0.0
        %2640 = vmatprep.subr.mxu0 0.0
        %2641 = vmatpush1.msra.mxu0 0.0
        %2642 = vmatprep.subr.mxu0 0.0
        %2643 = vmatpush1.msra.mxu0 0.0
        %2644 = vmatprep.subr.mxu0 0.0
        %2645 = vmatpush1.msra.mxu0 0.0
        %2646 = vmatprep.subr.mxu0 0.0
        %2647 = vmatpush1.msra.mxu0 0.0
        %2648 = vmatprep.subr.mxu0 0.0
        %2649 = vmatpush1.msra.mxu0 0.0
        %2650 = vmatprep.subr.mxu0 0.0
        %2651 = vmatpush1.msra.mxu0 0.0
        %2652 = vmatprep.subr.mxu0 0.0
        %2653 = vmatpush1.msra.mxu0 0.0
        %2654 = vmatprep.subr.mxu0 0.0
        %2655 = vmatpush1.msra.mxu0 0.0
        %2656 = vmatprep.subr.mxu0 0.0
        %2657 = vmatpush1.msra.mxu0 0.0
        %2658 = vmatprep.mubr.f32.mxu0 0.0
        %2659 = vmatmul.mubr.f32.gmra.mrb[0].mxu0 %v2589
        %v2660 = vpop.f32.mrb[0].mxu0
        %v2661 = vadd.f32 0.0, %v2660
        %v2662 = vpop.f32.mrb[0].mxu0
        %2663 = vmatprep.mubr.f32.mxu0 0.0
        %2664 = vmatmul.mubr.f32.gmra.mrb[0].mxu0 %v2592
        %v2665 = vpop.f32.mrb[0].mxu0
        %v2666 = vadd.f32 0.0, %v2665
        %v2667 = vpop.f32.mrb[0].mxu0
        %2668 = vdwg.mxu0
        %2671 = vrot.lane.b32.xlu0 %v1449, 16
        %v2672 = vpop.permute.xlu0 %2671
        %2673 = vrot.lane.b32.xlu0 %v1454, 16
        %v2674 = vpop.permute.xlu0 %2673
        %2679 = vrot.lane.b32.xlu0 %v1651, 32
        %v2680 = vpop.permute.xlu0 %2679
        %2681 = vrot.lane.b32.xlu0 %v1656, 32
        %v2682 = vpop.permute.xlu0 %2681
        %2687 = vrot.lane.b32.xlu0 %v1853, 48
        %v2688 = vpop.permute.xlu0 %2687
        %2689 = vrot.lane.b32.xlu0 %v1858, 48
        %v2690 = vpop.permute.xlu0 %2689
        %2695 = vrot.lane.b32.xlu0 %v2055, 64
        %v2696 = vpop.permute.xlu0 %2695
        %2697 = vrot.lane.b32.xlu0 %v2060, 64
        %v2698 = vpop.permute.xlu0 %2697
        %2703 = vrot.lane.b32.xlu0 %v2257, 80
        %v2704 = vpop.permute.xlu0 %2703
        %2705 = vrot.lane.b32.xlu0 %v2262, 80
        %v2706 = vpop.permute.xlu0 %2705
        %2711 = vrot.lane.b32.xlu0 %v2459, 96
        %v2712 = vpop.permute.xlu0 %2711
        %2713 = vrot.lane.b32.xlu0 %v2464, 96
        %v2714 = vpop.permute.xlu0 %2713
        %2719 = vrot.lane.b32.xlu0 %v2661, 112
        %v2720 = vpop.permute.xlu0 %2719
        %2721 = vrot.lane.b32.xlu0 %v2666, 112
        %v2722 = vpop.permute.xlu0 %2721
        %v2725 = vsel %vm1060, %v1245, %v2672
        %v2726 = vsel %vm1060, %v1250, %v2674
        %vm2727 = vcmask 261120
        %v2728 = vsel %vm2727, %v2725, %v2680
        %v2729 = vsel %vm2727, %v2726, %v2682
        %vm2730 = vcmask 392192
        %v2731 = vsel %vm2730, %v2728, %v2688
        %v2732 = vsel %vm2730, %v2729, %v2690
        %vm2733 = vcmask 523264
        %v2734 = vsel %vm2733, %v2731, %v2696
        %v2735 = vsel %vm2733, %v2732, %v2698
        %vm2736 = vcmask 654336
        %v2737 = vsel %vm2736, %v2734, %v2704
        %v2738 = vsel %vm2736, %v2735, %v2706
        %vm2739 = vcmask 785408
        %v2740 = vsel %vm2739, %v2737, %v2712
        %v2741 = vsel %vm2739, %v2738, %v2714
        %vm2742 = vcmask 916480
        %v2743 = vsel %vm2742, %v2740, %v2720
        %v2744 = vsel %vm2742, %v2741, %v2722
        %v2745 = vld [vmem:[%s663] sm:$0xff]
        %v2746 = vld [vmem:[%s663 + $0x8] sm:$0xff]
        %v2747 = vld [vmem:[%s663 + $0x10] sm:$0xff]
        %v2748 = vld [vmem:[%s663 + $0x18] sm:$0xff]
        %v2749 = vld [vmem:[%s663 + $0x20] sm:$0xff]
        %v2750 = vld [vmem:[%s663 + $0x28] sm:$0xff]
        %v2751 = vld [vmem:[%s663 + $0x30] sm:$0xff]
        %v2752 = vld [vmem:[%s663 + $0x38] sm:$0xff]
        %v2753 = vld [vmem:[%s663 + $0x40] sm:$0xff]
        %v2754 = vld [vmem:[%s663 + $0x48] sm:$0xff]
        %v2755 = vld [vmem:[%s663 + $0x50] sm:$0xff]
        %v2756 = vld [vmem:[%s663 + $0x58] sm:$0xff]
        %v2757 = vld [vmem:[%s663 + $0x60] sm:$0xff]
        %v2758 = vld [vmem:[%s663 + $0x68] sm:$0xff]
        %v2759 = vld [vmem:[%s663 + $0x70] sm:$0xff]
        %v2760 = vld [vmem:[%s663 + $0x78] sm:$0xff]
        %v2761 = vld [vmem:[%s797] sm:$0x1]
        %v2763 = vlaneseq
        %v2764 = vshrl.u32 %v2763, 7
        %v2765 = vsub.s32 0, %v2764
        %v2766 = vrot.slane %v2761, %v2765
        %2768 = vmatprep.subr.mxu0 0.0
        %2769 = vmatpush1.msra.mxu0 %v2745
        %2770 = vmatprep.subr.mxu0 0.0
        %2771 = vmatpush1.msra.mxu0 %v2746
        %2772 = vmatprep.subr.mxu0 0.0
        %2773 = vmatpush1.msra.mxu0 %v2747
        %2774 = vmatprep.subr.mxu0 0.0
        %2775 = vmatpush1.msra.mxu0 %v2748
        %2776 = vmatprep.subr.mxu0 0.0
        %2777 = vmatpush1.msra.mxu0 %v2749
        %2778 = vmatprep.subr.mxu0 0.0
        %2779 = vmatpush1.msra.mxu0 %v2750
        %2780 = vmatprep.subr.mxu0 0.0
        %2781 = vmatpush1.msra.mxu0 %v2751
        %2782 = vmatprep.subr.mxu0 0.0
        %2783 = vmatpush1.msra.mxu0 %v2752
        %2784 = vmatprep.subr.mxu0 0.0
        %2785 = vmatpush1.msra.mxu0 %v2753
        %2786 = vmatprep.subr.mxu0 0.0
        %2787 = vmatpush1.msra.mxu0 %v2754
        %2788 = vmatprep.subr.mxu0 0.0
        %2789 = vmatpush1.msra.mxu0 %v2755
        %2790 = vmatprep.subr.mxu0 0.0
        %2791 = vmatpush1.msra.mxu0 %v2756
        %2792 = vmatprep.subr.mxu0 0.0
        %2793 = vmatpush1.msra.mxu0 %v2757
        %2794 = vmatprep.subr.mxu0 0.0
        %2795 = vmatpush1.msra.mxu0 %v2758
        %2796 = vmatprep.subr.mxu0 0.0
        %2797 = vmatpush1.msra.mxu0 %v2759
        %2798 = vmatprep.subr.mxu0 0.0
        %2799 = vmatpush1.msra.mxu0 %v2760
        %2800 = vmatprep.subr.mxu0 0.0
        %2801 = vmatpush1.msra.mxu0 0.0
        %2802 = vmatprep.subr.mxu0 0.0
        %2803 = vmatpush1.msra.mxu0 0.0
        %2804 = vmatprep.subr.mxu0 0.0
        %2805 = vmatpush1.msra.mxu0 0.0
        %2806 = vmatprep.subr.mxu0 0.0
        %2807 = vmatpush1.msra.mxu0 0.0
        %2808 = vmatprep.subr.mxu0 0.0
        %2809 = vmatpush1.msra.mxu0 0.0
        %2810 = vmatprep.subr.mxu0 0.0
        %2811 = vmatpush1.msra.mxu0 0.0
        %2812 = vmatprep.subr.mxu0 0.0
        %2813 = vmatpush1.msra.mxu0 0.0
        %2814 = vmatprep.subr.mxu0 0.0
        %2815 = vmatpush1.msra.mxu0 0.0
        %2816 = vmatprep.subr.mxu0 0.0
        %2817 = vmatpush1.msra.mxu0 0.0
        %2818 = vmatprep.subr.mxu0 0.0
        %2819 = vmatpush1.msra.mxu0 0.0
        %2820 = vmatprep.subr.mxu0 0.0
        %2821 = vmatpush1.msra.mxu0 0.0
        %2822 = vmatprep.subr.mxu0 0.0
        %2823 = vmatpush1.msra.mxu0 0.0
        %2824 = vmatprep.subr.mxu0 0.0
        %2825 = vmatpush1.msra.mxu0 0.0
        %2826 = vmatprep.subr.mxu0 0.0
        %2827 = vmatpush1.msra.mxu0 0.0
        %2828 = vmatprep.subr.mxu0 0.0
        %2829 = vmatpush1.msra.mxu0 0.0
        %2830 = vmatprep.subr.mxu0 0.0
        %2831 = vmatpush1.msra.mxu0 0.0
        %2832 = vmatprep.mubr.f32.mxu0 0.0
        %2833 = vmatmul.mubr.f32.gmra.mrb[0].mxu0 %v2743
        %v2834 = vpop.f32.mrb[0].mxu0
        %v2835 = vadd.f32 %v2766, %v2834
        %v2836 = vpop.f32.mrb[0].mxu0
        %2837 = vmatprep.mubr.f32.mxu0 0.0
        %2838 = vmatmul.mubr.f32.gmra.mrb[0].mxu0 %v2744
        %v2839 = vpop.f32.mrb[0].mxu0
        %v2840 = vadd.f32 %v2766, %v2839
        %v2841 = vpop.f32.mrb[0].mxu0
        %2842 = vdwg.mxu0
        %v2843 = vadd.f32 %v817, %v2835
        %v2844 = vadd.f32 %v818, %v2840
        %v2845 = vld [vmem:[%s671] sm:$0x1]
        %v2846 = vld [vmem:[%s679] sm:$0x1]
        %2847 = vadd.xlane.f32.xlu0 %v2843
        %v2848 = vpop.xlane.xlu0 %2847
        %2849 = vadd.xlane.f32.xlu0 %v2844
        %v2850 = vpop.xlane.xlu0 %2849
        %v2851 = vmul.f32 %v2848, %v825
        %v2852 = vmul.f32 %v2850, %v825
        %v2853 = vsub.f32 %v2843, %v2851
        %v2854 = vsub.f32 %v2844, %v2852
        %v2855 = vmul.f32 %v2853, %v2853
        %v2856 = vmul.f32 %v2854, %v2854
        %2857 = vadd.xlane.f32.xlu0 %v2855
        %v2858 = vpop.xlane.xlu0 %2857
        %2859 = vadd.xlane.f32.xlu0 %v2856
        %v2860 = vpop.xlane.xlu0 %2859
        %v2861 = vmul.f32 %v2858, %v825
        %v2862 = vmul.f32 %v2860, %v825
        %v2863 = vadd.f32 %v2861, 1e-05
        %v2864 = vadd.f32 %v2862, 1e-05
        %v2865 = vrsqrt.pop %v2863
        %v2866 = vrsqrt.pop %v2864
        %v2867 = vmul.f32 %v2853, %v2865
        %v2868 = vmul.f32 %v2854, %v2866
        %v2870 = vlaneseq
        %v2871 = vshrl.u32 %v2870, 7
        %v2872 = vsub.s32 0, %v2871
        %v2873 = vrot.slane %v2845, %v2872
        %v2875 = vmul.f32 %v2867, %v2873
        %v2876 = vmul.f32 %v2868, %v2873
        %v2878 = vlaneseq
        %v2879 = vshrl.u32 %v2878, 7
        %v2880 = vsub.s32 0, %v2879
        %v2881 = vrot.slane %v2846, %v2880
        %v2883 = vadd.f32 %v2875, %v2881
        %v2884 = vadd.f32 %v2876, %v2881
        %v2885 = vld [vmem:[%s688] sm:$0xff]
        %v2886 = vld [vmem:[%s688 + $0x8] sm:$0xff]
        %v2887 = vld [vmem:[%s688 + $0x10] sm:$0xff]
        %v2888 = vld [vmem:[%s688 + $0x18] sm:$0xff]
        %v2889 = vld [vmem:[%s688 + $0x20] sm:$0xff]
        %v2890 = vld [vmem:[%s688 + $0x28] sm:$0xff]
        %v2891 = vld [vmem:[%s688 + $0x30] sm:$0xff]
        %v2892 = vld [vmem:[%s688 + $0x38] sm:$0xff]
        %v2893 = vld [vmem:[%s688 + $0x40] sm:$0xff]
        %v2894 = vld [vmem:[%s688 + $0x48] sm:$0xff]
        %v2895 = vld [vmem:[%s688 + $0x50] sm:$0xff]
        %v2896 = vld [vmem:[%s688 + $0x58] sm:$0xff]
        %v2897 = vld [vmem:[%s688 + $0x60] sm:$0xff]
        %v2898 = vld [vmem:[%s688 + $0x68] sm:$0xff]
        %v2899 = vld [vmem:[%s688 + $0x70] sm:$0xff]
        %v2900 = vld [vmem:[%s688 + $0x78] sm:$0xff]
        %v2901 = vld [vmem:[%s688 + $0x80] sm:$0xff]
        %v2902 = vld [vmem:[%s688 + $0x88] sm:$0xff]
        %v2903 = vld [vmem:[%s688 + $0x90] sm:$0xff]
        %v2904 = vld [vmem:[%s688 + $0x98] sm:$0xff]
        %v2905 = vld [vmem:[%s688 + $0xa0] sm:$0xff]
        %v2906 = vld [vmem:[%s688 + $0xa8] sm:$0xff]
        %v2907 = vld [vmem:[%s688 + $0xb0] sm:$0xff]
        %v2908 = vld [vmem:[%s688 + $0xb8] sm:$0xff]
        %v2909 = vld [vmem:[%s688 + $0xc0] sm:$0xff]
        %v2910 = vld [vmem:[%s688 + $0xc8] sm:$0xff]
        %v2911 = vld [vmem:[%s688 + $0xd0] sm:$0xff]
        %v2912 = vld [vmem:[%s688 + $0xd8] sm:$0xff]
        %v2913 = vld [vmem:[%s688 + $0xe0] sm:$0xff]
        %v2914 = vld [vmem:[%s688 + $0xe8] sm:$0xff]
        %v2915 = vld [vmem:[%s688 + $0xf0] sm:$0xff]
        %v2916 = vld [vmem:[%s688 + $0xf8] sm:$0xff]
        %v2917 = vld [vmem:[%s688 + $0x100] sm:$0xff]
        %v2918 = vld [vmem:[%s688 + $0x108] sm:$0xff]
        %v2919 = vld [vmem:[%s688 + $0x110] sm:$0xff]
        %v2920 = vld [vmem:[%s688 + $0x118] sm:$0xff]
        %v2921 = vld [vmem:[%s688 + $0x120] sm:$0xff]
        %v2922 = vld [vmem:[%s688 + $0x128] sm:$0xff]
        %v2923 = vld [vmem:[%s688 + $0x130] sm:$0xff]
        %v2924 = vld [vmem:[%s688 + $0x138] sm:$0xff]
        %v2925 = vld [vmem:[%s688 + $0x140] sm:$0xff]
        %v2926 = vld [vmem:[%s688 + $0x148] sm:$0xff]
        %v2927 = vld [vmem:[%s688 + $0x150] sm:$0xff]
        %v2928 = vld [vmem:[%s688 + $0x158] sm:$0xff]
        %v2929 = vld [vmem:[%s688 + $0x160] sm:$0xff]
        %v2930 = vld [vmem:[%s688 + $0x168] sm:$0xff]
        %v2931 = vld [vmem:[%s688 + $0x170] sm:$0xff]
        %v2932 = vld [vmem:[%s688 + $0x178] sm:$0xff]
        %v2933 = vld [vmem:[%s688 + $0x180] sm:$0xff]
        %v2934 = vld [vmem:[%s688 + $0x188] sm:$0xff]
        %v2935 = vld [vmem:[%s688 + $0x190] sm:$0xff]
        %v2936 = vld [vmem:[%s688 + $0x198] sm:$0xff]
        %v2937 = vld [vmem:[%s688 + $0x1a0] sm:$0xff]
        %v2938 = vld [vmem:[%s688 + $0x1a8] sm:$0xff]
        %v2939 = vld [vmem:[%s688 + $0x1b0] sm:$0xff]
        %v2940 = vld [vmem:[%s688 + $0x1b8] sm:$0xff]
        %v2941 = vld [vmem:[%s688 + $0x1c0] sm:$0xff]
        %v2942 = vld [vmem:[%s688 + $0x1c8] sm:$0xff]
        %v2943 = vld [vmem:[%s688 + $0x1d0] sm:$0xff]
        %v2944 = vld [vmem:[%s688 + $0x1d8] sm:$0xff]
        %v2945 = vld [vmem:[%s688 + $0x1e0] sm:$0xff]
        %v2946 = vld [vmem:[%s688 + $0x1e8] sm:$0xff]
        %v2947 = vld [vmem:[%s688 + $0x1f0] sm:$0xff]
        %v2948 = vld [vmem:[%s688 + $0x1f8] sm:$0xff]
        %v2949 = vld [vmem:[%s801] sm:$0xf]
        %v2951 = vlaneseq
        %v2952 = vshrl.u32 %v2951, 7
        %v2953 = vsub.s32 0, %v2952
        %v2954 = vrot.slane %v2949, %v2953
        %v2955 = vlaneseq
        %v2956 = vshrl.u32 %v2955, 7
        %v2957 = vsub.s32 1, %v2956
        %v2958 = vrot.slane %v2949, %v2957
        %v2959 = vlaneseq
        %v2960 = vshrl.u32 %v2959, 7
        %v2961 = vsub.s32 2, %v2960
        %v2962 = vrot.slane %v2949, %v2961
        %v2963 = vlaneseq
        %v2964 = vshrl.u32 %v2963, 7
        %v2965 = vsub.s32 3, %v2964
        %v2966 = vrot.slane %v2949, %v2965
        %2971 = vmatprep.subr.mxu0 %v2886
        %2972 = vmatpush1.msra.mxu0 %v2885
        %2973 = vmatprep.subr.mxu0 %v2890
        %2974 = vmatpush1.msra.mxu0 %v2889
        %2975 = vmatprep.subr.mxu0 %v2894
        %2976 = vmatpush1.msra.mxu0 %v2893
        %2977 = vmatprep.subr.mxu0 %v2898
        %2978 = vmatpush1.msra.mxu0 %v2897
        %2979 = vmatprep.subr.mxu0 %v2902
        %2980 = vmatpush1.msra.mxu0 %v2901
        %2981 = vmatprep.subr.mxu0 %v2906
        %2982 = vmatpush1.msra.mxu0 %v2905
        %2983 = vmatprep.subr.mxu0 %v2910
        %2984 = vmatpush1.msra.mxu0 %v2909
        %2985 = vmatprep.subr.mxu0 %v2914
        %2986 = vmatpush1.msra.mxu0 %v2913
        %2987 = vmatprep.subr.mxu0 %v2918
        %2988 = vmatpush1.msra.mxu0 %v2917
        %2989 = vmatprep.subr.mxu0 %v2922
        %2990 = vmatpush1.msra.mxu0 %v2921
        %2991 = vmatprep.subr.mxu0 %v2926
        %2992 = vmatpush1.msra.mxu0 %v2925
        %2993 = vmatprep.subr.mxu0 %v2930
        %2994 = vmatpush1.msra.mxu0 %v2929
        %2995 = vmatprep.subr.mxu0 %v2934
        %2996 = vmatpush1.msra.mxu0 %v2933
        %2997 = vmatprep.subr.mxu0 %v2938
        %2998 = vmatpush1.msra.mxu0 %v2937
        %2999 = vmatprep.subr.mxu0 %v2942
        %3000 = vmatpush1.msra.mxu0 %v2941
        %3001 = vmatprep.subr.mxu0 %v2946
        %3002 = vmatpush1.msra.mxu0 %v2945
        %3003 = vmatprep.subr.mxu0 0.0
        %3004 = vmatpush1.msra.mxu0 0.0
        %3005 = vmatprep.subr.mxu0 0.0
        %3006 = vmatpush1.msra.mxu0 0.0
        %3007 = vmatprep.subr.mxu0 0.0
        %3008 = vmatpush1.msra.mxu0 0.0
        %3009 = vmatprep.subr.mxu0 0.0
        %3010 = vmatpush1.msra.mxu0 0.0
        %3011 = vmatprep.subr.mxu0 0.0
        %3012 = vmatpush1.msra.mxu0 0.0
        %3013 = vmatprep.subr.mxu0 0.0
        %3014 = vmatpush1.msra.mxu0 0.0
        %3015 = vmatprep.subr.mxu0 0.0
        %3016 = vmatpush1.msra.mxu0 0.0
        %3017 = vmatprep.subr.mxu0 0.0
        %3018 = vmatpush1.msra.mxu0 0.0
        %3019 = vmatprep.subr.mxu0 0.0
        %3020 = vmatpush1.msra.mxu0 0.0
        %3021 = vmatprep.subr.mxu0 0.0
        %3022 = vmatpush1.msra.mxu0 0.0
        %3023 = vmatprep.subr.mxu0 0.0
        %3024 = vmatpush1.msra.mxu0 0.0
        %3025 = vmatprep.subr.mxu0 0.0
        %3026 = vmatpush1.msra.mxu0 0.0
        %3027 = vmatprep.subr.mxu0 0.0
        %3028 = vmatpush1.msra.mxu0 0.0
        %3029 = vmatprep.subr.mxu0 0.0
        %3030 = vmatpush1.msra.mxu0 0.0
        %3031 = vmatprep.subr.mxu0 0.0
        %3032 = vmatpush1.msra.mxu0 0.0
        %3033 = vmatprep.subr.mxu0 0.0
        %3034 = vmatpush1.msra.mxu0 0.0
        %3035 = vmatprep.mubr.f32.mxu0 0.0
        %3036 = vmatmul.mubr.f32.gmra.mrb[0].mxu0 %v2883
        %v3037 = vpop.f32.mrb[0].mxu0
        %v3038 = vadd.f32 %v2954, %v3037
        %v3039 = vpop.f32.mrb[0].mxu0
        %v3040 = vadd.f32 %v2958, %v3039
        %3041 = vmatprep.mubr.f32.mxu0 0.0
        %3042 = vmatmul.mubr.f32.gmra.mrb[0].mxu0 %v2884
        %v3043 = vpop.f32.mrb[0].mxu0
        %v3044 = vadd.f32 %v2954, %v3043
        %v3045 = vpop.f32.mrb[0].mxu0
        %v3046 = vadd.f32 %v2958, %v3045
        %3047 = vdwg.mxu0
        %3048 = vmatprep.subr.mxu0 %v2888
        %3049 = vmatpush1.msra.mxu0 %v2887
        %3050 = vmatprep.subr.mxu0 %v2892
        %3051 = vmatpush1.msra.mxu0 %v2891
        %3052 = vmatprep.subr.mxu0 %v2896
        %3053 = vmatpush1.msra.mxu0 %v2895
        %3054 = vmatprep.subr.mxu0 %v2900
        %3055 = vmatpush1.msra.mxu0 %v2899
        %3056 = vmatprep.subr.mxu0 %v2904
        %3057 = vmatpush1.msra.mxu0 %v2903
        %3058 = vmatprep.subr.mxu0 %v2908
        %3059 = vmatpush1.msra.mxu0 %v2907
        %3060 = vmatprep.subr.mxu0 %v2912
        %3061 = vmatpush1.msra.mxu0 %v2911
        %3062 = vmatprep.subr.mxu0 %v2916
        %3063 = vmatpush1.msra.mxu0 %v2915
        %3064 = vmatprep.subr.mxu0 %v2920
        %3065 = vmatpush1.msra.mxu0 %v2919
        %3066 = vmatprep.subr.mxu0 %v2924
        %3067 = vmatpush1.msra.mxu0 %v2923
        %3068 = vmatprep.subr.mxu0 %v2928
        %3069 = vmatpush1.msra.mxu0 %v2927
        %3070 = vmatprep.subr.mxu0 %v2932
        %3071 = vmatpush1.msra.mxu0 %v2931
        %3072 = vmatprep.subr.mxu0 %v2936
        %3073 = vmatpush1.msra.mxu0 %v2935
        %3074 = vmatprep.subr.mxu0 %v2940
        %3075 = vmatpush1.msra.mxu0 %v2939
        %3076 = vmatprep.subr.mxu0 %v2944
        %3077 = vmatpush1.msra.mxu0 %v2943
        %3078 = vmatprep.subr.mxu0 %v2948
        %3079 = vmatpush1.msra.mxu0 %v2947
        %3080 = vmatprep.subr.mxu0 0.0
        %3081 = vmatpush1.msra.mxu0 0.0
        %3082 = vmatprep.subr.mxu0 0.0
        %3083 = vmatpush1.msra.mxu0 0.0
        %3084 = vmatprep.subr.mxu0 0.0
        %3085 = vmatpush1.msra.mxu0 0.0
        %3086 = vmatprep.subr.mxu0 0.0
        %3087 = vmatpush1.msra.mxu0 0.0
        %3088 = vmatprep.subr.mxu0 0.0
        %3089 = vmatpush1.msra.mxu0 0.0
        %3090 = vmatprep.subr.mxu0 0.0
        %3091 = vmatpush1.msra.mxu0 0.0
        %3092 = vmatprep.subr.mxu0 0.0
        %3093 = vmatpush1.msra.mxu0 0.0
        %3094 = vmatprep.subr.mxu0 0.0
        %3095 = vmatpush1.msra.mxu0 0.0
        %3096 = vmatprep.subr.mxu0 0.0
        %3097 = vmatpush1.msra.mxu0 0.0
        %3098 = vmatprep.subr.mxu0 0.0
        %3099 = vmatpush1.msra.mxu0 0.0
        %3100 = vmatprep.subr.mxu0 0.0
        %3101 = vmatpush1.msra.mxu0 0.0
        %3102 = vmatprep.subr.mxu0 0.0
        %3103 = vmatpush1.msra.mxu0 0.0
        %3104 = vmatprep.subr.mxu0 0.0
        %3105 = vmatpush1.msra.mxu0 0.0
        %3106 = vmatprep.subr.mxu0 0.0
        %3107 = vmatpush1.msra.mxu0 0.0
        %3108 = vmatprep.subr.mxu0 0.0
        %3109 = vmatpush1.msra.mxu0 0.0
        %3110 = vmatprep.subr.mxu0 0.0
        %3111 = vmatpush1.msra.mxu0 0.0
        %3112 = vmatprep.mubr.f32.mxu0 0.0
        %3113 = vmatmul.mubr.f32.gmra.mrb[0].mxu0 %v2883
        %v3114 = vpop.f32.mrb[0].mxu0
        %v3115 = vadd.f32 %v2962, %v3114
        %v3116 = vpop.f32.mrb[0].mxu0
        %v3117 = vadd.f32 %v2966, %v3116
        %3118 = vmatprep.mubr.f32.mxu0 0.0
        %3119 = vmatmul.mubr.f32.gmra.mrb[0].mxu0 %v2884
        %v3120 = vpop.f32.mrb[0].mxu0
        %v3121 = vadd.f32 %v2962, %v3120
        %v3122 = vpop.f32.mrb[0].mxu0
        %v3123 = vadd.f32 %v2966, %v3122
        %3124 = vdwg.mxu0
        %v3125 = vmul.f32 %v3038, 0.5
        %v3126 = vmul.f32 %v3040, 0.5
        %v3127 = vmul.f32 %v3115, 0.5
        %v3128 = vmul.f32 %v3117, 0.5
        %v3129 = vmul.f32 %v3044, 0.5
        %v3130 = vmul.f32 %v3046, 0.5
        %v3131 = vmul.f32 %v3121, 0.5
        %v3132 = vmul.f32 %v3123, 0.5
        %v3133 = vmul.f32 %v3038, 0.044715
        %v3134 = vmul.f32 %v3040, 0.044715
        %v3135 = vmul.f32 %v3115, 0.044715
        %v3136 = vmul.f32 %v3117, 0.044715
        %v3137 = vmul.f32 %v3044, 0.044715
        %v3138 = vmul.f32 %v3046, 0.044715
        %v3139 = vmul.f32 %v3121, 0.044715
        %v3140 = vmul.f32 %v3123, 0.044715
        %v3141 = vmul.f32 %v3133, %v3038
        %v3142 = vmul.f32 %v3134, %v3040
        %v3143 = vmul.f32 %v3135, %v3115
        %v3144 = vmul.f32 %v3136, %v3117
        %v3145 = vmul.f32 %v3137, %v3044
        %v3146 = vmul.f32 %v3138, %v3046
        %v3147 = vmul.f32 %v3139, %v3121
        %v3148 = vmul.f32 %v3140, %v3123
        %v3149 = vmul.f32 %v3141, %v3038
        %v3150 = vmul.f32 %v3142, %v3040
        %v3151 = vmul.f32 %v3143, %v3115
        %v3152 = vmul.f32 %v3144, %v3117
        %v3153 = vmul.f32 %v3145, %v3044
        %v3154 = vmul.f32 %v3146, %v3046
        %v3155 = vmul.f32 %v3147, %v3121
        %v3156 = vmul.f32 %v3148, %v3123
        %v3157 = vadd.f32 %v3038, %v3149
        %v3158 = vadd.f32 %v3040, %v3150
        %v3159 = vadd.f32 %v3115, %v3151
        %v3160 = vadd.f32 %v3117, %v3152
        %v3161 = vadd.f32 %v3044, %v3153
        %v3162 = vadd.f32 %v3046, %v3154
        %v3163 = vadd.f32 %v3121, %v3155
        %v3164 = vadd.f32 %v3123, %v3156
        %v3165 = vmul.f32 %v3157, 0.7978846
        %v3166 = vmul.f32 %v3158, 0.7978846
        %v3167 = vmul.f32 %v3159, 0.7978846
        %v3168 = vmul.f32 %v3160, 0.7978846
        %v3169 = vmul.f32 %v3161, 0.7978846
        %v3170 = vmul.f32 %v3162, 0.7978846
        %v3171 = vmul.f32 %v3163, 0.7978846
        %v3172 = vmul.f32 %v3164, 0.7978846
        %v3173 = vtanh.pop %v3165
        %v3174 = vtanh.pop %v3166
        %v3175 = vtanh.pop %v3167
        %v3176 = vtanh.pop %v3168
        %v3177 = vtanh.pop %v3169
        %v3178 = vtanh.pop %v3170
        %v3179 = vtanh.pop %v3171
        %v3180 = vtanh.pop %v3172
        %v3181 = vadd.f32 %v3173, 1.0
        %v3182 = vadd.f32 %v3174, 1.0
        %v3183 = vadd.f32 %v3175, 1.0
        %v3184 = vadd.f32 %v3176, 1.0
        %v3185 = vadd.f32 %v3177, 1.0
        %v3186 = vadd.f32 %v3178, 1.0
        %v3187 = vadd.f32 %v3179, 1.0
        %v3188 = vadd.f32 %v3180, 1.0
        %v3189 = vmul.f32 %v3125, %v3181
        %v3190 = vmul.f32 %v3126, %v3182
        %v3191 = vmul.f32 %v3127, %v3183
        %v3192 = vmul.f32 %v3128, %v3184
        %v3193 = vmul.f32 %v3129, %v3185
        %v3194 = vmul.f32 %v3130, %v3186
        %v3195 = vmul.f32 %v3131, %v3187
        %v3196 = vmul.f32 %v3132, %v3188
        %v3197 = vld [vmem:[%s697] sm:$0xff]
        %v3198 = vld [vmem:[%s697 + $0x8] sm:$0xff]
        %v3199 = vld [vmem:[%s697 + $0x10] sm:$0xff]
        %v3200 = vld [vmem:[%s697 + $0x18] sm:$0xff]
        %v3201 = vld [vmem:[%s697 + $0x20] sm:$0xff]
        %v3202 = vld [vmem:[%s697 + $0x28] sm:$0xff]
        %v3203 = vld [vmem:[%s697 + $0x30] sm:$0xff]
        %v3204 = vld [vmem:[%s697 + $0x38] sm:$0xff]
        %v3205 = vld [vmem:[%s697 + $0x40] sm:$0xff]
        %v3206 = vld [vmem:[%s697 + $0x48] sm:$0xff]
        %v3207 = vld [vmem:[%s697 + $0x50] sm:$0xff]
        %v3208 = vld [vmem:[%s697 + $0x58] sm:$0xff]
        %v3209 = vld [vmem:[%s697 + $0x60] sm:$0xff]
        %v3210 = vld [vmem:[%s697 + $0x68] sm:$0xff]
        %v3211 = vld [vmem:[%s697 + $0x70] sm:$0xff]
        %v3212 = vld [vmem:[%s697 + $0x78] sm:$0xff]
        %v3213 = vld [vmem:[%s697 + $0x80] sm:$0xff]
        %v3214 = vld [vmem:[%s697 + $0x88] sm:$0xff]
        %v3215 = vld [vmem:[%s697 + $0x90] sm:$0xff]
        %v3216 = vld [vmem:[%s697 + $0x98] sm:$0xff]
        %v3217 = vld [vmem:[%s697 + $0xa0] sm:$0xff]
        %v3218 = vld [vmem:[%s697 + $0xa8] sm:$0xff]
        %v3219 = vld [vmem:[%s697 + $0xb0] sm:$0xff]
        %v3220 = vld [vmem:[%s697 + $0xb8] sm:$0xff]
        %v3221 = vld [vmem:[%s697 + $0xc0] sm:$0xff]
        %v3222 = vld [vmem:[%s697 + $0xc8] sm:$0xff]
        %v3223 = vld [vmem:[%s697 + $0xd0] sm:$0xff]
        %v3224 = vld [vmem:[%s697 + $0xd8] sm:$0xff]
        %v3225 = vld [vmem:[%s697 + $0xe0] sm:$0xff]
        %v3226 = vld [vmem:[%s697 + $0xe8] sm:$0xff]
        %v3227 = vld [vmem:[%s697 + $0xf0] sm:$0xff]
        %v3228 = vld [vmem:[%s697 + $0xf8] sm:$0xff]
        %v3229 = vld [vmem:[%s697 + $0x100] sm:$0xff]
        %v3230 = vld [vmem:[%s697 + $0x108] sm:$0xff]
        %v3231 = vld [vmem:[%s697 + $0x110] sm:$0xff]
        %v3232 = vld [vmem:[%s697 + $0x118] sm:$0xff]
        %v3233 = vld [vmem:[%s697 + $0x120] sm:$0xff]
        %v3234 = vld [vmem:[%s697 + $0x128] sm:$0xff]
        %v3235 = vld [vmem:[%s697 + $0x130] sm:$0xff]
        %v3236 = vld [vmem:[%s697 + $0x138] sm:$0xff]
        %v3237 = vld [vmem:[%s697 + $0x140] sm:$0xff]
        %v3238 = vld [vmem:[%s697 + $0x148] sm:$0xff]
        %v3239 = vld [vmem:[%s697 + $0x150] sm:$0xff]
        %v3240 = vld [vmem:[%s697 + $0x158] sm:$0xff]
        %v3241 = vld [vmem:[%s697 + $0x160] sm:$0xff]
        %v3242 = vld [vmem:[%s697 + $0x168] sm:$0xff]
        %v3243 = vld [vmem:[%s697 + $0x170] sm:$0xff]
        %v3244 = vld [vmem:[%s697 + $0x178] sm:$0xff]
        %v3245 = vld [vmem:[%s697 + $0x180] sm:$0xff]
        %v3246 = vld [vmem:[%s697 + $0x188] sm:$0xff]
        %v3247 = vld [vmem:[%s697 + $0x190] sm:$0xff]
        %v3248 = vld [vmem:[%s697 + $0x198] sm:$0xff]
        %v3249 = vld [vmem:[%s697 + $0x1a0] sm:$0xff]
        %v3250 = vld [vmem:[%s697 + $0x1a8] sm:$0xff]
        %v3251 = vld [vmem:[%s697 + $0x1b0] sm:$0xff]
        %v3252 = vld [vmem:[%s697 + $0x1b8] sm:$0xff]
        %v3253 = vld [vmem:[%s697 + $0x1c0] sm:$0xff]
        %v3254 = vld [vmem:[%s697 + $0x1c8] sm:$0xff]
        %v3255 = vld [vmem:[%s697 + $0x1d0] sm:$0xff]
        %v3256 = vld [vmem:[%s697 + $0x1d8] sm:$0xff]
        %v3257 = vld [vmem:[%s697 + $0x1e0] sm:$0xff]
        %v3258 = vld [vmem:[%s697 + $0x1e8] sm:$0xff]
        %v3259 = vld [vmem:[%s697 + $0x1f0] sm:$0xff]
        %v3260 = vld [vmem:[%s697 + $0x1f8] sm:$0xff]
        %v3261 = vld [vmem:[%s804] sm:$0x1]
        %v3263 = vlaneseq
        %v3264 = vshrl.u32 %v3263, 7
        %v3265 = vsub.s32 0, %v3264
        %v3266 = vrot.slane %v3261, %v3265
        %3268 = vmatprep.subr.mxu0 0.0
        %3269 = vmatpush1.msra.mxu0 %v3197
        %3270 = vmatprep.subr.mxu0 0.0
        %3271 = vmatpush1.msra.mxu0 %v3198
        %3272 = vmatprep.subr.mxu0 0.0
        %3273 = vmatpush1.msra.mxu0 %v3199
        %3274 = vmatprep.subr.mxu0 0.0
        %3275 = vmatpush1.msra.mxu0 %v3200
        %3276 = vmatprep.subr.mxu0 0.0
        %3277 = vmatpush1.msra.mxu0 %v3201
        %3278 = vmatprep.subr.mxu0 0.0
        %3279 = vmatpush1.msra.mxu0 %v3202
        %3280 = vmatprep.subr.mxu0 0.0
        %3281 = vmatpush1.msra.mxu0 %v3203
        %3282 = vmatprep.subr.mxu0 0.0
        %3283 = vmatpush1.msra.mxu0 %v3204
        %3284 = vmatprep.subr.mxu0 0.0
        %3285 = vmatpush1.msra.mxu0 %v3205
        %3286 = vmatprep.subr.mxu0 0.0
        %3287 = vmatpush1.msra.mxu0 %v3206
        %3288 = vmatprep.subr.mxu0 0.0
        %3289 = vmatpush1.msra.mxu0 %v3207
        %3290 = vmatprep.subr.mxu0 0.0
        %3291 = vmatpush1.msra.mxu0 %v3208
        %3292 = vmatprep.subr.mxu0 0.0
        %3293 = vmatpush1.msra.mxu0 %v3209
        %3294 = vmatprep.subr.mxu0 0.0
        %3295 = vmatpush1.msra.mxu0 %v3210
        %3296 = vmatprep.subr.mxu0 0.0
        %3297 = vmatpush1.msra.mxu0 %v3211
        %3298 = vmatprep.subr.mxu0 0.0
        %3299 = vmatpush1.msra.mxu0 %v3212
        %3300 = vmatprep.subr.mxu0 0.0
        %3301 = vmatpush1.msra.mxu0 %v3213
        %3302 = vmatprep.subr.mxu0 0.0
        %3303 = vmatpush1.msra.mxu0 %v3214
        %3304 = vmatprep.subr.mxu0 0.0
        %3305 = vmatpush1.msra.mxu0 %v3215
        %3306 = vmatprep.subr.mxu0 0.0
        %3307 = vmatpush1.msra.mxu0 %v3216
        %3308 = vmatprep.subr.mxu0 0.0
        %3309 = vmatpush1.msra.mxu0 %v3217
        %3310 = vmatprep.subr.mxu0 0.0
        %3311 = vmatpush1.msra.mxu0 %v3218
        %3312 = vmatprep.subr.mxu0 0.0
        %3313 = vmatpush1.msra.mxu0 %v3219
        %3314 = vmatprep.subr.mxu0 0.0
        %3315 = vmatpush1.msra.mxu0 %v3220
        %3316 = vmatprep.subr.mxu0 0.0
        %3317 = vmatpush1.msra.mxu0 %v3221
        %3318 = vmatprep.subr.mxu0 0.0
        %3319 = vmatpush1.msra.mxu0 %v3222
        %3320 = vmatprep.subr.mxu0 0.0
        %3321 = vmatpush1.msra.mxu0 %v3223
        %3322 = vmatprep.subr.mxu0 0.0
        %3323 = vmatpush1.msra.mxu0 %v3224
        %3324 = vmatprep.subr.mxu0 0.0
        %3325 = vmatpush1.msra.mxu0 %v3225
        %3326 = vmatprep.subr.mxu0 0.0
        %3327 = vmatpush1.msra.mxu0 %v3226
        %3328 = vmatprep.subr.mxu0 0.0
        %3329 = vmatpush1.msra.mxu0 %v3227
        %3330 = vmatprep.subr.mxu0 0.0
        %3331 = vmatpush1.msra.mxu0 %v3228
        %3332 = vmatprep.mubr.f32.mxu0 %v3190
        %3333 = vmatmul.mubr.f32.gmra.mrb[0].mxu0 %v3189
        %v3334 = vpop.f32.mrb[0].mxu0
        %v3335 = vadd.f32 %v3266, %v3334
        %v3336 = vpop.f32.mrb[0].mxu0
        %3337 = vmatprep.mubr.f32.mxu0 %v3194
        %3338 = vmatmul.mubr.f32.gmra.mrb[0].mxu0 %v3193
        %v3339 = vpop.f32.mrb[0].mxu0
        %v3340 = vadd.f32 %v3266, %v3339
        %v3341 = vpop.f32.mrb[0].mxu0
        %3342 = vdwg.mxu0
        %3343 = vmatprep.subr.mxu0 0.0
        %3344 = vmatpush1.msra.mxu0 %v3229
        %3345 = vmatprep.subr.mxu0 0.0
        %3346 = vmatpush1.msra.mxu0 %v3230
        %3347 = vmatprep.subr.mxu0 0.0
        %3348 = vmatpush1.msra.mxu0 %v3231
        %3349 = vmatprep.subr.mxu0 0.0
        %3350 = vmatpush1.msra.mxu0 %v3232
        %3351 = vmatprep.subr.mxu0 0.0
        %3352 = vmatpush1.msra.mxu0 %v3233
        %3353 = vmatprep.subr.mxu0 0.0
        %3354 = vmatpush1.msra.mxu0 %v3234
        %3355 = vmatprep.subr.mxu0 0.0
        %3356 = vmatpush1.msra.mxu0 %v3235
        %3357 = vmatprep.subr.mxu0 0.0
        %3358 = vmatpush1.msra.mxu0 %v3236
        %3359 = vmatprep.subr.mxu0 0.0
        %3360 = vmatpush1.msra.mxu0 %v3237
        %3361 = vmatprep.subr.mxu0 0.0
        %3362 = vmatpush1.msra.mxu0 %v3238
        %3363 = vmatprep.subr.mxu0 0.0
        %3364 = vmatpush1.msra.mxu0 %v3239
        %3365 = vmatprep.subr.mxu0 0.0
        %3366 = vmatpush1.msra.mxu0 %v3240
        %3367 = vmatprep.subr.mxu0 0.0
        %3368 = vmatpush1.msra.mxu0 %v3241
        %3369 = vmatprep.subr.mxu0 0.0
        %3370 = vmatpush1.msra.mxu0 %v3242
        %3371 = vmatprep.subr.mxu0 0.0
        %3372 = vmatpush1.msra.mxu0 %v3243
        %3373 = vmatprep.subr.mxu0 0.0
        %3374 = vmatpush1.msra.mxu0 %v3244
        %3375 = vmatprep.subr.mxu0 0.0
        %3376 = vmatpush1.msra.mxu0 %v3245
        %3377 = vmatprep.subr.mxu0 0.0
        %3378 = vmatpush1.msra.mxu0 %v3246
        %3379 = vmatprep.subr.mxu0 0.0
        %3380 = vmatpush1.msra.mxu0 %v3247
        %3381 = vmatprep.subr.mxu0 0.0
        %3382 = vmatpush1.msra.mxu0 %v3248
        %3383 = vmatprep.subr.mxu0 0.0
        %3384 = vmatpush1.msra.mxu0 %v3249
        %3385 = vmatprep.subr.mxu0 0.0
        %3386 = vmatpush1.msra.mxu0 %v3250
        %3387 = vmatprep.subr.mxu0 0.0
        %3388 = vmatpush1.msra.mxu0 %v3251
        %3389 = vmatprep.subr.mxu0 0.0
        %3390 = vmatpush1.msra.mxu0 %v3252
        %3391 = vmatprep.subr.mxu0 0.0
        %3392 = vmatpush1.msra.mxu0 %v3253
        %3393 = vmatprep.subr.mxu0 0.0
        %3394 = vmatpush1.msra.mxu0 %v3254
        %3395 = vmatprep.subr.mxu0 0.0
        %3396 = vmatpush1.msra.mxu0 %v3255
        %3397 = vmatprep.subr.mxu0 0.0
        %3398 = vmatpush1.msra.mxu0 %v3256
        %3399 = vmatprep.subr.mxu0 0.0
        %3400 = vmatpush1.msra.mxu0 %v3257
        %3401 = vmatprep.subr.mxu0 0.0
        %3402 = vmatpush1.msra.mxu0 %v3258
        %3403 = vmatprep.subr.mxu0 0.0
        %3404 = vmatpush1.msra.mxu0 %v3259
        %3405 = vmatprep.subr.mxu0 0.0
        %3406 = vmatpush1.msra.mxu0 %v3260
        %3407 = vmatprep.mubr.f32.mxu0 %v3192
        %3408 = vmatmul.mubr.f32.gmra.mrb[0].mxu0 %v3191
        %v3409 = vpop.f32.mrb[0].mxu0
        %v3410 = vadd.f32 %v3335, %v3409
        %v3411 = vpop.f32.mrb[0].mxu0
        %3412 = vmatprep.mubr.f32.mxu0 %v3196
        %3413 = vmatmul.mubr.f32.gmra.mrb[0].mxu0 %v3195
        %v3414 = vpop.f32.mrb[0].mxu0
        %v3415 = vadd.f32 %v3340, %v3414
        %v3416 = vpop.f32.mrb[0].mxu0
        %3417 = vdwg.mxu0
        %v3418 = vadd.f32 %v2843, %v3410
        %v3419 = vadd.f32 %v2844, %v3415
        %3420 = vst [vmem:[#allocation2] sm:$0xff] %v3418
        %3421 = vst [vmem:[#allocation2 + $0x8] sm:$0xff] %v3419
        %3422 = vst [vmem:[%s788] sm:$0xff] %v3418
        %3423 = vst [vmem:[%s788 + $0x8] sm:$0xff] %v3419
        %s3424 = sand.u32 %s402, 1
        %s3425 = scalar_lea.sflag [#allocation5], %s3424
        %s3426 = sand.u32 %s402, 1
        %s3427 = smul.addr %s3426, 16
        %s3428 = scalar_lea.vmem [#allocation17], %s3427
        // Predicated region
        $region109: #{tpu_custom_call.1} parent=71 // pred_check
          %p3429 = pneg %p412
        $region110: #{tpu_custom_call.1} parent=71 // pred_check_branch
          %3431 = sbr.rel (%p3429) target = $region112
        $region111: #{tpu_custom_call.1} parent=71 // pred_region
          %s3433 = ssub.s32 256, 256
          %3434 = vsyncadd %s3425, %s3433
          %s3435 = smul.addr %s46, 2
          %s3436 = smul.addr %s47, 4
          %s3437 = sadd.s32 %s3435, %s3436
          %s3438 = smul.addr %s3437, 128
          %s3439 = scalar_lea.hbm %s13, %s3438
          %s3440 = sshll.u32 %s3428, 4
          %s3441 = int_to_ptr.vmem [resolvable:$true] %s3440
          %3446 = dma.vmem_to_hbm [thread:$0]  %s3441, 256, %s3439, %s3425, 128, 128, 8
        $region112: #{tpu_custom_call.1} parent=71 // pred_fallthru
          _
      $region72: #{tpu_custom_call.1} parent=5 // pred_fallthru
        _
      %p3447 = scmp.le.s32.totalorder 2, %s37
      // Predicated region
      $region113: #{tpu_custom_call.1} parent=5 // pred_check
        %p3448 = pneg %p3447
      $region114: #{tpu_custom_call.1} parent=5 // pred_check_branch
        %3450 = sbr.rel (%p3448) target = $region116
      $region115: #{tpu_custom_call.1} parent=5 // pred_region
        %s3451 = ssub.s32 %s37, 2
        // Predicated region
        $region117: #{tpu_custom_call.1} parent=115 // pred_check
          %p3452 = pneg %p418
        $region118: #{tpu_custom_call.1} parent=115 // pred_check_branch
          %3454 = sbr.rel (%p3452) target = $region120
        $region119: #{tpu_custom_call.1} parent=115 // pred_region
          %s3455 = sand.u32 %s403, 1
          %s3456 = scalar_lea.sflag [#allocation5], %s3455
          %s3457 = sand.u32 %s403, 1
          %s3458 = smul.addr %s3457, 16
          %s3459 = scalar_lea.vmem [#allocation17], %s3458
          %3460 = dma.done %s3456, 256
        $region120: #{tpu_custom_call.1} parent=115 // pred_fallthru
          _
      $region116: #{tpu_custom_call.1} parent=5 // pred_fallthru
        _
    $region6: #{tpu_custom_call.1} parent=1 // loop_footer
      %s41 = sadd.s32 1, %s37
    $region7: #{tpu_custom_call.1} parent=1 // loop_footer_branch
      %36 = sbr.rel target = $region3
    $region8: #{tpu_custom_call.1} parent=1 // loop_exit
      _
    %3461 = vsyncpa [#allocation4], 1
    %s3462 = scalar_lea.sflag [#allocation4], 1
    %3463 = vsyncpa %s3462, 1
    %3464 = vsyncpa [#allocation7], 1
    %s3465 = scalar_lea.sflag [#allocation7], 1
    %3466 = vsyncpa %s3465, 1
    %3467 = vsyncpa [#allocation10], 1
    %s3468 = scalar_lea.sflag [#allocation10], 1
    %3469 = vsyncpa %s3468, 1
    %3470 = vsyncpa [#allocation13], 1
    %s3471 = scalar_lea.sflag [#allocation13], 1
    %3472 = vsyncpa %s3471, 1
    %3473 = vsyncpa [#allocation16], 1
    %s3474 = scalar_lea.sflag [#allocation16], 1
    %3475 = vsyncpa %s3474, 1
    %3476 = vsyncpa [#allocation5], 1
    %s3477 = scalar_lea.sflag [#allocation5], 1
    %3478 = vsyncpa %s3477, 1

</llo_original>
